<compile_context>
chip_gen: v7x
topology: tpu7x:2x2x1
jax: 0.10.0
libtpu: 0.0.40
codegen_flags: <defaults>
</compile_context>

<pallas_src>
import functools

import jax
import jax.numpy as jnp
from jax import lax
from jax.experimental import pallas as pl
from jax.experimental.pallas import tpu as pltpu


def _row_tile(n, cap=8):
    """Largest divisor of n that is <= cap (row-tile size knob; bounds VMEM)."""
    t = max(1, min(n, cap))
    while n % t:
        t -= 1
    return t


# ----------------------------------------------------------------------------
# ConvTranspose2d(k=2, s=2) with the channel concat fused as two MXU matmuls.
# Output is the "blocked" layout (N, h, w, 4*Co) with lane order (dy, dx, co);
# the stride-2 spatial scatter is done by one fused XLA reshape/transpose.
# ----------------------------------------------------------------------------
def _upconv_kernel(x_ref, s_ref, wx_ref, ws_ref, b_ref, o_ref):
    _, th, w, cx = x_ref.shape
    c4 = o_ref.shape[-1]
    xm = x_ref[...][0].reshape(th * w, cx).astype(jnp.bfloat16)
    sm = s_ref[...][0].reshape(th * w, -1).astype(jnp.bfloat16)
    acc = jnp.dot(xm, wx_ref[...], preferred_element_type=jnp.float32)
    acc = acc + jnp.dot(sm, ws_ref[...], preferred_element_type=jnp.float32)
    acc = acc + b_ref[...]                      # (1, 4*Co) broadcast over rows
    o_ref[...] = acc.reshape(1, th, w, c4).astype(o_ref.dtype)


def upconv2x2(x, skip, wx, ws, b4, *, row_cap=8):
    n, h, w, cx = x.shape
    cs = skip.shape[-1]
    c4 = wx.shape[-1]
    th = _row_tile(h, row_cap)
    return pl.pallas_call(
        _upconv_kernel,
        out_shape=jax.ShapeDtypeStruct((n, h, w, c4), jnp.bfloat16),
        grid=(n, h // th),
        in_specs=[
            pl.BlockSpec((1, th, w, cx), lambda i, r: (i, r, 0, 0)),
            pl.BlockSpec((1, th, w, cs), lambda i, r: (i, r, 0, 0)),
            pl.BlockSpec((cx, c4), lambda i, r: (0, 0)),
            pl.BlockSpec((cs, c4), lambda i, r: (0, 0)),
            pl.BlockSpec((1, c4), lambda i, r: (0, 0)),
        ],
        out_specs=pl.BlockSpec((1, th, w, c4), lambda i, r: (i, r, 0, 0)),
        compiler_params=pltpu.CompilerParams(
            dimension_semantics=("parallel", "parallel")),
    )(x, skip, wx, ws, b4)


# ----------------------------------------------------------------------------
# Fused 3x3 conv:
#   [optional prologue: previous-layer BN affine + ReLU]
#   -> im2col (single K=9*Cin matmul, bf16 -> f32 accumulator)
#   -> per-channel sum / sum-sq accumulators for this layer's BatchNorm
#   -> bf16, width-padded output layout
# ----------------------------------------------------------------------------
def _conv3x3_bn_kernel(*refs, prologue):
    if prologue:
        (xt_ref, xm_ref, xb_ref, wm_ref, sc_ref, sh_ref,
         o_ref, sum_ref, ssq_ref) = refs
    else:
        (xt_ref, xm_ref, xb_ref, wm_ref,
         o_ref, sum_ref, ssq_ref) = refs
        sc_ref = sh_ref = None

    r = pl.program_id(1)
    last = pl.num_programs(1) - 1
    _, th, wp, cin = xm_ref.shape
    cout = o_ref.shape[-1]
    w = wp - 2

    top = xt_ref[...][0].astype(jnp.float32)       # (1,  Wp, Cin) halo row
    mid = xm_ref[...][0].astype(jnp.float32)       # (TH, Wp, Cin)
    bot = xb_ref[...][0].astype(jnp.float32)       # (1,  Wp, Cin) halo row
    x = jnp.concatenate([top, mid, bot], axis=0)   # (TH+2, Wp, Cin)

    if prologue:
        # previous BatchNorm affine + ReLU folded into this conv's input read
        x = jnp.maximum(x * sc_ref[...] + sh_ref[...], 0.0)

    # zero the "SAME" padding positions (applied after the activation, exactly
    # like PyTorch pads the post-BN/ReLU tensor with zeros)
    rows = lax.broadcasted_iota(jnp.int32, (th + 2, wp, 1), 0)
    cols = lax.broadcasted_iota(jnp.int32, (th + 2, wp, 1), 1)
    pad = (cols == 0) | (cols == wp - 1)
    pad = pad | ((r == 0) & (rows == 0)) | ((r == last) & (rows == th + 1))
    x = jnp.where(pad, 0.0, x)

    # im2col -> one MXU matmul with K = 9*Cin
    windows = []
    for dy in range(3):
        for dx in range(3):
            windows.append(x[dy:dy + th, dx:dx + w, :].reshape(th * w, cin))
    patches = jnp.concatenate(windows, axis=-1).astype(jnp.bfloat16)
    acc = jnp.dot(patches, wm_ref[...], preferred_element_type=jnp.float32)

    # BatchNorm batch statistics accumulated across the row-tile grid axis
    @pl.when(r == 0)
    def _():
        sum_ref[...] = jnp.zeros_like(sum_ref)
        ssq_ref[...] = jnp.zeros_like(ssq_ref)
    sum_ref[...] += jnp.sum(acc, axis=0, keepdims=True)[None]
    ssq_ref[...] += jnp.sum(acc * acc, axis=0, keepdims=True)[None]

    # store conv output in the width-padded bf16 activation layout
    out = acc.reshape(th, w, cout).astype(o_ref.dtype)
    zcol = jnp.zeros((1, th, 1, cout), o_ref.dtype)
    o_ref[:, :, 1:w + 1, :] = out[None]
    o_ref[:, :, 0:1, :] = zcol
    o_ref[:, :, w + 1:w + 2, :] = zcol


def conv3x3_bn(x_pad, w_mat, scale=None, shift=None, *, row_cap=8):
    """x_pad: (N, H, W+2, Cin) bf16 width-padded NHWC; w_mat: (9*Cin, Cout) bf16.
    Returns (y_pad, ch_sum, ch_ssq)."""
    n, h, wp, cin = x_pad.shape
    cout = w_mat.shape[-1]
    th = _row_tile(h, row_cap)
    prologue = scale is not None

    halo_top = pl.BlockSpec(
        (1, 1, wp, cin), lambda i, r: (i, jnp.maximum(r * th - 1, 0), 0, 0))
    body = pl.BlockSpec((1, th, wp, cin), lambda i, r: (i, r, 0, 0))
    halo_bot = pl.BlockSpec(
        (1, 1, wp, cin), lambda i, r: (i, jnp.minimum(r * th + th, h - 1), 0, 0))
    w_spec = pl.BlockSpec((9 * cin, cout), lambda i, r: (0, 0))

    in_specs = [halo_top, body, halo_bot, w_spec]
    args = [x_pad, x_pad, x_pad, w_mat]
    if prologue:
        aff = pl.BlockSpec((1, cin), lambda i, r: (0, 0))
        in_specs += [aff, aff]
        args += [scale, shift]

    out_shape = (jax.ShapeDtypeStruct((n, h, wp, cout), jnp.bfloat16),
                 jax.ShapeDtypeStruct((n, 1, cout), jnp.float32),
                 jax.ShapeDtypeStruct((n, 1, cout), jnp.float32))
    out_specs = (pl.BlockSpec((1, th, wp, cout), lambda i, r: (i, r, 0, 0)),
                 pl.BlockSpec((1, 1, cout), lambda i, r: (i, 0, 0)),
                 pl.BlockSpec((1, 1, cout), lambda i, r: (i, 0, 0)))

    kernel = functools.partial(_conv3x3_bn_kernel, prologue=prologue)
    return pl.pallas_call(
        kernel,
        out_shape=out_shape,
        grid=(n, h // th),
        in_specs=in_specs,
        out_specs=out_specs,
        compiler_params=pltpu.CompilerParams(
            dimension_semantics=("parallel", "arbitrary")),
    )(*args)


# ----------------------------------------------------------------------------
# Final BatchNorm affine + ReLU (only needed for the last conv of the block).
# ----------------------------------------------------------------------------
def _bn_relu_kernel(x_ref, sc_ref, sh_ref, o_ref):
    w = o_ref.shape[2]
    x = x_ref[...][:, :, 1:w + 1, :].astype(jnp.float32)
    o_ref[...] = jnp.maximum(x * sc_ref[...] + sh_ref[...], 0.0)


def bn_relu(y_pad, scale, shift, *, row_cap=8):
    n, h, wp, c = y_pad.shape
    w = wp - 2
    th = _row_tile(h, row_cap)
    return pl.pallas_call(
        _bn_relu_kernel,
        out_shape=jax.ShapeDtypeStruct((n, h, w, c), jnp.float32),
        grid=(n, h // th),
        in_specs=[pl.BlockSpec((1, th, wp, c), lambda i, r: (i, r, 0, 0)),
                  pl.BlockSpec((1, c), lambda i, r: (0, 0)),
                  pl.BlockSpec((1, c), lambda i, r: (0, 0))],
        out_specs=pl.BlockSpec((1, th, w, c), lambda i, r: (i, r, 0, 0)),
        compiler_params=pltpu.CompilerParams(
            dimension_semantics=("parallel", "parallel")),
    )(y_pad, scale, shift)


def _bn_affine(ch_sum, ch_ssq, count, gamma, beta, eps):
    s = jnp.sum(ch_sum, axis=(0, 1))
    q = jnp.sum(ch_ssq, axis=(0, 1))
    mean = s / count
    var = jnp.maximum(q / count - mean * mean, 0.0)   # biased var (PyTorch BN)
    scale = gamma * lax.rsqrt(var + eps)
    shift = beta - mean * scale
    return scale.reshape(1, -1).astype(jnp.float32), \
        shift.reshape(1, -1).astype(jnp.float32)


# ----------------------------------------------------------------------------
# Full Unet_Expansive_Block forward (NCHW in / NCHW out, like PyTorch).
# ----------------------------------------------------------------------------
def unet_expansive_block(x_nchw, skip_nchw, params, eps=1e-5):
    wt, bt, w1, g1, b1, w2, g2, b2 = params
    n, cx, h, w = x_nchw.shape
    cs = skip_nchw.shape[1]
    co = wt.shape[1]

    # NCHW -> NHWC, bf16 activations (half the HBM traffic, 2x MXU rate)
    x = jnp.transpose(x_nchw, (0, 2, 3, 1)).astype(jnp.bfloat16)
    skip = jnp.transpose(skip_nchw, (0, 2, 3, 1)).astype(jnp.bfloat16)

    # ConvTranspose2d weights (Cin_tot, Co, 2, 2) -> (Cin_tot, (dy,dx,co))
    wt_r = jnp.transpose(wt, (0, 2, 3, 1)).reshape(cx + cs, 4 * co)
    wt_r = wt_r.astype(jnp.bfloat16)
    b4 = jnp.tile(bt, 4).reshape(1, 4 * co).astype(jnp.float32)
    y4 = upconv2x2(x, skip, wt_r[:cx], wt_r[cx:], b4)        # (N, h, w, 4*Co)

    # TODO(synk): stride-2 scatter of the (dy,dx) taps is left to one fused XLA
    # reshape/transpose/pad copy instead of an in-kernel strided store.
    y = y4.reshape(n, h, w, 2, 2, co)
    y = jnp.transpose(y, (0, 1, 3, 2, 4, 5)).reshape(n, 2 * h, 2 * w, co)
    y = jnp.pad(y, ((0, 0), (0, 0), (1, 1), (0, 0)))         # width pad, bf16

    hh, ww = 2 * h, 2 * w
    count = float(n * hh * ww)

    # Conv weights OIHW -> (9*Cin, Cout), bf16
    w1_mat = jnp.transpose(w1, (2, 3, 1, 0)).reshape(9 * co, co).astype(jnp.bfloat16)
    w2_mat = jnp.transpose(w2, (2, 3, 1, 0)).reshape(9 * co, co).astype(jnp.bfloat16)

    # DoubleConv: conv1 (+BN1 stats) -> [BN1+ReLU folded into conv2] (+BN2 stats)
    y1, s1, q1 = conv3x3_bn(y, w1_mat)
    sc1, sh1 = _bn_affine(s1, q1, count, g1, b1, eps)
    y2, s2, q2 = conv3x3_bn(y1, w2_mat, sc1, sh1)
    sc2, sh2 = _bn_affine(s2, q2, count, g2, b2, eps)
    out = bn_relu(y2, sc2, sh2)                               # (N, H, W, Co) f32

    return jnp.transpose(out, (0, 3, 1, 2))                   # NHWC -> NCHW


# ----------------------------------------------------------------------------
# Pure-JAX (f32) reference matching the PyTorch module semantics.
# ----------------------------------------------------------------------------
def _ref_forward(x, skip, params, eps=1e-5):
    wt, bt, w1, g1, b1, w2, g2, b2 = params
    xc = jnp.concatenate([x, skip], axis=1)
    # ConvTranspose2d k=2 s=2: out[n,co,2i+a,2j+b] = sum_ci xc[n,ci,i,j]*wt[ci,co,a,b]
    y = jnp.einsum('ncij,ckab->nkiajb', xc, wt)
    n, co, h, _, w, _ = y.shape
    y = y.reshape(n, co, 2 * h, 2 * w) + bt[None, :, None, None]

    def block(z, wc, g, b):
        z = lax.conv_general_dilated(z, wc, (1, 1), 'SAME',
                                     dimension_numbers=('NCHW', 'OIHW', 'NCHW'))
        mean = jnp.mean(z, axis=(0, 2, 3), keepdims=True)
        var = jnp.var(z, axis=(0, 2, 3), keepdims=True)
        z = (z - mean) * lax.rsqrt(var + eps)
        z = z * g[None, :, None, None] + b[None, :, None, None]
        return jnp.maximum(z, 0.0)

    return block(block(y, w1, g1, b1), w2, g2, b2)


if __name__ == "__main__":
    key = jax.random.PRNGKey(0)
    ks = jax.random.split(key, 10)
    N, Cx, Cs, Co, h, w = 2, 4, 4, 8, 8, 8          # input_ch=4, mid_ch=4, out_ch=8

    x = jax.random.normal(ks[0], (N, Cx, h, w), jnp.float32)
    skip = jax.random.normal(ks[1], (N, Cs, h, w), jnp.float32)
    # ConvTranspose2d weight: (in_channels, out_channels, kH, kW), with bias.
    wt = 0.2 * jax.random.normal(ks[2], (Cx + Cs, Co, 2, 2), jnp.float32)
    bt = 0.1 * jax.random.normal(ks[3], (Co,), jnp.float32)
    # DoubleConv parameters (Conv2d OIHW no-bias, BatchNorm gamma/beta).
    w1 = 0.1 * jax.random.normal(ks[4], (Co, Co, 3, 3), jnp.float32)
    g1 = 1.0 + 0.1 * jax.random.normal(ks[5], (Co,), jnp.float32)
    b1 = 0.1 * jax.random.normal(ks[6], (Co,), jnp.float32)
    w2 = 0.1 * jax.random.normal(ks[7], (Co, Co, 3, 3), jnp.float32)
    g2 = 1.0 + 0.1 * jax.random.normal(ks[8], (Co,), jnp.float32)
    b2 = 0.1 * jax.random.normal(ks[9], (Co,), jnp.float32)
    params = (wt, bt, w1, g1, b1, w2, g2, b2)

    out = jax.block_until_ready(jax.jit(unet_expansive_block)(x, skip, params))
    ref = jax.block_until_ready(_ref_forward(x, skip, params))

    assert out.shape == (N, Co, 2 * h, 2 * w), out.shape
    # bf16 activations / weights on the MXU -> tolerance scaled to the output.
    err = float(jnp.max(jnp.abs(out - ref)))
    tol = 5e-2 * (1.0 + float(jnp.max(jnp.abs(ref))))
    assert err < tol, f"max abs err {err} vs tol {tol}"
    print("KERNEL_OK")
</pallas_src>

<mosaic_0001>
module attributes {stable_mosaic.version = 11 : i64} {
  func.func @_upconv_kernel(%arg0: i32, %arg1: i32, %arg2: memref<1x8x8x4xbf16, #tpu.memory_space<vmem>>, %arg3: memref<1x8x8x4xbf16, #tpu.memory_space<vmem>>, %arg4: memref<4x32xbf16, #tpu.memory_space<vmem>>, %arg5: memref<4x32xbf16, #tpu.memory_space<vmem>>, %arg6: memref<1x32xf32, #tpu.memory_space<vmem>>, %arg7: memref<1x8x8x32xbf16, #tpu.memory_space<vmem>>) attributes {dimension_semantics = [#tpu.dimension_semantics<parallel>, #tpu.dimension_semantics<parallel>], iteration_bounds = array<i64: 2, 1>, scalar_prefetch = 0 : i64, scratch_operands = 0 : i64, tpu.core_type = #tpu.core_type<tc>, window_params = [{transform_indices = @transform_0, window_bounds = array<i64: 1, 8, 8, 4>}, {transform_indices = @transform_1, window_bounds = array<i64: 1, 8, 8, 4>}, {pipeline_mode = #tpu.pipeline_mode<synchronous>, transform_indices = @transform_2, window_bounds = array<i64: 4, 32>}, {pipeline_mode = #tpu.pipeline_mode<synchronous>, transform_indices = @transform_3, window_bounds = array<i64: 4, 32>}, {pipeline_mode = #tpu.pipeline_mode<synchronous>, transform_indices = @transform_4, window_bounds = array<i64: 1, 32>}, {transform_indices = @transform_5, window_bounds = array<i64: 1, 8, 8, 32>}]} {
    %c0 = arith.constant 0 : index
    %c0_0 = arith.constant 0 : index
    %c0_1 = arith.constant 0 : index
    %c0_2 = arith.constant 0 : index
    %0 = vector.load %arg2[%c0, %c0_0, %c0_1, %c0_2] : memref<1x8x8x4xbf16, #tpu.memory_space<vmem>>, vector<1x8x8x4xbf16>
    %1 = vector.shape_cast %0 : vector<1x8x8x4xbf16> to vector<8x8x4xbf16>
    %2 = vector.shape_cast %1 : vector<8x8x4xbf16> to vector<64x4xbf16>
    %c0_3 = arith.constant 0 : index
    %c0_4 = arith.constant 0 : index
    %c0_5 = arith.constant 0 : index
    %c0_6 = arith.constant 0 : index
    %3 = vector.load %arg3[%c0_3, %c0_4, %c0_5, %c0_6] : memref<1x8x8x4xbf16, #tpu.memory_space<vmem>>, vector<1x8x8x4xbf16>
    %4 = vector.shape_cast %3 : vector<1x8x8x4xbf16> to vector<8x8x4xbf16>
    %5 = vector.shape_cast %4 : vector<8x8x4xbf16> to vector<64x4xbf16>
    %c0_7 = arith.constant 0 : index
    %c0_8 = arith.constant 0 : index
    %6 = vector.load %arg4[%c0_7, %c0_8] : memref<4x32xbf16, #tpu.memory_space<vmem>>, vector<4x32xbf16>
    %cst = arith.constant dense<0.000000e+00> : vector<64x32xf32>
    %7 = tpu.matmul %2, %6, %cst {dimension_numbers = #tpu.dot_dimension_numbers<[1], [0], [0], [1], [0, 0, 1, 1], [], []>} : vector<64x4xbf16>, vector<4x32xbf16>, vector<64x32xf32> -> vector<64x32xf32>
    %c0_9 = arith.constant 0 : index
    %c0_10 = arith.constant 0 : index
    %8 = vector.load %arg5[%c0_9, %c0_10] : memref<4x32xbf16, #tpu.memory_space<vmem>>, vector<4x32xbf16>
    %cst_11 = arith.constant dense<0.000000e+00> : vector<64x32xf32>
    %9 = tpu.matmul %5, %8, %cst_11 {dimension_numbers = #tpu.dot_dimension_numbers<[1], [0], [0], [1], [0, 0, 1, 1], [], []>} : vector<64x4xbf16>, vector<4x32xbf16>, vector<64x32xf32> -> vector<64x32xf32>
    %10 = arith.addf %7, %9 : vector<64x32xf32>
    %c0_12 = arith.constant 0 : index
    %c0_13 = arith.constant 0 : index
    %11 = vector.load %arg6[%c0_12, %c0_13] : memref<1x32xf32, #tpu.memory_space<vmem>>, vector<1x32xf32>
    %12 = vector.broadcast %11 : vector<1x32xf32> to vector<64x32xf32>
    %13 = arith.addf %10, %12 : vector<64x32xf32>
    %14 = vector.shape_cast %13 : vector<64x32xf32> to vector<1x8x8x32xf32>
    %15 = arith.truncf %14 : vector<1x8x8x32xf32> to vector<1x8x8x32xbf16>
    %c0_14 = arith.constant 0 : index
    %c0_15 = arith.constant 0 : index
    %c0_16 = arith.constant 0 : index
    %c0_17 = arith.constant 0 : index
    %16 = vector.load %arg7[%c0_14, %c0_15, %c0_16, %c0_17] : memref<1x8x8x32xbf16, #tpu.memory_space<vmem>>, vector<1x8x8x32xbf16>
    tpu.vector_store %arg7[%c0_14, %c0_15, %c0_16, %c0_17], %15 {strides = array<i32>} : memref<1x8x8x32xbf16, #tpu.memory_space<vmem>>, vector<1x8x8x32xbf16>,
    return
  }
  func.func @transform_0(%arg0: i32, %arg1: i32) -> (i32, i32, i32, i32) {
    %c0_i32 = arith.constant 0 : i32
    %c0_i32_0 = arith.constant 0 : i32
    %c0_i32_1 = arith.constant 0 : i32
    return %arg0, %arg1, %c0_i32, %c0_i32_0 : i32, i32, i32, i32
  }
  func.func @transform_1(%arg0: i32, %arg1: i32) -> (i32, i32, i32, i32) {
    %c0_i32 = arith.constant 0 : i32
    %c0_i32_0 = arith.constant 0 : i32
    %c0_i32_1 = arith.constant 0 : i32
    return %arg0, %arg1, %c0_i32, %c0_i32_0 : i32, i32, i32, i32
  }
  func.func @transform_2(%arg0: i32, %arg1: i32) -> (i32, i32) {
    %c0_i32 = arith.constant 0 : i32
    %c0_i32_0 = arith.constant 0 : i32
    %c0_i32_1 = arith.constant 0 : i32
    return %c0_i32, %c0_i32_0 : i32, i32
  }
  func.func @transform_3(%arg0: i32, %arg1: i32) -> (i32, i32) {
    %c0_i32 = arith.constant 0 : i32
    %c0_i32_0 = arith.constant 0 : i32
    %c0_i32_1 = arith.constant 0 : i32
    return %c0_i32, %c0_i32_0 : i32, i32
  }
  func.func @transform_4(%arg0: i32, %arg1: i32) -> (i32, i32) {
    %c0_i32 = arith.constant 0 : i32
    %c0_i32_0 = arith.constant 0 : i32
    %c0_i32_1 = arith.constant 0 : i32
    return %c0_i32, %c0_i32_0 : i32, i32
  }
  func.func @transform_5(%arg0: i32, %arg1: i32) -> (i32, i32, i32, i32) {
    %c0_i32 = arith.constant 0 : i32
    %c0_i32_0 = arith.constant 0 : i32
    %c0_i32_1 = arith.constant 0 : i32
    return %arg0, %arg1, %c0_i32, %c0_i32_0 : i32, i32, i32, i32
  }
}

module attributes {stable_mosaic.version = 11 : i64} {
  func.func @_conv3x3_bn_kernel(%arg0: i32, %arg1: i32, %arg2: memref<1x1x18x8xbf16, #tpu.memory_space<vmem>>, %arg3: memref<1x8x18x8xbf16, #tpu.memory_space<vmem>>, %arg4: memref<1x1x18x8xbf16, #tpu.memory_space<vmem>>, %arg5: memref<72x8xbf16, #tpu.memory_space<vmem>>, %arg6: memref<1x8x18x8xbf16, #tpu.memory_space<vmem>>, %arg7: memref<1x1x8xf32, #tpu.memory_space<vmem>>, %arg8: memref<1x1x8xf32, #tpu.memory_space<vmem>>) attributes {dimension_semantics = [#tpu.dimension_semantics<parallel>, #tpu.dimension_semantics<arbitrary>], iteration_bounds = array<i64: 2, 2>, scalar_prefetch = 0 : i64, scratch_operands = 0 : i64, tpu.core_type = #tpu.core_type<tc>, window_params = [{transform_indices = @transform_0, window_bounds = array<i64: 1, 1, 18, 8>}, {transform_indices = @transform_1, window_bounds = array<i64: 1, 8, 18, 8>}, {transform_indices = @transform_2, window_bounds = array<i64: 1, 1, 18, 8>}, {pipeline_mode = #tpu.pipeline_mode<synchronous>, transform_indices = @transform_3, window_bounds = array<i64: 72, 8>}, {transform_indices = @transform_4, window_bounds = array<i64: 1, 8, 18, 8>}, {transform_indices = @transform_5, window_bounds = array<i64: 1, 1, 8>}, {transform_indices = @transform_6, window_bounds = array<i64: 1, 1, 8>}]} {
    %c0 = arith.constant 0 : index
    %c0_0 = arith.constant 0 : index
    %c0_1 = arith.constant 0 : index
    %c0_2 = arith.constant 0 : index
    %0 = vector.load %arg2[%c0, %c0_0, %c0_1, %c0_2] : memref<1x1x18x8xbf16, #tpu.memory_space<vmem>>, vector<1x1x18x8xbf16>
    %1 = vector.shape_cast %0 : vector<1x1x18x8xbf16> to vector<1x18x8xbf16>
    %2 = arith.extf %1 : vector<1x18x8xbf16> to vector<1x18x8xf32>
    %c0_3 = arith.constant 0 : index
    %c0_4 = arith.constant 0 : index
    %c0_5 = arith.constant 0 : index
    %c0_6 = arith.constant 0 : index
    %3 = vector.load %arg3[%c0_3, %c0_4, %c0_5, %c0_6] : memref<1x8x18x8xbf16, #tpu.memory_space<vmem>>, vector<1x8x18x8xbf16>
    %4 = vector.shape_cast %3 : vector<1x8x18x8xbf16> to vector<8x18x8xbf16>
    %5 = arith.extf %4 : vector<8x18x8xbf16> to vector<8x18x8xf32>
    %c0_7 = arith.constant 0 : index
    %c0_8 = arith.constant 0 : index
    %c0_9 = arith.constant 0 : index
    %c0_10 = arith.constant 0 : index
    %6 = vector.load %arg4[%c0_7, %c0_8, %c0_9, %c0_10] : memref<1x1x18x8xbf16, #tpu.memory_space<vmem>>, vector<1x1x18x8xbf16>
    %7 = vector.shape_cast %6 : vector<1x1x18x8xbf16> to vector<1x18x8xbf16>
    %8 = arith.extf %7 : vector<1x18x8xbf16> to vector<1x18x8xf32>
    %9 = tpu.concatenate %2, %5, %8 in 0 : vector<1x18x8xf32>, vector<8x18x8xf32>, vector<1x18x8xf32> -> vector<10x18x8xf32>
    %10 = tpu.iota {dimensions = array<i32: 0>} : vector<10x18x1xi32>
    %11 = tpu.iota {dimensions = array<i32: 1>} : vector<10x18x1xi32>
    %c0_i32 = arith.constant 0 : i32
    %12 = vector.broadcast %c0_i32 : i32 to vector<10x18x1xi32>
    %13 = arith.cmpi eq, %11, %12 : vector<10x18x1xi32>
    %c17_i32 = arith.constant 17 : i32
    %14 = vector.broadcast %c17_i32 : i32 to vector<10x18x1xi32>
    %15 = arith.cmpi eq, %11, %14 : vector<10x18x1xi32>
    %16 = arith.ori %13, %15 : vector<10x18x1xi1>
    %c0_i32_11 = arith.constant 0 : i32
    %17 = arith.cmpi eq, %arg1, %c0_i32_11 : i32
    %c0_i32_12 = arith.constant 0 : i32
    %18 = vector.broadcast %c0_i32_12 : i32 to vector<10x18x1xi32>
    %19 = arith.cmpi eq, %10, %18 : vector<10x18x1xi32>
    %20 = vector.broadcast %17 : i1 to vector<10x18x1xi1>
    %21 = arith.andi %20, %19 : vector<10x18x1xi1>
    %22 = arith.ori %16, %21 : vector<10x18x1xi1>
    %c1_i32 = arith.constant 1 : i32
    %23 = arith.cmpi eq, %arg1, %c1_i32 : i32
    %c9_i32 = arith.constant 9 : i32
    %24 = vector.broadcast %c9_i32 : i32 to vector<10x18x1xi32>
    %25 = arith.cmpi eq, %10, %24 : vector<10x18x1xi32>
    %26 = vector.broadcast %23 : i1 to vector<10x18x1xi1>
    %27 = arith.andi %26, %25 : vector<10x18x1xi1>
    %28 = arith.ori %22, %27 : vector<10x18x1xi1>
    %cst = arith.constant 0.000000e+00 : f32
    %29 = vector.shape_cast %28 : vector<10x18x1xi1> to vector<10x18x1xi1>
    %30 = vector.broadcast %29 : vector<10x18x1xi1> to vector<10x18x8xi1>
    %31 = vector.broadcast %cst : f32 to vector<10x18x8xf32>
    %32 = arith.select %30, %31, %9 : vector<10x18x8xi1>, vector<10x18x8xf32>
    %33 = vector.extract_strided_slice %32 {offsets = [0, 0, 0], sizes = [8, 16, 8], strides = [1, 1, 1]} : vector<10x18x8xf32> to vector<8x16x8xf32>
    %34 = vector.shape_cast %33 : vector<8x16x8xf32> to vector<128x8xf32>
    %35 = vector.extract_strided_slice %32 {offsets = [0, 1, 0], sizes = [8, 16, 8], strides = [1, 1, 1]} : vector<10x18x8xf32> to vector<8x16x8xf32>
    %36 = vector.shape_cast %35 : vector<8x16x8xf32> to vector<128x8xf32>
    %37 = vector.extract_strided_slice %32 {offsets = [0, 2, 0], sizes = [8, 16, 8], strides = [1, 1, 1]} : vector<10x18x8xf32> to vector<8x16x8xf32>
    %38 = vector.shape_cast %37 : vector<8x16x8xf32> to vector<128x8xf32>
    %39 = vector.extract_strided_slice %32 {offsets = [1, 0, 0], sizes = [8, 16, 8], strides = [1, 1, 1]} : vector<10x18x8xf32> to vector<8x16x8xf32>
    %40 = vector.shape_cast %39 : vector<8x16x8xf32> to vector<128x8xf32>
    %41 = vector.extract_strided_slice %32 {offsets = [1, 1, 0], sizes = [8, 16, 8], strides = [1, 1, 1]} : vector<10x18x8xf32> to vector<8x16x8xf32>
    %42 = vector.shape_cast %41 : vector<8x16x8xf32> to vector<128x8xf32>
    %43 = vector.extract_strided_slice %32 {offsets = [1, 2, 0], sizes = [8, 16, 8], strides = [1, 1, 1]} : vector<10x18x8xf32> to vector<8x16x8xf32>
    %44 = vector.shape_cast %43 : vector<8x16x8xf32> to vector<128x8xf32>
    %45 = vector.extract_strided_slice %32 {offsets = [2, 0, 0], sizes = [8, 16, 8], strides = [1, 1, 1]} : vector<10x18x8xf32> to vector<8x16x8xf32>
    %46 = vector.shape_cast %45 : vector<8x16x8xf32> to vector<128x8xf32>
    %47 = vector.extract_strided_slice %32 {offsets = [2, 1, 0], sizes = [8, 16, 8], strides = [1, 1, 1]} : vector<10x18x8xf32> to vector<8x16x8xf32>
    %48 = vector.shape_cast %47 : vector<8x16x8xf32> to vector<128x8xf32>
    %49 = vector.extract_strided_slice %32 {offsets = [2, 2, 0], sizes = [8, 16, 8], strides = [1, 1, 1]} : vector<10x18x8xf32> to vector<8x16x8xf32>
    %50 = vector.shape_cast %49 : vector<8x16x8xf32> to vector<128x8xf32>
    %51 = tpu.concatenate %34, %36, %38, %40, %42, %44, %46, %48, %50 in 1 : vector<128x8xf32>, vector<128x8xf32>, vector<128x8xf32>, vector<128x8xf32>, vector<128x8xf32>, vector<128x8xf32>, vector<128x8xf32>, vector<128x8xf32>, vector<128x8xf32> -> vector<128x72xf32>
    %52 = arith.truncf %51 : vector<128x72xf32> to vector<128x72xbf16>
    %c0_13 = arith.constant 0 : index
    %c0_14 = arith.constant 0 : index
    %53 = vector.load %arg5[%c0_13, %c0_14] : memref<72x8xbf16, #tpu.memory_space<vmem>>, vector<72x8xbf16>
    %cst_15 = arith.constant dense<0.000000e+00> : vector<128x8xf32>
    %54 = tpu.matmul %52, %53, %cst_15 {dimension_numbers = #tpu.dot_dimension_numbers<[1], [0], [0], [1], [0, 0, 1, 1], [], []>} : vector<128x72xbf16>, vector<72x8xbf16>, vector<128x8xf32> -> vector<128x8xf32>
    %c0_i32_16 = arith.constant 0 : i32
    %55 = arith.cmpi eq, %arg1, %c0_i32_16 : i32
    %56 = arith.extui %55 : i1 to i32
    %c0_i32_17 = arith.constant 0 : i32
    %57 = arith.cmpi ne, %56, %c0_i32_17 : i32
    scf.if %57 {
      %cst_43 = arith.constant 0.000000e+00 : f32
      %78 = vector.broadcast %cst_43 : f32 to vector<1x1x8xf32>
      %c0_44 = arith.constant 0 : index
      %c0_45 = arith.constant 0 : index
      %c0_46 = arith.constant 0 : index
      %79 = vector.load %arg7[%c0_44, %c0_45, %c0_46] : memref<1x1x8xf32, #tpu.memory_space<vmem>>, vector<1x1x8xf32>
      tpu.vector_store %arg7[%c0_44, %c0_45, %c0_46], %78 {strides = array<i32>} : memref<1x1x8xf32, #tpu.memory_space<vmem>>, vector<1x1x8xf32>,
      %cst_47 = arith.constant 0.000000e+00 : f32
      %80 = vector.broadcast %cst_47 : f32 to vector<1x1x8xf32>
      %c0_48 = arith.constant 0 : index
      %c0_49 = arith.constant 0 : index
      %c0_50 = arith.constant 0 : index
      %81 = vector.load %arg8[%c0_48, %c0_49, %c0_50] : memref<1x1x8xf32, #tpu.memory_space<vmem>>, vector<1x1x8xf32>
      tpu.vector_store %arg8[%c0_48, %c0_49, %c0_50], %80 {strides = array<i32>} : memref<1x1x8xf32, #tpu.memory_space<vmem>>, vector<1x1x8xf32>,
    } else {
    }
    %c0_18 = arith.constant 0 : index
    %c0_19 = arith.constant 0 : index
    %c0_20 = arith.constant 0 : index
    %58 = vector.load %arg7[%c0_18, %c0_19, %c0_20] : memref<1x1x8xf32, #tpu.memory_space<vmem>>, vector<1x1x8xf32>
    %cst_21 = arith.constant dense<0.000000e+00> : vector<8xf32>
    %59 = vector.multi_reduction <add>, %54, %cst_21 [0] : vector<128x8xf32> to vector<8xf32>
    %60 = vector.shape_cast %59 : vector<8xf32> to vector<1x8xf32>
    %61 = vector.shape_cast %60 : vector<1x8xf32> to vector<1x1x8xf32>
    %62 = arith.addf %58, %61 : vector<1x1x8xf32>
    %c0_22 = arith.constant 0 : index
    %c0_23 = arith.constant 0 : index
    %c0_24 = arith.constant 0 : index
    %63 = vector.load %arg7[%c0_22, %c0_23, %c0_24] : memref<1x1x8xf32, #tpu.memory_space<vmem>>, vector<1x1x8xf32>
    tpu.vector_store %arg7[%c0_22, %c0_23, %c0_24], %62 {strides = array<i32>} : memref<1x1x8xf32, #tpu.memory_space<vmem>>, vector<1x1x8xf32>,
    %c0_25 = arith.constant 0 : index
    %c0_26 = arith.constant 0 : index
    %c0_27 = arith.constant 0 : index
    %64 = vector.load %arg8[%c0_25, %c0_26, %c0_27] : memref<1x1x8xf32, #tpu.memory_space<vmem>>, vector<1x1x8xf32>
    %65 = arith.mulf %54, %54 : vector<128x8xf32>
    %cst_28 = arith.constant dense<0.000000e+00> : vector<8xf32>
    %66 = vector.multi_reduction <add>, %65, %cst_28 [0] : vector<128x8xf32> to vector<8xf32>
    %67 = vector.shape_cast %66 : vector<8xf32> to vector<1x8xf32>
    %68 = vector.shape_cast %67 : vector<1x8xf32> to vector<1x1x8xf32>
    %69 = arith.addf %64, %68 : vector<1x1x8xf32>
    %c0_29 = arith.constant 0 : index
    %c0_30 = arith.constant 0 : index
    %c0_31 = arith.constant 0 : index
    %70 = vector.load %arg8[%c0_29, %c0_30, %c0_31] : memref<1x1x8xf32, #tpu.memory_space<vmem>>, vector<1x1x8xf32>
    tpu.vector_store %arg8[%c0_29, %c0_30, %c0_31], %69 {strides = array<i32>} : memref<1x1x8xf32, #tpu.memory_space<vmem>>, vector<1x1x8xf32>,
    %71 = vector.shape_cast %54 : vector<128x8xf32> to vector<8x16x8xf32>
    %72 = arith.truncf %71 : vector<8x16x8xf32> to vector<8x16x8xbf16>
    %cst_32 = arith.constant 0.000000e+00 : bf16
    %73 = vector.broadcast %cst_32 : bf16 to vector<1x8x1x8xbf16>
    %74 = vector.shape_cast %72 : vector<8x16x8xbf16> to vector<1x8x16x8xbf16>
    %c0_33 = arith.constant 0 : index
    %c0_34 = arith.constant 0 : index
    %c1 = arith.constant 1 : index
    %c0_35 = arith.constant 0 : index
    %75 = vector.load %arg6[%c0_33, %c0_34, %c1, %c0_35] : memref<1x8x18x8xbf16, #tpu.memory_space<vmem>>, vector<1x8x16x8xbf16>
    tpu.vector_store %arg6[%c0_33, %c0_34, %c1, %c0_35], %74 {strides = array<i32>} : memref<1x8x18x8xbf16, #tpu.memory_space<vmem>>, vector<1x8x16x8xbf16>,
    %c0_36 = arith.constant 0 : index
    %c0_37 = arith.constant 0 : index
    %c0_38 = arith.constant 0 : index
    %c0_39 = arith.constant 0 : index
    %76 = vector.load %arg6[%c0_36, %c0_37, %c0_38, %c0_39] : memref<1x8x18x8xbf16, #tpu.memory_space<vmem>>, vector<1x8x1x8xbf16>
    tpu.vector_store %arg6[%c0_36, %c0_37, %c0_38, %c0_39], %73 {strides = array<i32>} : memref<1x8x18x8xbf16, #tpu.memory_space<vmem>>, vector<1x8x1x8xbf16>,
    %c0_40 = arith.constant 0 : index
    %c0_41 = arith.constant 0 : index
    %c17 = arith.constant 17 : index
    %c0_42 = arith.constant 0 : index
    %77 = vector.load %arg6[%c0_40, %c0_41, %c17, %c0_42] : memref<1x8x18x8xbf16, #tpu.memory_space<vmem>>, vector<1x8x1x8xbf16>
    tpu.vector_store %arg6[%c0_40, %c0_41, %c17, %c0_42], %73 {strides = array<i32>} : memref<1x8x18x8xbf16, #tpu.memory_space<vmem>>, vector<1x8x1x8xbf16>,
    return
  }
  func.func @transform_0(%arg0: i32, %arg1: i32) -> (i32, i32, i32, i32) {
    %c8_i32 = arith.constant 8 : i32
    %0 = arith.muli %arg1, %c8_i32 : i32
    %c1_i32 = arith.constant 1 : i32
    %1 = arith.subi %0, %c1_i32 : i32
    %c0_i32 = arith.constant 0 : i32
    %2 = arith.maxsi %1, %c0_i32 : i32
    %c0_i32_0 = arith.constant 0 : i32
    %c0_i32_1 = arith.constant 0 : i32
    %c0_i32_2 = arith.constant 0 : i32
    return %arg0, %2, %c0_i32_0, %c0_i32_1 : i32, i32, i32, i32
  }
  func.func @transform_1(%arg0: i32, %arg1: i32) -> (i32, i32, i32, i32) {
    %c0_i32 = arith.constant 0 : i32
    %c0_i32_0 = arith.constant 0 : i32
    %c0_i32_1 = arith.constant 0 : i32
    return %arg0, %arg1, %c0_i32, %c0_i32_0 : i32, i32, i32, i32
  }
  func.func @transform_2(%arg0: i32, %arg1: i32) -> (i32, i32, i32, i32) {
    %c8_i32 = arith.constant 8 : i32
    %0 = arith.muli %arg1, %c8_i32 : i32
    %c8_i32_0 = arith.constant 8 : i32
    %1 = arith.addi %0, %c8_i32_0 : i32
    %c15_i32 = arith.constant 15 : i32
    %2 = arith.minsi %1, %c15_i32 : i32
    %c0_i32 = arith.constant 0 : i32
    %c0_i32_1 = arith.constant 0 : i32
    %c0_i32_2 = arith.constant 0 : i32
    return %arg0, %2, %c0_i32, %c0_i32_1 : i32, i32, i32, i32
  }
  func.func @transform_3(%arg0: i32, %arg1: i32) -> (i32, i32) {
    %c0_i32 = arith.constant 0 : i32
    %c0_i32_0 = arith.constant 0 : i32
    %c0_i32_1 = arith.constant 0 : i32
    return %c0_i32, %c0_i32_0 : i32, i32
  }
  func.func @transform_4(%arg0: i32, %arg1: i32) -> (i32, i32, i32, i32) {
    %c0_i32 = arith.constant 0 : i32
    %c0_i32_0 = arith.constant 0 : i32
    %c0_i32_1 = arith.constant 0 : i32
    return %arg0, %arg1, %c0_i32, %c0_i32_0 : i32, i32, i32, i32
  }
  func.func @transform_5(%arg0: i32, %arg1: i32) -> (i32, i32, i32) {
    %c0_i32 = arith.constant 0 : i32
    %c0_i32_0 = arith.constant 0 : i32
    %c0_i32_1 = arith.constant 0 : i32
    return %arg0, %c0_i32, %c0_i32_0 : i32, i32, i32
  }
  func.func @transform_6(%arg0: i32, %arg1: i32) -> (i32, i32, i32) {
    %c0_i32 = arith.constant 0 : i32
    %c0_i32_0 = arith.constant 0 : i32
    %c0_i32_1 = arith.constant 0 : i32
    return %arg0, %c0_i32, %c0_i32_0 : i32, i32, i32
  }
}

module attributes {stable_mosaic.version = 11 : i64} {
  func.func @_bn_relu_kernel(%arg0: i32, %arg1: i32, %arg2: memref<1x8x18x8xbf16, #tpu.memory_space<vmem>>, %arg3: memref<1x8xf32, #tpu.memory_space<vmem>>, %arg4: memref<1x8xf32, #tpu.memory_space<vmem>>, %arg5: memref<1x8x16x8xf32, #tpu.memory_space<vmem>>) attributes {dimension_semantics = [#tpu.dimension_semantics<parallel>, #tpu.dimension_semantics<parallel>], iteration_bounds = array<i64: 2, 2>, scalar_prefetch = 0 : i64, scratch_operands = 0 : i64, tpu.core_type = #tpu.core_type<tc>, window_params = [{transform_indices = @transform_0, window_bounds = array<i64: 1, 8, 18, 8>}, {pipeline_mode = #tpu.pipeline_mode<synchronous>, transform_indices = @transform_1, window_bounds = array<i64: 1, 8>}, {pipeline_mode = #tpu.pipeline_mode<synchronous>, transform_indices = @transform_2, window_bounds = array<i64: 1, 8>}, {transform_indices = @transform_3, window_bounds = array<i64: 1, 8, 16, 8>}]} {
    %c0 = arith.constant 0 : index
    %c0_0 = arith.constant 0 : index
    %c0_1 = arith.constant 0 : index
    %c0_2 = arith.constant 0 : index
    %0 = vector.load %arg2[%c0, %c0_0, %c0_1, %c0_2] : memref<1x8x18x8xbf16, #tpu.memory_space<vmem>>, vector<1x8x18x8xbf16>
    %1 = vector.extract_strided_slice %0 {offsets = [0, 0, 1, 0], sizes = [1, 8, 16, 8], strides = [1, 1, 1, 1]} : vector<1x8x18x8xbf16> to vector<1x8x16x8xbf16>
    %2 = arith.extf %1 : vector<1x8x16x8xbf16> to vector<1x8x16x8xf32>
    %c0_3 = arith.constant 0 : index
    %c0_4 = arith.constant 0 : index
    %3 = vector.load %arg3[%c0_3, %c0_4] : memref<1x8xf32, #tpu.memory_space<vmem>>, vector<1x8xf32>
    %4 = vector.shape_cast %3 : vector<1x8xf32> to vector<1x1x1x8xf32>
    %5 = vector.broadcast %4 : vector<1x1x1x8xf32> to vector<1x8x16x8xf32>
    %6 = arith.mulf %2, %5 : vector<1x8x16x8xf32>
    %c0_5 = arith.constant 0 : index
    %c0_6 = arith.constant 0 : index
    %7 = vector.load %arg4[%c0_5, %c0_6] : memref<1x8xf32, #tpu.memory_space<vmem>>, vector<1x8xf32>
    %8 = vector.shape_cast %7 : vector<1x8xf32> to vector<1x1x1x8xf32>
    %9 = vector.broadcast %8 : vector<1x1x1x8xf32> to vector<1x8x16x8xf32>
    %10 = arith.addf %6, %9 : vector<1x8x16x8xf32>
    %cst = arith.constant 0.000000e+00 : f32
    %11 = vector.broadcast %cst : f32 to vector<1x8x16x8xf32>
    %12 = arith.maximumf %10, %11 : vector<1x8x16x8xf32>
    %c0_7 = arith.constant 0 : index
    %c0_8 = arith.constant 0 : index
    %c0_9 = arith.constant 0 : index
    %c0_10 = arith.constant 0 : index
    %13 = vector.load %arg5[%c0_7, %c0_8, %c0_9, %c0_10] : memref<1x8x16x8xf32, #tpu.memory_space<vmem>>, vector<1x8x16x8xf32>
    tpu.vector_store %arg5[%c0_7, %c0_8, %c0_9, %c0_10], %12 {strides = array<i32>} : memref<1x8x16x8xf32, #tpu.memory_space<vmem>>, vector<1x8x16x8xf32>,
    return
  }
  func.func @transform_0(%arg0: i32, %arg1: i32) -> (i32, i32, i32, i32) {
    %c0_i32 = arith.constant 0 : i32
    %c0_i32_0 = arith.constant 0 : i32
    %c0_i32_1 = arith.constant 0 : i32
    return %arg0, %arg1, %c0_i32, %c0_i32_0 : i32, i32, i32, i32
  }
  func.func @transform_1(%arg0: i32, %arg1: i32) -> (i32, i32) {
    %c0_i32 = arith.constant 0 : i32
    %c0_i32_0 = arith.constant 0 : i32
    %c0_i32_1 = arith.constant 0 : i32
    return %c0_i32, %c0_i32_0 : i32, i32
  }
  func.func @transform_2(%arg0: i32, %arg1: i32) -> (i32, i32) {
    %c0_i32 = arith.constant 0 : i32
    %c0_i32_0 = arith.constant 0 : i32
    %c0_i32_1 = arith.constant 0 : i32
    return %c0_i32, %c0_i32_0 : i32, i32
  }
  func.func @transform_3(%arg0: i32, %arg1: i32) -> (i32, i32, i32, i32) {
    %c0_i32 = arith.constant 0 : i32
    %c0_i32_0 = arith.constant 0 : i32
    %c0_i32_1 = arith.constant 0 : i32
    return %arg0, %arg1, %c0_i32, %c0_i32_0 : i32, i32, i32, i32
  }
}

module attributes {stable_mosaic.version = 11 : i64} {
  func.func @_conv3x3_bn_kernel(%arg0: i32, %arg1: i32, %arg2: memref<1x1x18x8xbf16, #tpu.memory_space<vmem>>, %arg3: memref<1x8x18x8xbf16, #tpu.memory_space<vmem>>, %arg4: memref<1x1x18x8xbf16, #tpu.memory_space<vmem>>, %arg5: memref<72x8xbf16, #tpu.memory_space<vmem>>, %arg6: memref<1x8xf32, #tpu.memory_space<vmem>>, %arg7: memref<1x8xf32, #tpu.memory_space<vmem>>, %arg8: memref<1x8x18x8xbf16, #tpu.memory_space<vmem>>, %arg9: memref<1x1x8xf32, #tpu.memory_space<vmem>>, %arg10: memref<1x1x8xf32, #tpu.memory_space<vmem>>) attributes {dimension_semantics = [#tpu.dimension_semantics<parallel>, #tpu.dimension_semantics<arbitrary>], iteration_bounds = array<i64: 2, 2>, scalar_prefetch = 0 : i64, scratch_operands = 0 : i64, tpu.core_type = #tpu.core_type<tc>, window_params = [{transform_indices = @transform_0, window_bounds = array<i64: 1, 1, 18, 8>}, {transform_indices = @transform_1, window_bounds = array<i64: 1, 8, 18, 8>}, {transform_indices = @transform_2, window_bounds = array<i64: 1, 1, 18, 8>}, {pipeline_mode = #tpu.pipeline_mode<synchronous>, transform_indices = @transform_3, window_bounds = array<i64: 72, 8>}, {pipeline_mode = #tpu.pipeline_mode<synchronous>, transform_indices = @transform_4, window_bounds = array<i64: 1, 8>}, {pipeline_mode = #tpu.pipeline_mode<synchronous>, transform_indices = @transform_5, window_bounds = array<i64: 1, 8>}, {transform_indices = @transform_6, window_bounds = array<i64: 1, 8, 18, 8>}, {transform_indices = @transform_7, window_bounds = array<i64: 1, 1, 8>}, {transform_indices = @transform_8, window_bounds = array<i64: 1, 1, 8>}]} {
    %c0 = arith.constant 0 : index
    %c0_0 = arith.constant 0 : index
    %c0_1 = arith.constant 0 : index
    %c0_2 = arith.constant 0 : index
    %0 = vector.load %arg2[%c0, %c0_0, %c0_1, %c0_2] : memref<1x1x18x8xbf16, #tpu.memory_space<vmem>>, vector<1x1x18x8xbf16>
    %1 = vector.shape_cast %0 : vector<1x1x18x8xbf16> to vector<1x18x8xbf16>
    %2 = arith.extf %1 : vector<1x18x8xbf16> to vector<1x18x8xf32>
    %c0_3 = arith.constant 0 : index
    %c0_4 = arith.constant 0 : index
    %c0_5 = arith.constant 0 : index
    %c0_6 = arith.constant 0 : index
    %3 = vector.load %arg3[%c0_3, %c0_4, %c0_5, %c0_6] : memref<1x8x18x8xbf16, #tpu.memory_space<vmem>>, vector<1x8x18x8xbf16>
    %4 = vector.shape_cast %3 : vector<1x8x18x8xbf16> to vector<8x18x8xbf16>
    %5 = arith.extf %4 : vector<8x18x8xbf16> to vector<8x18x8xf32>
    %c0_7 = arith.constant 0 : index
    %c0_8 = arith.constant 0 : index
    %c0_9 = arith.constant 0 : index
    %c0_10 = arith.constant 0 : index
    %6 = vector.load %arg4[%c0_7, %c0_8, %c0_9, %c0_10] : memref<1x1x18x8xbf16, #tpu.memory_space<vmem>>, vector<1x1x18x8xbf16>
    %7 = vector.shape_cast %6 : vector<1x1x18x8xbf16> to vector<1x18x8xbf16>
    %8 = arith.extf %7 : vector<1x18x8xbf16> to vector<1x18x8xf32>
    %9 = tpu.concatenate %2, %5, %8 in 0 : vector<1x18x8xf32>, vector<8x18x8xf32>, vector<1x18x8xf32> -> vector<10x18x8xf32>
    %c0_11 = arith.constant 0 : index
    %c0_12 = arith.constant 0 : index
    %10 = vector.load %arg6[%c0_11, %c0_12] : memref<1x8xf32, #tpu.memory_space<vmem>>, vector<1x8xf32>
    %11 = vector.shape_cast %10 : vector<1x8xf32> to vector<1x1x8xf32>
    %12 = vector.broadcast %11 : vector<1x1x8xf32> to vector<10x18x8xf32>
    %13 = arith.mulf %9, %12 : vector<10x18x8xf32>
    %c0_13 = arith.constant 0 : index
    %c0_14 = arith.constant 0 : index
    %14 = vector.load %arg7[%c0_13, %c0_14] : memref<1x8xf32, #tpu.memory_space<vmem>>, vector<1x8xf32>
    %15 = vector.shape_cast %14 : vector<1x8xf32> to vector<1x1x8xf32>
    %16 = vector.broadcast %15 : vector<1x1x8xf32> to vector<10x18x8xf32>
    %17 = arith.addf %13, %16 : vector<10x18x8xf32>
    %cst = arith.constant 0.000000e+00 : f32
    %18 = vector.broadcast %cst : f32 to vector<10x18x8xf32>
    %19 = arith.maximumf %17, %18 : vector<10x18x8xf32>
    %20 = tpu.iota {dimensions = array<i32: 0>} : vector<10x18x1xi32>
    %21 = tpu.iota {dimensions = array<i32: 1>} : vector<10x18x1xi32>
    %c0_i32 = arith.constant 0 : i32
    %22 = vector.broadcast %c0_i32 : i32 to vector<10x18x1xi32>
    %23 = arith.cmpi eq, %21, %22 : vector<10x18x1xi32>
    %c17_i32 = arith.constant 17 : i32
    %24 = vector.broadcast %c17_i32 : i32 to vector<10x18x1xi32>
    %25 = arith.cmpi eq, %21, %24 : vector<10x18x1xi32>
    %26 = arith.ori %23, %25 : vector<10x18x1xi1>
    %c0_i32_15 = arith.constant 0 : i32
    %27 = arith.cmpi eq, %arg1, %c0_i32_15 : i32
    %c0_i32_16 = arith.constant 0 : i32
    %28 = vector.broadcast %c0_i32_16 : i32 to vector<10x18x1xi32>
    %29 = arith.cmpi eq, %20, %28 : vector<10x18x1xi32>
    %30 = vector.broadcast %27 : i1 to vector<10x18x1xi1>
    %31 = arith.andi %30, %29 : vector<10x18x1xi1>
    %32 = arith.ori %26, %31 : vector<10x18x1xi1>
    %c1_i32 = arith.constant 1 : i32
    %33 = arith.cmpi eq, %arg1, %c1_i32 : i32
    %c9_i32 = arith.constant 9 : i32
    %34 = vector.broadcast %c9_i32 : i32 to vector<10x18x1xi32>
    %35 = arith.cmpi eq, %20, %34 : vector<10x18x1xi32>
    %36 = vector.broadcast %33 : i1 to vector<10x18x1xi1>
    %37 = arith.andi %36, %35 : vector<10x18x1xi1>
    %38 = arith.ori %32, %37 : vector<10x18x1xi1>
    %cst_17 = arith.constant 0.000000e+00 : f32
    %39 = vector.shape_cast %38 : vector<10x18x1xi1> to vector<10x18x1xi1>
    %40 = vector.broadcast %39 : vector<10x18x1xi1> to vector<10x18x8xi1>
    %41 = vector.broadcast %cst_17 : f32 to vector<10x18x8xf32>
    %42 = arith.select %40, %41, %19 : vector<10x18x8xi1>, vector<10x18x8xf32>
    %43 = vector.extract_strided_slice %42 {offsets = [0, 0, 0], sizes = [8, 16, 8], strides = [1, 1, 1]} : vector<10x18x8xf32> to vector<8x16x8xf32>
    %44 = vector.shape_cast %43 : vector<8x16x8xf32> to vector<128x8xf32>
    %45 = vector.extract_strided_slice %42 {offsets = [0, 1, 0], sizes = [8, 16, 8], strides = [1, 1, 1]} : vector<10x18x8xf32> to vector<8x16x8xf32>
    %46 = vector.shape_cast %45 : vector<8x16x8xf32> to vector<128x8xf32>
    %47 = vector.extract_strided_slice %42 {offsets = [0, 2, 0], sizes = [8, 16, 8], strides = [1, 1, 1]} : vector<10x18x8xf32> to vector<8x16x8xf32>
    %48 = vector.shape_cast %47 : vector<8x16x8xf32> to vector<128x8xf32>
    %49 = vector.extract_strided_slice %42 {offsets = [1, 0, 0], sizes = [8, 16, 8], strides = [1, 1, 1]} : vector<10x18x8xf32> to vector<8x16x8xf32>
    %50 = vector.shape_cast %49 : vector<8x16x8xf32> to vector<128x8xf32>
    %51 = vector.extract_strided_slice %42 {offsets = [1, 1, 0], sizes = [8, 16, 8], strides = [1, 1, 1]} : vector<10x18x8xf32> to vector<8x16x8xf32>
    %52 = vector.shape_cast %51 : vector<8x16x8xf32> to vector<128x8xf32>
    %53 = vector.extract_strided_slice %42 {offsets = [1, 2, 0], sizes = [8, 16, 8], strides = [1, 1, 1]} : vector<10x18x8xf32> to vector<8x16x8xf32>
    %54 = vector.shape_cast %53 : vector<8x16x8xf32> to vector<128x8xf32>
    %55 = vector.extract_strided_slice %42 {offsets = [2, 0, 0], sizes = [8, 16, 8], strides = [1, 1, 1]} : vector<10x18x8xf32> to vector<8x16x8xf32>
    %56 = vector.shape_cast %55 : vector<8x16x8xf32> to vector<128x8xf32>
    %57 = vector.extract_strided_slice %42 {offsets = [2, 1, 0], sizes = [8, 16, 8], strides = [1, 1, 1]} : vector<10x18x8xf32> to vector<8x16x8xf32>
    %58 = vector.shape_cast %57 : vector<8x16x8xf32> to vector<128x8xf32>
    %59 = vector.extract_strided_slice %42 {offsets = [2, 2, 0], sizes = [8, 16, 8], strides = [1, 1, 1]} : vector<10x18x8xf32> to vector<8x16x8xf32>
    %60 = vector.shape_cast %59 : vector<8x16x8xf32> to vector<128x8xf32>
    %61 = tpu.concatenate %44, %46, %48, %50, %52, %54, %56, %58, %60 in 1 : vector<128x8xf32>, vector<128x8xf32>, vector<128x8xf32>, vector<128x8xf32>, vector<128x8xf32>, vector<128x8xf32>, vector<128x8xf32>, vector<128x8xf32>, vector<128x8xf32> -> vector<128x72xf32>
    %62 = arith.truncf %61 : vector<128x72xf32> to vector<128x72xbf16>
    %c0_18 = arith.constant 0 : index
    %c0_19 = arith.constant 0 : index
    %63 = vector.load %arg5[%c0_18, %c0_19] : memref<72x8xbf16, #tpu.memory_space<vmem>>, vector<72x8xbf16>
    %cst_20 = arith.constant dense<0.000000e+00> : vector<128x8xf32>
    %64 = tpu.matmul %62, %63, %cst_20 {dimension_numbers = #tpu.dot_dimension_numbers<[1], [0], [0], [1], [0, 0, 1, 1], [], []>} : vector<128x72xbf16>, vector<72x8xbf16>, vector<128x8xf32> -> vector<128x8xf32>
    %c0_i32_21 = arith.constant 0 : i32
    %65 = arith.cmpi eq, %arg1, %c0_i32_21 : i32
    %66 = arith.extui %65 : i1 to i32
    %c0_i32_22 = arith.constant 0 : i32
    %67 = arith.cmpi ne, %66, %c0_i32_22 : i32
    scf.if %67 {
      %cst_48 = arith.constant 0.000000e+00 : f32
      %88 = vector.broadcast %cst_48 : f32 to vector<1x1x8xf32>
      %c0_49 = arith.constant 0 : index
      %c0_50 = arith.constant 0 : index
      %c0_51 = arith.constant 0 : index
      %89 = vector.load %arg9[%c0_49, %c0_50, %c0_51] : memref<1x1x8xf32, #tpu.memory_space<vmem>>, vector<1x1x8xf32>
      tpu.vector_store %arg9[%c0_49, %c0_50, %c0_51], %88 {strides = array<i32>} : memref<1x1x8xf32, #tpu.memory_space<vmem>>, vector<1x1x8xf32>,
      %cst_52 = arith.constant 0.000000e+00 : f32
      %90 = vector.broadcast %cst_52 : f32 to vector<1x1x8xf32>
      %c0_53 = arith.constant 0 : index
      %c0_54 = arith.constant 0 : index
      %c0_55 = arith.constant 0 : index
      %91 = vector.load %arg10[%c0_53, %c0_54, %c0_55] : memref<1x1x8xf32, #tpu.memory_space<vmem>>, vector<1x1x8xf32>
      tpu.vector_store %arg10[%c0_53, %c0_54, %c0_55], %90 {strides = array<i32>} : memref<1x1x8xf32, #tpu.memory_space<vmem>>, vector<1x1x8xf32>,
    } else {
    }
    %c0_23 = arith.constant 0 : index
    %c0_24 = arith.constant 0 : index
    %c0_25 = arith.constant 0 : index
    %68 = vector.load %arg9[%c0_23, %c0_24, %c0_25] : memref<1x1x8xf32, #tpu.memory_space<vmem>>, vector<1x1x8xf32>
    %cst_26 = arith.constant dense<0.000000e+00> : vector<8xf32>
    %69 = vector.multi_reduction <add>, %64, %cst_26 [0] : vector<128x8xf32> to vector<8xf32>
    %70 = vector.shape_cast %69 : vector<8xf32> to vector<1x8xf32>
    %71 = vector.shape_cast %70 : vector<1x8xf32> to vector<1x1x8xf32>
    %72 = arith.addf %68, %71 : vector<1x1x8xf32>
    %c0_27 = arith.constant 0 : index
    %c0_28 = arith.constant 0 : index
    %c0_29 = arith.constant 0 : index
    %73 = vector.load %arg9[%c0_27, %c0_28, %c0_29] : memref<1x1x8xf32, #tpu.memory_space<vmem>>, vector<1x1x8xf32>
    tpu.vector_store %arg9[%c0_27, %c0_28, %c0_29], %72 {strides = array<i32>} : memref<1x1x8xf32, #tpu.memory_space<vmem>>, vector<1x1x8xf32>,
    %c0_30 = arith.constant 0 : index
    %c0_31 = arith.constant 0 : index
    %c0_32 = arith.constant 0 : index
    %74 = vector.load %arg10[%c0_30, %c0_31, %c0_32] : memref<1x1x8xf32, #tpu.memory_space<vmem>>, vector<1x1x8xf32>
    %75 = arith.mulf %64, %64 : vector<128x8xf32>
    %cst_33 = arith.constant dense<0.000000e+00> : vector<8xf32>
    %76 = vector.multi_reduction <add>, %75, %cst_33 [0] : vector<128x8xf32> to vector<8xf32>
    %77 = vector.shape_cast %76 : vector<8xf32> to vector<1x8xf32>
    %78 = vector.shape_cast %77 : vector<1x8xf32> to vector<1x1x8xf32>
    %79 = arith.addf %74, %78 : vector<1x1x8xf32>
    %c0_34 = arith.constant 0 : index
    %c0_35 = arith.constant 0 : index
    %c0_36 = arith.constant 0 : index
    %80 = vector.load %arg10[%c0_34, %c0_35, %c0_36] : memref<1x1x8xf32, #tpu.memory_space<vmem>>, vector<1x1x8xf32>
    tpu.vector_store %arg10[%c0_34, %c0_35, %c0_36], %79 {strides = array<i32>} : memref<1x1x8xf32, #tpu.memory_space<vmem>>, vector<1x1x8xf32>,
    %81 = vector.shape_cast %64 : vector<128x8xf32> to vector<8x16x8xf32>
    %82 = arith.truncf %81 : vector<8x16x8xf32> to vector<8x16x8xbf16>
    %cst_37 = arith.constant 0.000000e+00 : bf16
    %83 = vector.broadcast %cst_37 : bf16 to vector<1x8x1x8xbf16>
    %84 = vector.shape_cast %82 : vector<8x16x8xbf16> to vector<1x8x16x8xbf16>
    %c0_38 = arith.constant 0 : index
    %c0_39 = arith.constant 0 : index
    %c1 = arith.constant 1 : index
    %c0_40 = arith.constant 0 : index
    %85 = vector.load %arg8[%c0_38, %c0_39, %c1, %c0_40] : memref<1x8x18x8xbf16, #tpu.memory_space<vmem>>, vector<1x8x16x8xbf16>
    tpu.vector_store %arg8[%c0_38, %c0_39, %c1, %c0_40], %84 {strides = array<i32>} : memref<1x8x18x8xbf16, #tpu.memory_space<vmem>>, vector<1x8x16x8xbf16>,
    %c0_41 = arith.constant 0 : index
    %c0_42 = arith.constant 0 : index
    %c0_43 = arith.constant 0 : index
    %c0_44 = arith.constant 0 : index
    %86 = vector.load %arg8[%c0_41, %c0_42, %c0_43, %c0_44] : memref<1x8x18x8xbf16, #tpu.memory_space<vmem>>, vector<1x8x1x8xbf16>
    tpu.vector_store %arg8[%c0_41, %c0_42, %c0_43, %c0_44], %83 {strides = array<i32>} : memref<1x8x18x8xbf16, #tpu.memory_space<vmem>>, vector<1x8x1x8xbf16>,
    %c0_45 = arith.constant 0 : index
    %c0_46 = arith.constant 0 : index
    %c17 = arith.constant 17 : index
    %c0_47 = arith.constant 0 : index
    %87 = vector.load %arg8[%c0_45, %c0_46, %c17, %c0_47] : memref<1x8x18x8xbf16, #tpu.memory_space<vmem>>, vector<1x8x1x8xbf16>
    tpu.vector_store %arg8[%c0_45, %c0_46, %c17, %c0_47], %83 {strides = array<i32>} : memref<1x8x18x8xbf16, #tpu.memory_space<vmem>>, vector<1x8x1x8xbf16>,
    return
  }
  func.func @transform_0(%arg0: i32, %arg1: i32) -> (i32, i32, i32, i32) {
    %c8_i32 = arith.constant 8 : i32
    %0 = arith.muli %arg1, %c8_i32 : i32
    %c1_i32 = arith.constant 1 : i32
    %1 = arith.subi %0, %c1_i32 : i32
    %c0_i32 = arith.constant 0 : i32
    %2 = arith.maxsi %1, %c0_i32 : i32
    %c0_i32_0 = arith.constant 0 : i32
    %c0_i32_1 = arith.constant 0 : i32
    %c0_i32_2 = arith.constant 0 : i32
    return %arg0, %2, %c0_i32_0, %c0_i32_1 : i32, i32, i32, i32
  }
  func.func @transform_1(%arg0: i32, %arg1: i32) -> (i32, i32, i32, i32) {
    %c0_i32 = arith.constant 0 : i32
    %c0_i32_0 = arith.constant 0 : i32
    %c0_i32_1 = arith.constant 0 : i32
    return %arg0, %arg1, %c0_i32, %c0_i32_0 : i32, i32, i32, i32
  }
  func.func @transform_2(%arg0: i32, %arg1: i32) -> (i32, i32, i32, i32) {
    %c8_i32 = arith.constant 8 : i32
    %0 = arith.muli %arg1, %c8_i32 : i32
    %c8_i32_0 = arith.constant 8 : i32
    %1 = arith.addi %0, %c8_i32_0 : i32
    %c15_i32 = arith.constant 15 : i32
    %2 = arith.minsi %1, %c15_i32 : i32
    %c0_i32 = arith.constant 0 : i32
    %c0_i32_1 = arith.constant 0 : i32
    %c0_i32_2 = arith.constant 0 : i32
    return %arg0, %2, %c0_i32, %c0_i32_1 : i32, i32, i32, i32
  }
  func.func @transform_3(%arg0: i32, %arg1: i32) -> (i32, i32) {
    %c0_i32 = arith.constant 0 : i32
    %c0_i32_0 = arith.constant 0 : i32
    %c0_i32_1 = arith.constant 0 : i32
    return %c0_i32, %c0_i32_0 : i32, i32
  }
  func.func @transform_4(%arg0: i32, %arg1: i32) -> (i32, i32) {
    %c0_i32 = arith.constant 0 : i32
    %c0_i32_0 = arith.constant 0 : i32
    %c0_i32_1 = arith.constant 0 : i32
    return %c0_i32, %c0_i32_0 : i32, i32
  }
  func.func @transform_5(%arg0: i32, %arg1: i32) -> (i32, i32) {
    %c0_i32 = arith.constant 0 : i32
    %c0_i32_0 = arith.constant 0 : i32
    %c0_i32_1 = arith.constant 0 : i32
    return %c0_i32, %c0_i32_0 : i32, i32
  }
  func.func @transform_6(%arg0: i32, %arg1: i32) -> (i32, i32, i32, i32) {
    %c0_i32 = arith.constant 0 : i32
    %c0_i32_0 = arith.constant 0 : i32
    %c0_i32_1 = arith.constant 0 : i32
    return %arg0, %arg1, %c0_i32, %c0_i32_0 : i32, i32, i32, i32
  }
  func.func @transform_7(%arg0: i32, %arg1: i32) -> (i32, i32, i32) {
    %c0_i32 = arith.constant 0 : i32
    %c0_i32_0 = arith.constant 0 : i32
    %c0_i32_1 = arith.constant 0 : i32
    return %arg0, %c0_i32, %c0_i32_0 : i32, i32, i32
  }
  func.func @transform_8(%arg0: i32, %arg1: i32) -> (i32, i32, i32) {
    %c0_i32 = arith.constant 0 : i32
    %c0_i32_0 = arith.constant 0 : i32
    %c0_i32_1 = arith.constant 0 : i32
    return %arg0, %c0_i32, %c0_i32_0 : i32, i32, i32
  }
}

</mosaic_0001>

<llo_original>
// kernel: tile.8
$region0: #{tile.8}
  #allocation0 [shape = 's32[1]{0}', space=sflag, size = 0x4, scoped, tag = 'scoped memory for tile.8']
  %s0 = inlined_call_operand.vmem [shape: f32[8], index: 0, kind: input, shape index: {}]
  %s1 = inlined_call_operand.vmem [shape: f32[4,8], index: 1, kind: output, shape index: {}]
  // Predicated region
  $region2: #{tile.8} parent=0 // pred_check
    _
  $region3: #{tile.8} parent=0 // pred_check_branch
    %3 = sbr.rel (0) target = $region5
  $region4: #{tile.8} parent=0 // pred_region
    _
  $region5: #{tile.8} parent=0 // pred_fallthru
    _
  %v4 = vld [vmem:[%s0] ss:$0 sm:$0xff]
  %5 = vst [vmem:[%s1] sm:$0xf] %v4

// kernel: tile.9
$region0: #{tile.9}
  %s0 = inlined_call_operand.vmem [shape: f32[4,8], index: 0, kind: input, shape index: {}]
  %s1 = inlined_call_operand.vmem [shape: f32[1,32], index: 1, kind: output, shape index: {}]
  $region1: #{tile.9} parent=0
    #allocation0 [shape = 'u8[4096]{0}', space=vmem, size = 0x1000, scoped, tag = 'scoped mem for output reshape']
    #allocation1 [shape = 'u8[4096]{0}', space=vmem, size = 0x1000, scoped, tag = 'scoped mem for input reshape']
    %s3 = sshllo.u32 0, 4
    %v4 = vld [vmem:[%s0] sm:%s3]
    %5 = vst [vmem:[#allocation1] sm:%s3] %v4
    %v6 = vld [vmem:[#allocation1] sm:$0x1]
    %vm7 = vcmask 64512
    %8 = vst.msk [vmem:[#allocation0] sm:$0x1] %vm7, %v6
    %s9 = scalar_lea.vmem [#allocation1], 3
    %v10 = vld [vmem:[%s9] sm:$0x1]
    %11 = vrot.lane.b32.xlu0 %v10, 24
    %v12 = vpop.permute.xlu0 %11
    %vm13 = vcmask 261312
    %14 = vst.msk [vmem:[#allocation0] sm:$0x1] %vm13, %v12
    %s15 = scalar_lea.vmem [#allocation1], 2
    %v16 = vld [vmem:[%s15] sm:$0x1]
    %17 = vrot.lane.b32.xlu0 %v16, 16
    %v18 = vpop.permute.xlu0 %17
    %vm19 = vcmask 195712
    %20 = vst.msk [vmem:[#allocation0] sm:$0x1] %vm19, %v18
    %s21 = scalar_lea.vmem [#allocation1], 1
    %v22 = vld [vmem:[%s21] sm:$0x1]
    %23 = vrot.lane.b32.xlu0 %v22, 8
    %v24 = vpop.permute.xlu0 %23
    %vm25 = vcmask 130112
    %26 = vst.msk [vmem:[#allocation0] sm:$0x1] %vm25, %v24
    %s28 = sshllo.u32 0, 1
    %v30 = vld [vmem:[#allocation0] sm:%s28]
    %s31 = sshllo.u32 0, 1
    %32 = vst [vmem:[%s1] sm:%s31] %v30

// kernel: unet_expansive_block.4
$region0: #{unet_expansive_block.4}
  #allocation0 [shape = 'u32[]', space=smem, size = 0x4, offset = 0x4, fixed_abs, tag = 'smem constant byte address 0x4 - core index']
  #allocation1 [shape = 'u32[144,128]{1,0:T(1,128)}', space=vmem, size = 0x12000, scoped, tag = 'internal scratch']
  %s0 = inlined_call_operand.vmem [shape: bf16[2,8,8,4], index: 0, kind: input, shape index: {}]
  %s1 = inlined_call_operand.vmem [shape: bf16[2,8,8,4], index: 1, kind: input, shape index: {}]
  %s2 = inlined_call_operand.vmem [shape: bf16[4,32], index: 2, kind: input, shape index: {}]
  %s3 = inlined_call_operand.vmem [shape: bf16[4,32], index: 3, kind: input, shape index: {}]
  %s4 = inlined_call_operand.vmem [shape: f32[1,32], index: 4, kind: input, shape index: {}]
  %s5 = inlined_call_operand.vmem [shape: bf16[2,8,8,32], index: 5, kind: output, shape index: {}]
  %s6 = sld [smem:[#allocation0]]
  $region53: #{unet_expansive_block.4} parent=0
    _
  %s8 = ssub.s32 1, %s6
  %s9 = scalar_select 0, %s8, %s6
  loop: start=0, step=1, limit=4
  $region2: #{unet_expansive_block.4} parent=0 // loop_pre_header
    _
  $region3: #{unet_expansive_block.4} parent=0 // loop_header
    %s11 = sphi 0, %s15
    %p12 = scmp.ge.s32.totalorder %s11, 4
    %s18 = sphi 0, %s30
    %s19 = sphi 0, %s26
    %s20 = sphi 0, %s18
    %s21 = sphi 0, %s19
    %s22 = sphi 0, %s20
    %s23 = sphi 0, %s21
    %s35 = sphi 0, %s37
    %s38 = sphi 0, %s35
    %s39 = sphi 0, %s38
    %s55 = sphi 0, %s39
    %s63 = sphi 0, %s65
    %s66 = sphi 0, %s63
    %s67 = sphi 0, %s66
    %s83 = sphi 0, %s67
    %s87 = sphi 0, %s87
    %s89 = sphi 0, %s87
    %s90 = sphi 0, %s89
    %s104 = sphi 0, %s90
    %s108 = sphi 0, %s108
    %s110 = sphi 0, %s108
    %s111 = sphi 0, %s110
    %s125 = sphi 0, %s111
    %s129 = sphi 0, %s129
    %s131 = sphi 0, %s129
    %s132 = sphi 0, %s131
    %s146 = sphi 0, %s132
    %s154 = sphi 0, %s156
    %s157 = sphi 0, %s154
    %s158 = sphi 0, %s157
    %s174 = sphi 0, %s158
  $region4: #{unet_expansive_block.4} parent=0 // loop_header_branch
    %14 = sbr.rel (%p12) target = $region8
  $region5: #{unet_expansive_block.4} parent=0 // loop_body
    %s16 = ssub.s32 %s11, 1
    %s17 = ssub.s32 %s11, 2
    %s24 = sadd.s32 1, %s19
    %p25 = scmp.ge.s32.totalorder %s24, 1
    %s26 = scalar_select %p25, 0, %s24
    %s27 = sadd.s32 1, %s18
    %s28 = scalar_select %p25, %s27, %s18
    %p29 = scmp.ge.s32.totalorder %s28, 2
    %s30 = scalar_select %p29, 0, %s28
    %s31 = ssub.s32 %s18, %s30
    %s32 = ssub.s32 %s19, %s26
    %s33 = sor.u32 %s31, %s32
    %p34 = scmp.eq.s32.totalorder %s33, 0
    %s36 = sadd.s32 %s35, 1
    %s37 = scalar_select %p34, %s35, %s36
    %p40 = pneg %p34
    %p41 = scmp.eq.s32.totalorder %s11, 1
    %p42 = por %p40, %p41
    %p43 = scmp.ne.s32.totalorder %s35, %s38
    %p44 = scmp.eq.s32.totalorder %s11, 0
    %p45 = por %p43, %p44
    %p46 = scmp.ne.s32.totalorder %s35, %s38
    %p47 = scmp.eq.s32.totalorder %s16, 1
    %p48 = por %p46, %p47
    %p49 = scmp.ne.s32.totalorder %s38, %s39
    %p50 = scmp.eq.s32.totalorder %s16, 0
    %p51 = por %p49, %p50
    %p52 = scmp.ne.s32.totalorder %s38, %s39
    %p53 = scmp.eq.s32.totalorder %s17, 1
    %p54 = por %p52, %p53
    %p56 = scmp.ne.s32.totalorder %s39, %s55
    %p57 = scmp.eq.s32.totalorder %s17, 0
    %p58 = por %p56, %p57
    %s59 = ssub.s32 %s18, %s30
    %s60 = ssub.s32 %s19, %s26
    %s61 = sor.u32 %s59, %s60
    %p62 = scmp.eq.s32.totalorder %s61, 0
    %s64 = sadd.s32 %s63, 1
    %s65 = scalar_select %p62, %s63, %s64
    %p68 = pneg %p62
    %p69 = scmp.eq.s32.totalorder %s11, 1
    %p70 = por %p68, %p69
    %p71 = scmp.ne.s32.totalorder %s63, %s66
    %p72 = scmp.eq.s32.totalorder %s11, 0
    %p73 = por %p71, %p72
    %p74 = scmp.ne.s32.totalorder %s63, %s66
    %p75 = scmp.eq.s32.totalorder %s16, 1
    %p76 = por %p74, %p75
    %p77 = scmp.ne.s32.totalorder %s66, %s67
    %p78 = scmp.eq.s32.totalorder %s16, 0
    %p79 = por %p77, %p78
    %p80 = scmp.ne.s32.totalorder %s66, %s67
    %p81 = scmp.eq.s32.totalorder %s17, 1
    %p82 = por %p80, %p81
    %p84 = scmp.ne.s32.totalorder %s67, %s83
    %p85 = scmp.eq.s32.totalorder %s17, 0
    %p86 = por %p84, %p85
    %s88 = sadd.s32 %s87, 1
    %p91 = scmp.eq.s32.totalorder %s11, 1
    %p92 = scmp.ne.s32.totalorder %s87, %s89
    %p93 = scmp.eq.s32.totalorder %s11, 0
    %p94 = por %p92, %p93
    %p95 = scmp.ne.s32.totalorder %s87, %s89
    %p96 = scmp.eq.s32.totalorder %s16, 1
    %p97 = por %p95, %p96
    %p98 = scmp.ne.s32.totalorder %s89, %s90
    %p99 = scmp.eq.s32.totalorder %s16, 0
    %p100 = por %p98, %p99
    %p101 = scmp.ne.s32.totalorder %s89, %s90
    %p102 = scmp.eq.s32.totalorder %s17, 1
    %p103 = por %p101, %p102
    %p105 = scmp.ne.s32.totalorder %s90, %s104
    %p106 = scmp.eq.s32.totalorder %s17, 0
    %p107 = por %p105, %p106
    %s109 = sadd.s32 %s108, 1
    %p112 = scmp.eq.s32.totalorder %s11, 1
    %p113 = scmp.ne.s32.totalorder %s108, %s110
    %p114 = scmp.eq.s32.totalorder %s11, 0
    %p115 = por %p113, %p114
    %p116 = scmp.ne.s32.totalorder %s108, %s110
    %p117 = scmp.eq.s32.totalorder %s16, 1
    %p118 = por %p116, %p117
    %p119 = scmp.ne.s32.totalorder %s110, %s111
    %p120 = scmp.eq.s32.totalorder %s16, 0
    %p121 = por %p119, %p120
    %p122 = scmp.ne.s32.totalorder %s110, %s111
    %p123 = scmp.eq.s32.totalorder %s17, 1
    %p124 = por %p122, %p123
    %p126 = scmp.ne.s32.totalorder %s111, %s125
    %p127 = scmp.eq.s32.totalorder %s17, 0
    %p128 = por %p126, %p127
    %s130 = sadd.s32 %s129, 1
    %p133 = scmp.eq.s32.totalorder %s11, 1
    %p134 = scmp.ne.s32.totalorder %s129, %s131
    %p135 = scmp.eq.s32.totalorder %s11, 0
    %p136 = por %p134, %p135
    %p137 = scmp.ne.s32.totalorder %s129, %s131
    %p138 = scmp.eq.s32.totalorder %s16, 1
    %p139 = por %p137, %p138
    %p140 = scmp.ne.s32.totalorder %s131, %s132
    %p141 = scmp.eq.s32.totalorder %s16, 0
    %p142 = por %p140, %p141
    %p143 = scmp.ne.s32.totalorder %s131, %s132
    %p144 = scmp.eq.s32.totalorder %s17, 1
    %p145 = por %p143, %p144
    %p147 = scmp.ne.s32.totalorder %s132, %s146
    %p148 = scmp.eq.s32.totalorder %s17, 0
    %p149 = por %p147, %p148
    %s150 = ssub.s32 %s18, %s30
    %s151 = ssub.s32 %s19, %s26
    %s152 = sor.u32 %s150, %s151
    %p153 = scmp.eq.s32.totalorder %s152, 0
    %s155 = sadd.s32 %s154, 1
    %s156 = scalar_select %p153, %s154, %s155
    %p159 = pneg %p153
    %p160 = scmp.eq.s32.totalorder %s11, 1
    %p161 = por %p159, %p160
    %p162 = scmp.ne.s32.totalorder %s154, %s157
    %p163 = scmp.eq.s32.totalorder %s11, 0
    %p164 = por %p162, %p163
    %p165 = scmp.ne.s32.totalorder %s154, %s157
    %p166 = scmp.eq.s32.totalorder %s16, 1
    %p167 = por %p165, %p166
    %p168 = scmp.ne.s32.totalorder %s157, %s158
    %p169 = scmp.eq.s32.totalorder %s16, 0
    %p170 = por %p168, %p169
    %p171 = scmp.ne.s32.totalorder %s157, %s158
    %p172 = scmp.eq.s32.totalorder %s17, 1
    %p173 = por %p171, %p172
    %p175 = scmp.ne.s32.totalorder %s158, %s174
    %p176 = scmp.eq.s32.totalorder %s17, 0
    %p177 = por %p175, %p176
    %p178 = scmp.le.s32.totalorder 1, %s11
    %p179 = scmp.lt.s32.totalorder %s11, 3
    %p180 = pnand %p178, %p179
    %p181 = pneg %p180
    // Predicated region
    $region9: #{unet_expansive_block.4} parent=5 // pred_check
      _
    $region10: #{unet_expansive_block.4} parent=5 // pred_check_branch
      %183 = sbr.rel (%p180) target = $region12
    $region11: #{unet_expansive_block.4} parent=5 // pred_region
      %s184 = ssub.s32 %s11, 1
      // Predicated region
      $region13: #{unet_expansive_block.4} parent=11 // pred_check
        %p185 = pneg %p100
      $region14: #{unet_expansive_block.4} parent=11 // pred_check_branch
        %187 = sbr.rel (%p185) target = $region16
      $region15: #{unet_expansive_block.4} parent=11 // pred_region
        _
      $region16: #{unet_expansive_block.4} parent=11 // pred_fallthru
        _
      // Predicated region
      $region17: #{unet_expansive_block.4} parent=11 // pred_check
        %p188 = pneg %p121
      $region18: #{unet_expansive_block.4} parent=11 // pred_check_branch
        %190 = sbr.rel (%p188) target = $region20
      $region19: #{unet_expansive_block.4} parent=11 // pred_region
        _
      $region20: #{unet_expansive_block.4} parent=11 // pred_fallthru
        _
      // Predicated region
      $region21: #{unet_expansive_block.4} parent=11 // pred_check
        %p191 = pneg %p142
      $region22: #{unet_expansive_block.4} parent=11 // pred_check_branch
        %193 = sbr.rel (%p191) target = $region24
      $region23: #{unet_expansive_block.4} parent=11 // pred_region
        _
      $region24: #{unet_expansive_block.4} parent=11 // pred_fallthru
        _
    $region12: #{unet_expansive_block.4} parent=5 // pred_fallthru
      _
    %p194 = scmp.lt.s32.totalorder %s11, 2
    // Predicated region
    $region25: #{unet_expansive_block.4} parent=5 // pred_check
      %p195 = pneg %p194
    $region26: #{unet_expansive_block.4} parent=5 // pred_check_branch
      %197 = sbr.rel (%p195) target = $region28
    $region27: #{unet_expansive_block.4} parent=5 // pred_region
      // Predicated region
      $region29: #{unet_expansive_block.4} parent=27 // pred_check
        %p198 = pneg %p45
      $region30: #{unet_expansive_block.4} parent=27 // pred_check_branch
        %200 = sbr.rel (%p198) target = $region32
      $region31: #{unet_expansive_block.4} parent=27 // pred_region
        %s201 = smul.u32 8, %s19
        %p202 = scmp.lt.s32.totalorder %s18, 1
        %s203 = scalar_select %p202, %s18, 1
        %p204 = scmp.lt.s32.totalorder %s201, 7
        %s205 = scalar_select %p204, %s201, 7
        %s206 = smul.addr %s203, 8
        %s207 = sadd.s32 %s205, %s206
        %s208 = smul.addr %s207, 4
        %s209 = scalar_lea.vmem %s0, %s208
        %s210 = smul.u32 8, %s19
      $region32: #{unet_expansive_block.4} parent=27 // pred_fallthru
        _
      // Predicated region
      $region33: #{unet_expansive_block.4} parent=27 // pred_check
        %p211 = pneg %p73
      $region34: #{unet_expansive_block.4} parent=27 // pred_check_branch
        %213 = sbr.rel (%p211) target = $region36
      $region35: #{unet_expansive_block.4} parent=27 // pred_region
        %s214 = smul.u32 8, %s19
        %p215 = scmp.lt.s32.totalorder %s18, 1
        %s216 = scalar_select %p215, %s18, 1
        %p217 = scmp.lt.s32.totalorder %s214, 7
        %s218 = scalar_select %p217, %s214, 7
        %s219 = smul.addr %s216, 8
        %s220 = sadd.s32 %s218, %s219
        %s221 = smul.addr %s220, 4
        %s222 = scalar_lea.vmem %s1, %s221
        %s223 = smul.u32 8, %s19
      $region36: #{unet_expansive_block.4} parent=27 // pred_fallthru
        _
    $region28: #{unet_expansive_block.4} parent=5 // pred_fallthru
      _
    %p224 = scmp.le.s32.totalorder 1, %s11
    %p225 = scmp.lt.s32.totalorder %s11, 3
    %p226 = pnand %p224, %p225
    %p227 = pneg %p226
    // Predicated region
    $region37: #{unet_expansive_block.4} parent=5 // pred_check
      _
    $region38: #{unet_expansive_block.4} parent=5 // pred_check_branch
      %229 = sbr.rel (%p226) target = $region40
    $region39: #{unet_expansive_block.4} parent=5 // pred_region
      %s230 = ssub.s32 %s11, 1
      %s231 = smul.u32 8, %s21
      %p232 = scmp.lt.s32.totalorder %s20, 1
      %s233 = scalar_select %p232, %s20, 1
      %p234 = scmp.lt.s32.totalorder %s231, 7
      %s235 = scalar_select %p234, %s231, 7
      %s236 = smul.addr %s233, 8
      %s237 = sadd.s32 %s235, %s236
      %s238 = smul.addr %s237, 4
      %s239 = scalar_lea.vmem %s0, %s238
      %p240 = pneg %p51
      %p241 = pneg %p48
      %s242 = smul.u32 8, %s21
      %p243 = scmp.lt.s32.totalorder %s20, 1
      %s244 = scalar_select %p243, %s20, 1
      %p245 = scmp.lt.s32.totalorder %s242, 7
      %s246 = scalar_select %p245, %s242, 7
      %s247 = smul.addr %s244, 8
      %s248 = sadd.s32 %s246, %s247
      %s249 = smul.addr %s248, 4
      %s250 = scalar_lea.vmem %s1, %s249
      %p251 = pneg %p79
      %p252 = pneg %p76
      %p253 = pneg %p100
      %p254 = pneg %p97
      %p255 = pneg %p121
      %p256 = pneg %p118
      %p257 = pneg %p142
      %p258 = pneg %p139
      %p259 = pneg %p170
      %p260 = pneg %p167
      %s261 = smul.u32 8, %s21
      %p262 = scmp.lt.s32.totalorder %s20, 1
      %s263 = scalar_select %p262, %s20, 1
      %p264 = scmp.lt.s32.totalorder %s261, 7
      %s265 = scalar_select %p264, %s261, 7
      %s266 = smul.addr %s263, 8
      %s267 = sadd.s32 %s265, %s266
      %s268 = smul.addr %s267, 4
      %s269 = scalar_lea.vmem %s5, %s268
      %s270 = smul.u32 8, %s21
      %p271 = scmp.lt.s32.totalorder %s20, 1
      %s272 = scalar_select %p271, %s20, 1
      %p273 = scmp.lt.s32.totalorder %s270, 7
      %s274 = scalar_select %p273, %s270, 7
      %s275 = smul.addr %s272, 8
      %s276 = sadd.s32 %s274, %s275
      %s277 = smul.addr %s276, 4
      %s278 = scalar_lea.vmem %s0, %s277
      %s279 = smul.u32 8, %s21
      %s280 = smul.u32 8, %s21
      %p281 = scmp.lt.s32.totalorder %s20, 1
      %s282 = scalar_select %p281, %s20, 1
      %p283 = scmp.lt.s32.totalorder %s280, 7
      %s284 = scalar_select %p283, %s280, 7
      %s285 = smul.addr %s282, 8
      %s286 = sadd.s32 %s284, %s285
      %s287 = smul.addr %s286, 4
      %s288 = scalar_lea.vmem %s1, %s287
      %s289 = smul.u32 8, %s21
      %s290 = smul.u32 8, %s21
      %p291 = scmp.lt.s32.totalorder %s20, 1
      %s292 = scalar_select %p291, %s20, 1
      %p293 = scmp.lt.s32.totalorder %s290, 7
      %s294 = scalar_select %p293, %s290, 7
      %s295 = smul.addr %s292, 8
      %s296 = sadd.s32 %s294, %s295
      %s297 = smul.addr %s296, 4
      %s298 = scalar_lea.vmem %s5, %s297
      %s299 = smul.u32 8, %s21
      %v301 = vld [vmem:[%s278] sm:$0xf]
      %v302 = vld [vmem:[%s278 + $0x4] sm:$0xf]
      %v303 = vld [vmem:[%s278 + $0x8] sm:$0xf]
      %v304 = vld [vmem:[%s278 + $0xc] sm:$0xf]
      %v305 = vld [vmem:[%s278 + $0x10] sm:$0xf]
      %v306 = vld [vmem:[%s278 + $0x14] sm:$0xf]
      %v307 = vld [vmem:[%s278 + $0x18] sm:$0xf]
      %v308 = vld [vmem:[%s278 + $0x1c] sm:$0xf]
      %v309 = vld [vmem:[%s288] sm:$0xf]
      %v310 = vld [vmem:[%s288 + $0x4] sm:$0xf]
      %v311 = vld [vmem:[%s288 + $0x8] sm:$0xf]
      %v312 = vld [vmem:[%s288 + $0xc] sm:$0xf]
      %v313 = vld [vmem:[%s288 + $0x10] sm:$0xf]
      %v314 = vld [vmem:[%s288 + $0x14] sm:$0xf]
      %v315 = vld [vmem:[%s288 + $0x18] sm:$0xf]
      %v316 = vld [vmem:[%s288 + $0x1c] sm:$0xf]
      %v317 = vld [vmem:[%s2] sm:$0x3]
      %v318 = vld [vmem:[%s3] sm:$0x3]
      %v327 = vunpack.c.l.b16 %v309
      %v328 = vunpack.c.l.b16 %v310
      %v329 = vunpack.c.l.b16 %v311
      %v330 = vunpack.c.l.b16 %v312
      %v331 = vunpack.c.l.b16 %v313
      %v332 = vunpack.c.l.b16 %v314
      %v333 = vunpack.c.l.b16 %v315
      %v334 = vunpack.c.l.b16 %v316
      %v335 = vpack.c.b16 %v328, %v327
      %v336 = vpack.c.b16 %v330, %v329
      %v337 = vpack.c.b16 %v332, %v331
      %v338 = vpack.c.b16 %v334, %v333
      %vm339 = vcmask 31744
      %v341 = vsel %vm339, %v335, 0
      %v344 = vsel %vm339, %v336, 0
      %v347 = vsel %vm339, %v337, 0
      %v350 = vsel %vm339, %v338, 0
      %vm352 = vcmask 1041408
      %v354 = vsel %vm352, %v318, 0
      %356 = vmatprep.subr.bf16.mxu0 0
      %357 = vmatpush1.bf16.msra.mxu0 %v354
      %358 = vmatprep.subr.bf16.mxu0 0
      %359 = vmatpush1.bf16.msra.mxu0 0
      %360 = vmatprep.subr.bf16.mxu0 0
      %361 = vmatpush1.bf16.msra.mxu0 0
      %362 = vmatprep.subr.bf16.mxu0 0
      %363 = vmatpush1.bf16.msra.mxu0 0
      %364 = vmatprep.subr.bf16.mxu0 0
      %365 = vmatpush1.bf16.msra.mxu0 0
      %366 = vmatprep.subr.bf16.mxu0 0
      %367 = vmatpush1.bf16.msra.mxu0 0
      %368 = vmatprep.subr.bf16.mxu0 0
      %369 = vmatpush1.bf16.msra.mxu0 0
      %370 = vmatprep.subr.bf16.mxu0 0
      %371 = vmatpush1.bf16.msra.mxu0 0
      %372 = vmatprep.subr.bf16.mxu0 0
      %373 = vmatpush1.bf16.msra.mxu0 0
      %374 = vmatprep.subr.bf16.mxu0 0
      %375 = vmatpush1.bf16.msra.mxu0 0
      %376 = vmatprep.subr.bf16.mxu0 0
      %377 = vmatpush1.bf16.msra.mxu0 0
      %378 = vmatprep.subr.bf16.mxu0 0
      %379 = vmatpush1.bf16.msra.mxu0 0
      %380 = vmatprep.subr.bf16.mxu0 0
      %381 = vmatpush1.bf16.msra.mxu0 0
      %382 = vmatprep.subr.bf16.mxu0 0
      %383 = vmatpush1.bf16.msra.mxu0 0
      %384 = vmatprep.subr.bf16.mxu0 0
      %385 = vmatpush1.bf16.msra.mxu0 0
      %386 = vmatprep.subr.bf16.mxu0 0
      %387 = vmatpush1.bf16.msra.mxu0 0
      %388 = vmatprep.mubr.bf16.mxu0 0
      %389 = vmatmul.mubr.bf16.gmra.mrb[0].mxu0 %v341
      %v390 = vpop.f32.mrb[0].mxu0
      %v391 = vadd.f32 0.0, %v390
      %v392 = vpop.f32.mrb[0].mxu0
      %v393 = vpop.f32.mrb[0].mxu0
      %v394 = vadd.f32 0.0, %v393
      %v395 = vpop.f32.mrb[0].mxu0
      %396 = vmatprep.mubr.bf16.mxu0 0
      %397 = vmatmul.mubr.bf16.gmra.mrb[0].mxu0 %v344
      %v398 = vpop.f32.mrb[0].mxu0
      %v399 = vadd.f32 0.0, %v398
      %v400 = vpop.f32.mrb[0].mxu0
      %v401 = vpop.f32.mrb[0].mxu0
      %v402 = vadd.f32 0.0, %v401
      %v403 = vpop.f32.mrb[0].mxu0
      %404 = vmatprep.mubr.bf16.mxu0 0
      %405 = vmatmul.mubr.bf16.gmra.mrb[0].mxu0 %v347
      %v406 = vpop.f32.mrb[0].mxu0
      %v407 = vadd.f32 0.0, %v406
      %v408 = vpop.f32.mrb[0].mxu0
      %v409 = vpop.f32.mrb[0].mxu0
      %v410 = vadd.f32 0.0, %v409
      %v411 = vpop.f32.mrb[0].mxu0
      %412 = vmatprep.mubr.bf16.mxu0 0
      %413 = vmatmul.mubr.bf16.gmra.mrb[0].mxu0 %v350
      %v414 = vpop.f32.mrb[0].mxu0
      %v415 = vadd.f32 0.0, %v414
      %v416 = vpop.f32.mrb[0].mxu0
      %v417 = vpop.f32.mrb[0].mxu0
      %v418 = vadd.f32 0.0, %v417
      %v419 = vpop.f32.mrb[0].mxu0
      %420 = vdwg.mxu0
      %v429 = vunpack.c.l.b16 %v301
      %v430 = vunpack.c.l.b16 %v302
      %v431 = vunpack.c.l.b16 %v303
      %v432 = vunpack.c.l.b16 %v304
      %v433 = vunpack.c.l.b16 %v305
      %v434 = vunpack.c.l.b16 %v306
      %v435 = vunpack.c.l.b16 %v307
      %v436 = vunpack.c.l.b16 %v308
      %v437 = vpack.c.b16 %v430, %v429
      %v438 = vpack.c.b16 %v432, %v431
      %v439 = vpack.c.b16 %v434, %v433
      %v440 = vpack.c.b16 %v436, %v435
      %v442 = vsel %vm339, %v437, 0
      %v445 = vsel %vm339, %v438, 0
      %v448 = vsel %vm339, %v439, 0
      %v451 = vsel %vm339, %v440, 0
      %v454 = vsel %vm352, %v317, 0
      %456 = vmatprep.subr.bf16.mxu0 0
      %457 = vmatpush1.bf16.msra.mxu0 %v454
      %458 = vmatprep.subr.bf16.mxu0 0
      %459 = vmatpush1.bf16.msra.mxu0 0
      %460 = vmatprep.subr.bf16.mxu0 0
      %461 = vmatpush1.bf16.msra.mxu0 0
      %462 = vmatprep.subr.bf16.mxu0 0
      %463 = vmatpush1.bf16.msra.mxu0 0
      %464 = vmatprep.subr.bf16.mxu0 0
      %465 = vmatpush1.bf16.msra.mxu0 0
      %466 = vmatprep.subr.bf16.mxu0 0
      %467 = vmatpush1.bf16.msra.mxu0 0
      %468 = vmatprep.subr.bf16.mxu0 0
      %469 = vmatpush1.bf16.msra.mxu0 0
      %470 = vmatprep.subr.bf16.mxu0 0
      %471 = vmatpush1.bf16.msra.mxu0 0
      %472 = vmatprep.subr.bf16.mxu0 0
      %473 = vmatpush1.bf16.msra.mxu0 0
      %474 = vmatprep.subr.bf16.mxu0 0
      %475 = vmatpush1.bf16.msra.mxu0 0
      %476 = vmatprep.subr.bf16.mxu0 0
      %477 = vmatpush1.bf16.msra.mxu0 0
      %478 = vmatprep.subr.bf16.mxu0 0
      %479 = vmatpush1.bf16.msra.mxu0 0
      %480 = vmatprep.subr.bf16.mxu0 0
      %481 = vmatpush1.bf16.msra.mxu0 0
      %482 = vmatprep.subr.bf16.mxu0 0
      %483 = vmatpush1.bf16.msra.mxu0 0
      %484 = vmatprep.subr.bf16.mxu0 0
      %485 = vmatpush1.bf16.msra.mxu0 0
      %486 = vmatprep.subr.bf16.mxu0 0
      %487 = vmatpush1.bf16.msra.mxu0 0
      %488 = vmatprep.mubr.bf16.mxu0 0
      %489 = vmatmul.mubr.bf16.gmra.mrb[0].mxu0 %v442
      %v490 = vpop.f32.mrb[0].mxu0
      %v491 = vadd.f32 %v391, %v490
      %v492 = vpop.f32.mrb[0].mxu0
      %v493 = vpop.f32.mrb[0].mxu0
      %v494 = vadd.f32 %v394, %v493
      %v495 = vpop.f32.mrb[0].mxu0
      %496 = vmatprep.mubr.bf16.mxu0 0
      %497 = vmatmul.mubr.bf16.gmra.mrb[0].mxu0 %v445
      %v498 = vpop.f32.mrb[0].mxu0
      %v499 = vadd.f32 %v399, %v498
      %v500 = vpop.f32.mrb[0].mxu0
      %v501 = vpop.f32.mrb[0].mxu0
      %v502 = vadd.f32 %v402, %v501
      %v503 = vpop.f32.mrb[0].mxu0
      %504 = vmatprep.mubr.bf16.mxu0 0
      %505 = vmatmul.mubr.bf16.gmra.mrb[0].mxu0 %v448
      %v506 = vpop.f32.mrb[0].mxu0
      %v507 = vadd.f32 %v407, %v506
      %v508 = vpop.f32.mrb[0].mxu0
      %v509 = vpop.f32.mrb[0].mxu0
      %v510 = vadd.f32 %v410, %v509
      %v511 = vpop.f32.mrb[0].mxu0
      %512 = vmatprep.mubr.bf16.mxu0 0
      %513 = vmatmul.mubr.bf16.gmra.mrb[0].mxu0 %v451
      %v514 = vpop.f32.mrb[0].mxu0
      %v515 = vadd.f32 %v415, %v514
      %v516 = vpop.f32.mrb[0].mxu0
      %v517 = vpop.f32.mrb[0].mxu0
      %v518 = vadd.f32 %v418, %v517
      %v519 = vpop.f32.mrb[0].mxu0
      %520 = vdwg.mxu0
      %v521 = vld [vmem:[%s4] sm:$0x1]
      %v523 = vlaneseq
      %v524 = vshrl.u32 %v523, 7
      %v525 = vsub.s32 0, %v524
      %v526 = vrot.slane %v521, %v525
      %v528 = vadd.f32 %v491, %v526
      %v529 = vadd.f32 %v494, %v526
      %v530 = vadd.f32 %v499, %v526
      %v531 = vadd.f32 %v502, %v526
      %v532 = vadd.f32 %v507, %v526
      %v533 = vadd.f32 %v510, %v526
      %v534 = vadd.f32 %v515, %v526
      %v535 = vadd.f32 %v518, %v526
      %v536 = vpack.c.bf16 %v528, %v528
      %v537 = vpack.c.bf16 %v529, %v529
      %v538 = vpack.c.bf16 %v530, %v530
      %v539 = vpack.c.bf16 %v531, %v531
      %v540 = vpack.c.bf16 %v532, %v532
      %v541 = vpack.c.bf16 %v533, %v533
      %v542 = vpack.c.bf16 %v534, %v534
      %v543 = vpack.c.bf16 %v535, %v535
      %vm544 = vcmask 257024
      %545 = vst.msk [vmem:[%s298] sm:$0xf] %vm544, %v536
      %546 = vst.msk [vmem:[%s298 + $0x4] sm:$0xf] %vm544, %v537
      %547 = vst.msk [vmem:[%s298 + $0x8] sm:$0xf] %vm544, %v538
      %548 = vst.msk [vmem:[%s298 + $0xc] sm:$0xf] %vm544, %v539
      %549 = vst.msk [vmem:[%s298 + $0x10] sm:$0xf] %vm544, %v540
      %550 = vst.msk [vmem:[%s298 + $0x14] sm:$0xf] %vm544, %v541
      %551 = vst.msk [vmem:[%s298 + $0x18] sm:$0xf] %vm544, %v542
      %552 = vst.msk [vmem:[%s298 + $0x1c] sm:$0xf] %vm544, %v543
      %s553 = smul.u32 8, %s21
      %p554 = scmp.lt.s32.totalorder %s20, 1
      %s555 = scalar_select %p554, %s20, 1
      %p556 = scmp.lt.s32.totalorder %s553, 7
      %s557 = scalar_select %p556, %s553, 7
      %s558 = smul.addr %s555, 8
      %s559 = sadd.s32 %s557, %s558
      %s560 = smul.addr %s559, 4
      %s561 = scalar_lea.vmem %s5, %s560
      // Predicated region
      $region41: #{unet_expansive_block.4} parent=39 // pred_check
        %p562 = pneg %p167
      $region42: #{unet_expansive_block.4} parent=39 // pred_check_branch
        %564 = sbr.rel (%p562) target = $region44
      $region43: #{unet_expansive_block.4} parent=39 // pred_region
        %s565 = smul.u32 8, %s21
      $region44: #{unet_expansive_block.4} parent=39 // pred_fallthru
        _
    $region40: #{unet_expansive_block.4} parent=5 // pred_fallthru
      _
    %p566 = scmp.le.s32.totalorder 2, %s11
    // Predicated region
    $region45: #{unet_expansive_block.4} parent=5 // pred_check
      %p567 = pneg %p566
    $region46: #{unet_expansive_block.4} parent=5 // pred_check_branch
      %569 = sbr.rel (%p567) target = $region48
    $region47: #{unet_expansive_block.4} parent=5 // pred_region
      %s570 = ssub.s32 %s11, 2
      // Predicated region
      $region49: #{unet_expansive_block.4} parent=47 // pred_check
        %p571 = pneg %p173
      $region50: #{unet_expansive_block.4} parent=47 // pred_check_branch
        %573 = sbr.rel (%p571) target = $region52
      $region51: #{unet_expansive_block.4} parent=47 // pred_region
        %s574 = smul.u32 8, %s23
        %p575 = scmp.lt.s32.totalorder %s22, 1
        %s576 = scalar_select %p575, %s22, 1
        %p577 = scmp.lt.s32.totalorder %s574, 7
        %s578 = scalar_select %p577, %s574, 7
        %s579 = smul.addr %s576, 8
        %s580 = sadd.s32 %s578, %s579
        %s581 = smul.addr %s580, 4
        %s582 = scalar_lea.vmem %s5, %s581
      $region52: #{unet_expansive_block.4} parent=47 // pred_fallthru
        _
    $region48: #{unet_expansive_block.4} parent=5 // pred_fallthru
      _
  $region6: #{unet_expansive_block.4} parent=0 // loop_footer
    %s15 = sadd.s32 1, %s11
  $region7: #{unet_expansive_block.4} parent=0 // loop_footer_branch
    %10 = sbr.rel target = $region3
  $region8: #{unet_expansive_block.4} parent=0 // loop_exit
    _

// kernel: unet_expansive_block.7
$region0: #{unet_expansive_block.7}
  #allocation0 [shape = 'u32[]', space=smem, size = 0x4, offset = 0x4, fixed_abs, tag = 'smem constant byte address 0x4 - core index']
  #allocation1 [shape = 'u32[144,128]{1,0:T(1,128)}', space=vmem, size = 0x12000, scoped, tag = 'internal scratch']
  %s0 = inlined_call_operand.vmem [shape: bf16[2,16,18,8], index: 0, kind: input, shape index: {}]
  %s1 = inlined_call_operand.vmem [shape: f32[1,8], index: 1, kind: input, shape index: {}]
  %s2 = inlined_call_operand.vmem [shape: f32[1,8], index: 2, kind: input, shape index: {}]
  %s3 = inlined_call_operand.vmem [shape: f32[2,16,16,8], index: 3, kind: output, shape index: {}]
  %s4 = sld [smem:[#allocation0]]
  $region45: #{unet_expansive_block.7} parent=0
    _
  %s6 = ssub.s32 1, %s4
  %s7 = scalar_select 0, %s6, %s4
  loop: start=0, step=1, limit=6
  $region2: #{unet_expansive_block.7} parent=0 // loop_pre_header
    _
  $region3: #{unet_expansive_block.7} parent=0 // loop_header
    %s9 = sphi 0, %s13
    %p10 = scmp.ge.s32.totalorder %s9, 6
    %s16 = sphi 0, %s28
    %s17 = sphi 0, %s24
    %s18 = sphi 0, %s16
    %s19 = sphi 0, %s17
    %s20 = sphi 0, %s18
    %s21 = sphi 0, %s19
    %s33 = sphi 0, %s35
    %s36 = sphi 0, %s33
    %s37 = sphi 0, %s36
    %s53 = sphi 0, %s37
    %s57 = sphi 0, %s57
    %s59 = sphi 0, %s57
    %s60 = sphi 0, %s59
    %s74 = sphi 0, %s60
    %s78 = sphi 0, %s78
    %s80 = sphi 0, %s78
    %s81 = sphi 0, %s80
    %s95 = sphi 0, %s81
    %s103 = sphi 0, %s105
    %s106 = sphi 0, %s103
    %s107 = sphi 0, %s106
    %s123 = sphi 0, %s107
  $region4: #{unet_expansive_block.7} parent=0 // loop_header_branch
    %12 = sbr.rel (%p10) target = $region8
  $region5: #{unet_expansive_block.7} parent=0 // loop_body
    %s14 = ssub.s32 %s9, 1
    %s15 = ssub.s32 %s9, 2
    %s22 = sadd.s32 1, %s17
    %p23 = scmp.ge.s32.totalorder %s22, 2
    %s24 = scalar_select %p23, 0, %s22
    %s25 = sadd.s32 1, %s16
    %s26 = scalar_select %p23, %s25, %s16
    %p27 = scmp.ge.s32.totalorder %s26, 2
    %s28 = scalar_select %p27, 0, %s26
    %s29 = ssub.s32 %s16, %s28
    %s30 = ssub.s32 %s17, %s24
    %s31 = sor.u32 %s29, %s30
    %p32 = scmp.eq.s32.totalorder %s31, 0
    %s34 = sadd.s32 %s33, 1
    %s35 = scalar_select %p32, %s33, %s34
    %p38 = pneg %p32
    %p39 = scmp.eq.s32.totalorder %s9, 3
    %p40 = por %p38, %p39
    %p41 = scmp.ne.s32.totalorder %s33, %s36
    %p42 = scmp.eq.s32.totalorder %s9, 0
    %p43 = por %p41, %p42
    %p44 = scmp.ne.s32.totalorder %s33, %s36
    %p45 = scmp.eq.s32.totalorder %s14, 3
    %p46 = por %p44, %p45
    %p47 = scmp.ne.s32.totalorder %s36, %s37
    %p48 = scmp.eq.s32.totalorder %s14, 0
    %p49 = por %p47, %p48
    %p50 = scmp.ne.s32.totalorder %s36, %s37
    %p51 = scmp.eq.s32.totalorder %s15, 3
    %p52 = por %p50, %p51
    %p54 = scmp.ne.s32.totalorder %s37, %s53
    %p55 = scmp.eq.s32.totalorder %s15, 0
    %p56 = por %p54, %p55
    %s58 = sadd.s32 %s57, 1
    %p61 = scmp.eq.s32.totalorder %s9, 3
    %p62 = scmp.ne.s32.totalorder %s57, %s59
    %p63 = scmp.eq.s32.totalorder %s9, 0
    %p64 = por %p62, %p63
    %p65 = scmp.ne.s32.totalorder %s57, %s59
    %p66 = scmp.eq.s32.totalorder %s14, 3
    %p67 = por %p65, %p66
    %p68 = scmp.ne.s32.totalorder %s59, %s60
    %p69 = scmp.eq.s32.totalorder %s14, 0
    %p70 = por %p68, %p69
    %p71 = scmp.ne.s32.totalorder %s59, %s60
    %p72 = scmp.eq.s32.totalorder %s15, 3
    %p73 = por %p71, %p72
    %p75 = scmp.ne.s32.totalorder %s60, %s74
    %p76 = scmp.eq.s32.totalorder %s15, 0
    %p77 = por %p75, %p76
    %s79 = sadd.s32 %s78, 1
    %p82 = scmp.eq.s32.totalorder %s9, 3
    %p83 = scmp.ne.s32.totalorder %s78, %s80
    %p84 = scmp.eq.s32.totalorder %s9, 0
    %p85 = por %p83, %p84
    %p86 = scmp.ne.s32.totalorder %s78, %s80
    %p87 = scmp.eq.s32.totalorder %s14, 3
    %p88 = por %p86, %p87
    %p89 = scmp.ne.s32.totalorder %s80, %s81
    %p90 = scmp.eq.s32.totalorder %s14, 0
    %p91 = por %p89, %p90
    %p92 = scmp.ne.s32.totalorder %s80, %s81
    %p93 = scmp.eq.s32.totalorder %s15, 3
    %p94 = por %p92, %p93
    %p96 = scmp.ne.s32.totalorder %s81, %s95
    %p97 = scmp.eq.s32.totalorder %s15, 0
    %p98 = por %p96, %p97
    %s99 = ssub.s32 %s16, %s28
    %s100 = ssub.s32 %s17, %s24
    %s101 = sor.u32 %s99, %s100
    %p102 = scmp.eq.s32.totalorder %s101, 0
    %s104 = sadd.s32 %s103, 1
    %s105 = scalar_select %p102, %s103, %s104
    %p108 = pneg %p102
    %p109 = scmp.eq.s32.totalorder %s9, 3
    %p110 = por %p108, %p109
    %p111 = scmp.ne.s32.totalorder %s103, %s106
    %p112 = scmp.eq.s32.totalorder %s9, 0
    %p113 = por %p111, %p112
    %p114 = scmp.ne.s32.totalorder %s103, %s106
    %p115 = scmp.eq.s32.totalorder %s14, 3
    %p116 = por %p114, %p115
    %p117 = scmp.ne.s32.totalorder %s106, %s107
    %p118 = scmp.eq.s32.totalorder %s14, 0
    %p119 = por %p117, %p118
    %p120 = scmp.ne.s32.totalorder %s106, %s107
    %p121 = scmp.eq.s32.totalorder %s15, 3
    %p122 = por %p120, %p121
    %p124 = scmp.ne.s32.totalorder %s107, %s123
    %p125 = scmp.eq.s32.totalorder %s15, 0
    %p126 = por %p124, %p125
    %p127 = scmp.le.s32.totalorder 1, %s9
    %p128 = scmp.lt.s32.totalorder %s9, 5
    %p129 = pnand %p127, %p128
    %p130 = pneg %p129
    // Predicated region
    $region9: #{unet_expansive_block.7} parent=5 // pred_check
      _
    $region10: #{unet_expansive_block.7} parent=5 // pred_check_branch
      %132 = sbr.rel (%p129) target = $region12
    $region11: #{unet_expansive_block.7} parent=5 // pred_region
      %s133 = ssub.s32 %s9, 1
      // Predicated region
      $region13: #{unet_expansive_block.7} parent=11 // pred_check
        %p134 = pneg %p70
      $region14: #{unet_expansive_block.7} parent=11 // pred_check_branch
        %136 = sbr.rel (%p134) target = $region16
      $region15: #{unet_expansive_block.7} parent=11 // pred_region
        _
      $region16: #{unet_expansive_block.7} parent=11 // pred_fallthru
        _
      // Predicated region
      $region17: #{unet_expansive_block.7} parent=11 // pred_check
        %p137 = pneg %p91
      $region18: #{unet_expansive_block.7} parent=11 // pred_check_branch
        %139 = sbr.rel (%p137) target = $region20
      $region19: #{unet_expansive_block.7} parent=11 // pred_region
        _
      $region20: #{unet_expansive_block.7} parent=11 // pred_fallthru
        _
    $region12: #{unet_expansive_block.7} parent=5 // pred_fallthru
      _
    %p140 = scmp.lt.s32.totalorder %s9, 4
    // Predicated region
    $region21: #{unet_expansive_block.7} parent=5 // pred_check
      %p141 = pneg %p140
    $region22: #{unet_expansive_block.7} parent=5 // pred_check_branch
      %143 = sbr.rel (%p141) target = $region24
    $region23: #{unet_expansive_block.7} parent=5 // pred_region
      // Predicated region
      $region25: #{unet_expansive_block.7} parent=23 // pred_check
        %p144 = pneg %p43
      $region26: #{unet_expansive_block.7} parent=23 // pred_check_branch
        %146 = sbr.rel (%p144) target = $region28
      $region27: #{unet_expansive_block.7} parent=23 // pred_region
        %s147 = smul.u32 8, %s17
        %p148 = scmp.lt.s32.totalorder %s16, 1
        %s149 = scalar_select %p148, %s16, 1
        %p150 = scmp.lt.s32.totalorder %s147, 15
        %s151 = scalar_select %p150, %s147, 15
        %s152 = smul.addr %s151, 3
        %s153 = smul.addr %s149, 48
        %s154 = sadd.s32 %s152, %s153
        %s155 = smul.addr %s154, 4
        %s156 = scalar_lea.vmem %s0, %s155
        %s157 = smul.u32 8, %s17
      $region28: #{unet_expansive_block.7} parent=23 // pred_fallthru
        _
    $region24: #{unet_expansive_block.7} parent=5 // pred_fallthru
      _
    %p158 = scmp.le.s32.totalorder 1, %s9
    %p159 = scmp.lt.s32.totalorder %s9, 5
    %p160 = pnand %p158, %p159
    %p161 = pneg %p160
    // Predicated region
    $region29: #{unet_expansive_block.7} parent=5 // pred_check
      _
    $region30: #{unet_expansive_block.7} parent=5 // pred_check_branch
      %163 = sbr.rel (%p160) target = $region32
    $region31: #{unet_expansive_block.7} parent=5 // pred_region
      %s164 = ssub.s32 %s9, 1
      %s165 = smul.u32 8, %s19
      %p166 = scmp.lt.s32.totalorder %s18, 1
      %s167 = scalar_select %p166, %s18, 1
      %p168 = scmp.lt.s32.totalorder %s165, 15
      %s169 = scalar_select %p168, %s165, 15
      %s170 = smul.addr %s169, 3
      %s171 = smul.addr %s167, 48
      %s172 = sadd.s32 %s170, %s171
      %s173 = smul.addr %s172, 4
      %s174 = scalar_lea.vmem %s0, %s173
      %p175 = pneg %p49
      %p176 = pneg %p46
      %p177 = pneg %p70
      %p178 = pneg %p67
      %p179 = pneg %p91
      %p180 = pneg %p88
      %p181 = pneg %p119
      %p182 = pneg %p116
      %s183 = smul.u32 8, %s19
      %p184 = scmp.lt.s32.totalorder %s18, 1
      %s185 = scalar_select %p184, %s18, 1
      %p186 = scmp.lt.s32.totalorder %s183, 15
      %s187 = scalar_select %p186, %s183, 15
      %s188 = smul.addr %s187, 2
      %s189 = smul.addr %s185, 32
      %s190 = sadd.s32 %s188, %s189
      %s191 = smul.addr %s190, 8
      %s192 = scalar_lea.vmem %s3, %s191
      %s193 = smul.u32 8, %s19
      %p194 = scmp.lt.s32.totalorder %s18, 1
      %s195 = scalar_select %p194, %s18, 1
      %p196 = scmp.lt.s32.totalorder %s193, 15
      %s197 = scalar_select %p196, %s193, 15
      %s198 = smul.addr %s197, 3
      %s199 = smul.addr %s195, 48
      %s200 = sadd.s32 %s198, %s199
      %s201 = smul.addr %s200, 4
      %s202 = scalar_lea.vmem %s0, %s201
      %s203 = smul.u32 8, %s19
      %s204 = smul.u32 8, %s19
      %p205 = scmp.lt.s32.totalorder %s18, 1
      %s206 = scalar_select %p205, %s18, 1
      %p207 = scmp.lt.s32.totalorder %s204, 15
      %s208 = scalar_select %p207, %s204, 15
      %s209 = smul.addr %s208, 2
      %s210 = smul.addr %s206, 32
      %s211 = sadd.s32 %s209, %s210
      %s212 = smul.addr %s211, 8
      %s213 = scalar_lea.vmem %s3, %s212
      %s214 = smul.u32 8, %s19
      %v215 = vld [vmem:[%s202] sm:$0xf]
      %v216 = vld [vmem:[%s202 + $0x4] sm:$0xf]
      %v217 = vld [vmem:[%s202 + $0x8] sm:$0x1]
      %v218 = vld [vmem:[%s202 + $0xc] sm:$0xf]
      %v219 = vld [vmem:[%s202 + $0x10] sm:$0xf]
      %v220 = vld [vmem:[%s202 + $0x14] sm:$0x1]
      %v221 = vld [vmem:[%s202 + $0x18] sm:$0xf]
      %v222 = vld [vmem:[%s202 + $0x1c] sm:$0xf]
      %v223 = vld [vmem:[%s202 + $0x20] sm:$0x1]
      %v224 = vld [vmem:[%s202 + $0x24] sm:$0xf]
      %v225 = vld [vmem:[%s202 + $0x28] sm:$0xf]
      %v226 = vld [vmem:[%s202 + $0x2c] sm:$0x1]
      %v227 = vld [vmem:[%s202 + $0x30] sm:$0xf]
      %v228 = vld [vmem:[%s202 + $0x34] sm:$0xf]
      %v229 = vld [vmem:[%s202 + $0x38] sm:$0x1]
      %v230 = vld [vmem:[%s202 + $0x3c] sm:$0xf]
      %v231 = vld [vmem:[%s202 + $0x40] sm:$0xf]
      %v232 = vld [vmem:[%s202 + $0x44] sm:$0x1]
      %v233 = vld [vmem:[%s202 + $0x48] sm:$0xf]
      %v234 = vld [vmem:[%s202 + $0x4c] sm:$0xf]
      %v235 = vld [vmem:[%s202 + $0x50] sm:$0x1]
      %v236 = vld [vmem:[%s202 + $0x54] sm:$0xf]
      %v237 = vld [vmem:[%s202 + $0x58] sm:$0xf]
      %v238 = vld [vmem:[%s202 + $0x5c] sm:$0x1]
      %v239 = vunpack.c.l.bf16 %v215
      %v240 = vunpack.c.l.bf16 %v216
      %v241 = vunpack.c.l.bf16 %v217
      %v242 = vunpack.c.l.bf16 %v218
      %v243 = vunpack.c.l.bf16 %v219
      %v244 = vunpack.c.l.bf16 %v220
      %v245 = vunpack.c.l.bf16 %v221
      %v246 = vunpack.c.l.bf16 %v222
      %v247 = vunpack.c.l.bf16 %v223
      %v248 = vunpack.c.l.bf16 %v224
      %v249 = vunpack.c.l.bf16 %v225
      %v250 = vunpack.c.l.bf16 %v226
      %v251 = vunpack.c.l.bf16 %v227
      %v252 = vunpack.c.l.bf16 %v228
      %v253 = vunpack.c.l.bf16 %v229
      %v254 = vunpack.c.l.bf16 %v230
      %v255 = vunpack.c.l.bf16 %v231
      %v256 = vunpack.c.l.bf16 %v232
      %v257 = vunpack.c.l.bf16 %v233
      %v258 = vunpack.c.l.bf16 %v234
      %v259 = vunpack.c.l.bf16 %v235
      %v260 = vunpack.c.l.bf16 %v236
      %v261 = vunpack.c.l.bf16 %v237
      %v262 = vunpack.c.l.bf16 %v238
      %v263 = vld [vmem:[%s1] sm:$0x1]
      %v265 = vlaneseq
      %v266 = vshrl.u32 %v265, 7
      %v267 = vsub.s32 0, %v266
      %v268 = vrot.slane %v263, %v267
      %v270 = vmul.f32 %v239, %v268
      %v271 = vmul.f32 %v240, %v268
      %v272 = vmul.f32 %v241, %v268
      %v273 = vmul.f32 %v242, %v268
      %v274 = vmul.f32 %v243, %v268
      %v275 = vmul.f32 %v244, %v268
      %v276 = vmul.f32 %v245, %v268
      %v277 = vmul.f32 %v246, %v268
      %v278 = vmul.f32 %v247, %v268
      %v279 = vmul.f32 %v248, %v268
      %v280 = vmul.f32 %v249, %v268
      %v281 = vmul.f32 %v250, %v268
      %v282 = vmul.f32 %v251, %v268
      %v283 = vmul.f32 %v252, %v268
      %v284 = vmul.f32 %v253, %v268
      %v285 = vmul.f32 %v254, %v268
      %v286 = vmul.f32 %v255, %v268
      %v287 = vmul.f32 %v256, %v268
      %v288 = vmul.f32 %v257, %v268
      %v289 = vmul.f32 %v258, %v268
      %v290 = vmul.f32 %v259, %v268
      %v291 = vmul.f32 %v260, %v268
      %v292 = vmul.f32 %v261, %v268
      %v293 = vmul.f32 %v262, %v268
      %v294 = vld [vmem:[%s2] sm:$0x1]
      %v296 = vlaneseq
      %v297 = vshrl.u32 %v296, 7
      %v298 = vsub.s32 0, %v297
      %v299 = vrot.slane %v294, %v298
      %v301 = vadd.f32 %v270, %v299
      %v302 = vadd.f32 %v271, %v299
      %v303 = vadd.f32 %v272, %v299
      %v304 = vadd.f32 %v273, %v299
      %v305 = vadd.f32 %v274, %v299
      %v306 = vadd.f32 %v275, %v299
      %v307 = vadd.f32 %v276, %v299
      %v308 = vadd.f32 %v277, %v299
      %v309 = vadd.f32 %v278, %v299
      %v310 = vadd.f32 %v279, %v299
      %v311 = vadd.f32 %v280, %v299
      %v312 = vadd.f32 %v281, %v299
      %v313 = vadd.f32 %v282, %v299
      %v314 = vadd.f32 %v283, %v299
      %v315 = vadd.f32 %v284, %v299
      %v316 = vadd.f32 %v285, %v299
      %v317 = vadd.f32 %v286, %v299
      %v318 = vadd.f32 %v287, %v299
      %v319 = vadd.f32 %v288, %v299
      %v320 = vadd.f32 %v289, %v299
      %v321 = vadd.f32 %v290, %v299
      %v322 = vadd.f32 %v291, %v299
      %v323 = vadd.f32 %v292, %v299
      %v324 = vadd.f32 %v293, %v299
      %v325 = vmax.f32 %v301, 0.0
      %v326 = vmax.f32 %v302, 0.0
      %v327 = vmax.f32 %v303, 0.0
      %v328 = vmax.f32 %v304, 0.0
      %v329 = vmax.f32 %v305, 0.0
      %v330 = vmax.f32 %v306, 0.0
      %v331 = vmax.f32 %v307, 0.0
      %v332 = vmax.f32 %v308, 0.0
      %v333 = vmax.f32 %v309, 0.0
      %v334 = vmax.f32 %v310, 0.0
      %v335 = vmax.f32 %v311, 0.0
      %v336 = vmax.f32 %v312, 0.0
      %v337 = vmax.f32 %v313, 0.0
      %v338 = vmax.f32 %v314, 0.0
      %v339 = vmax.f32 %v315, 0.0
      %v340 = vmax.f32 %v316, 0.0
      %v341 = vmax.f32 %v317, 0.0
      %v342 = vmax.f32 %v318, 0.0
      %v343 = vmax.f32 %v319, 0.0
      %v344 = vmax.f32 %v320, 0.0
      %v345 = vmax.f32 %v321, 0.0
      %v346 = vmax.f32 %v322, 0.0
      %v347 = vmax.f32 %v323, 0.0
      %v348 = vmax.f32 %v324, 0.0
      %vm349 = vcmask 64513
      %350 = vst.msk [vmem:[%s213 - $0x1] sm:$0xfe] %vm349, %v325
      %vm351 = vcmask 64512
      %352 = vst.msk [vmem:[%s213 + $0x7] sm:$0xff] %vm351, %v326
      %vm353 = vcmask 57344
      %354 = vst.msk [vmem:[%s213 + $0xf] sm:$0x1] %vm353, %v327
      %355 = vst.msk [vmem:[%s213 + $0xf] sm:$0xfe] %vm349, %v328
      %356 = vst.msk [vmem:[%s213 + $0x17] sm:$0xff] %vm351, %v329
      %357 = vst.msk [vmem:[%s213 + $0x1f] sm:$0x1] %vm353, %v330
      %358 = vst.msk [vmem:[%s213 + $0x1f] sm:$0xfe] %vm349, %v331
      %359 = vst.msk [vmem:[%s213 + $0x27] sm:$0xff] %vm351, %v332
      %360 = vst.msk [vmem:[%s213 + $0x2f] sm:$0x1] %vm353, %v333
      %361 = vst.msk [vmem:[%s213 + $0x2f] sm:$0xfe] %vm349, %v334
      %362 = vst.msk [vmem:[%s213 + $0x37] sm:$0xff] %vm351, %v335
      %363 = vst.msk [vmem:[%s213 + $0x3f] sm:$0x1] %vm353, %v336
      %364 = vst.msk [vmem:[%s213 + $0x3f] sm:$0xfe] %vm349, %v337
      %365 = vst.msk [vmem:[%s213 + $0x47] sm:$0xff] %vm351, %v338
      %366 = vst.msk [vmem:[%s213 + $0x4f] sm:$0x1] %vm353, %v339
      %367 = vst.msk [vmem:[%s213 + $0x4f] sm:$0xfe] %vm349, %v340
      %368 = vst.msk [vmem:[%s213 + $0x57] sm:$0xff] %vm351, %v341
      %369 = vst.msk [vmem:[%s213 + $0x5f] sm:$0x1] %vm353, %v342
      %370 = vst.msk [vmem:[%s213 + $0x5f] sm:$0xfe] %vm349, %v343
      %371 = vst.msk [vmem:[%s213 + $0x67] sm:$0xff] %vm351, %v344
      %372 = vst.msk [vmem:[%s213 + $0x6f] sm:$0x1] %vm353, %v345
      %373 = vst.msk [vmem:[%s213 + $0x6f] sm:$0xfe] %vm349, %v346
      %374 = vst.msk [vmem:[%s213 + $0x77] sm:$0xff] %vm351, %v347
      %375 = vst.msk [vmem:[%s213 + $0x7f] sm:$0x1] %vm353, %v348
      %s376 = smul.u32 8, %s19
      %p377 = scmp.lt.s32.totalorder %s18, 1
      %s378 = scalar_select %p377, %s18, 1
      %p379 = scmp.lt.s32.totalorder %s376, 15
      %s380 = scalar_select %p379, %s376, 15
      %s381 = smul.addr %s380, 2
      %s382 = smul.addr %s378, 32
      %s383 = sadd.s32 %s381, %s382
      %s384 = smul.addr %s383, 8
      %s385 = scalar_lea.vmem %s3, %s384
      // Predicated region
      $region33: #{unet_expansive_block.7} parent=31 // pred_check
        %p386 = pneg %p116
      $region34: #{unet_expansive_block.7} parent=31 // pred_check_branch
        %388 = sbr.rel (%p386) target = $region36
      $region35: #{unet_expansive_block.7} parent=31 // pred_region
        %s389 = smul.u32 8, %s19
      $region36: #{unet_expansive_block.7} parent=31 // pred_fallthru
        _
    $region32: #{unet_expansive_block.7} parent=5 // pred_fallthru
      _
    %p390 = scmp.le.s32.totalorder 2, %s9
    // Predicated region
    $region37: #{unet_expansive_block.7} parent=5 // pred_check
      %p391 = pneg %p390
    $region38: #{unet_expansive_block.7} parent=5 // pred_check_branch
      %393 = sbr.rel (%p391) target = $region40
    $region39: #{unet_expansive_block.7} parent=5 // pred_region
      %s394 = ssub.s32 %s9, 2
      // Predicated region
      $region41: #{unet_expansive_block.7} parent=39 // pred_check
        %p395 = pneg %p122
      $region42: #{unet_expansive_block.7} parent=39 // pred_check_branch
        %397 = sbr.rel (%p395) target = $region44
      $region43: #{unet_expansive_block.7} parent=39 // pred_region
        %s398 = smul.u32 8, %s21
        %p399 = scmp.lt.s32.totalorder %s20, 1
        %s400 = scalar_select %p399, %s20, 1
        %p401 = scmp.lt.s32.totalorder %s398, 15
        %s402 = scalar_select %p401, %s398, 15
        %s403 = smul.addr %s402, 2
        %s404 = smul.addr %s400, 32
        %s405 = sadd.s32 %s403, %s404
        %s406 = smul.addr %s405, 8
        %s407 = scalar_lea.vmem %s3, %s406
      $region44: #{unet_expansive_block.7} parent=39 // pred_fallthru
        _
    $region40: #{unet_expansive_block.7} parent=5 // pred_fallthru
      _
  $region6: #{unet_expansive_block.7} parent=0 // loop_footer
    %s13 = sadd.s32 1, %s9
  $region7: #{unet_expansive_block.7} parent=0 // loop_footer_branch
    %8 = sbr.rel target = $region3
  $region8: #{unet_expansive_block.7} parent=0 // loop_exit
    _

// kernel: unet_expansive_block.5
$region0: #{unet_expansive_block.5}
  #allocation0 [shape = 'u32[]', space=smem, size = 0x4, offset = 0x4, fixed_abs, tag = 'smem constant byte address 0x4 - core index']
  #allocation1 [shape = 'u32[144,128]{1,0:T(1,128)}', space=vmem, size = 0x12000, scoped, tag = 'internal scratch']
  %s0 = inlined_call_operand.vmem [shape: bf16[2,16,18,8], index: 0, kind: input, shape index: {}, may-alias: {0,1,2}]
  %s1 = inlined_call_operand.vmem [shape: bf16[2,16,18,8], index: 1, kind: input, shape index: {}, may-alias: {0,1,2}]
  %s2 = inlined_call_operand.vmem [shape: bf16[2,16,18,8], index: 2, kind: input, shape index: {}, may-alias: {0,1,2}]
  %s3 = inlined_call_operand.vmem [shape: bf16[72,8], index: 3, kind: input, shape index: {}]
  %s4 = inlined_call_operand.vmem [shape: bf16[2,16,18,8], index: 4, kind: output, shape index: {0}]
  %s5 = inlined_call_operand.vmem [shape: f32[2,1,8], index: 5, kind: output, shape index: {1}]
  %s6 = inlined_call_operand.vmem [shape: f32[2,1,8], index: 6, kind: output, shape index: {2}]
  %7 = xla_tuple %s4, %s5, %s6
  %s8 = sld [smem:[#allocation0]]
  $region69: #{unet_expansive_block.5} parent=0
    _
  %s10 = ssub.s32 1, %s8
  %s11 = scalar_select 0, %s10, %s8
  loop: start=0, step=1, limit=6
  $region2: #{unet_expansive_block.5} parent=0 // loop_pre_header
    _
  $region3: #{unet_expansive_block.5} parent=0 // loop_header
    %s13 = sphi 0, %s17
    %p14 = scmp.ge.s32.totalorder %s13, 6
    %s20 = sphi 0, %s32
    %s21 = sphi 0, %s28
    %s22 = sphi 0, %s20
    %s23 = sphi 0, %s21
    %s24 = sphi 0, %s22
    %s25 = sphi 0, %s23
    %s45 = sphi 0, %s47
    %s48 = sphi 0, %s45
    %s49 = sphi 0, %s48
    %s65 = sphi 0, %s49
    %s73 = sphi 0, %s75
    %s76 = sphi 0, %s73
    %s77 = sphi 0, %s76
    %s93 = sphi 0, %s77
    %s109 = sphi 0, %s111
    %s112 = sphi 0, %s109
    %s113 = sphi 0, %s112
    %s129 = sphi 0, %s113
    %s133 = sphi 0, %s133
    %s135 = sphi 0, %s133
    %s136 = sphi 0, %s135
    %s150 = sphi 0, %s136
    %s158 = sphi 0, %s160
    %s161 = sphi 0, %s158
    %s162 = sphi 0, %s161
    %s178 = sphi 0, %s162
    %s184 = sphi 0, %s186
    %s187 = sphi 0, %s184
    %s188 = sphi 0, %s187
    %s204 = sphi 0, %s188
    %s210 = sphi 0, %s212
    %s213 = sphi 0, %s210
    %s214 = sphi 0, %s213
    %s230 = sphi 0, %s214
  $region4: #{unet_expansive_block.5} parent=0 // loop_header_branch
    %16 = sbr.rel (%p14) target = $region8
  $region5: #{unet_expansive_block.5} parent=0 // loop_body
    %s18 = ssub.s32 %s13, 1
    %s19 = ssub.s32 %s13, 2
    %s26 = sadd.s32 1, %s21
    %p27 = scmp.ge.s32.totalorder %s26, 2
    %s28 = scalar_select %p27, 0, %s26
    %s29 = sadd.s32 1, %s20
    %s30 = scalar_select %p27, %s29, %s20
    %p31 = scmp.ge.s32.totalorder %s30, 2
    %s32 = scalar_select %p31, 0, %s30
    %s33 = smul.u32 %s21, 8
    %s34 = ssub.s32 %s33, 1
    %p35 = scmp.gt.s32.totalorder %s34, 0
    %s36 = scalar_select %p35, %s34, 0
    %s37 = smul.u32 %s28, 8
    %s38 = ssub.s32 %s37, 1
    %p39 = scmp.gt.s32.totalorder %s38, 0
    %s40 = scalar_select %p39, %s38, 0
    %s41 = ssub.s32 %s20, %s32
    %s42 = ssub.s32 %s36, %s40
    %s43 = sor.u32 %s41, %s42
    %p44 = scmp.eq.s32.totalorder %s43, 0
    %s46 = sadd.s32 %s45, 1
    %s47 = scalar_select %p44, %s45, %s46
    %p50 = pneg %p44
    %p51 = scmp.eq.s32.totalorder %s13, 3
    %p52 = por %p50, %p51
    %p53 = scmp.ne.s32.totalorder %s45, %s48
    %p54 = scmp.eq.s32.totalorder %s13, 0
    %p55 = por %p53, %p54
    %p56 = scmp.ne.s32.totalorder %s45, %s48
    %p57 = scmp.eq.s32.totalorder %s18, 3
    %p58 = por %p56, %p57
    %p59 = scmp.ne.s32.totalorder %s48, %s49
    %p60 = scmp.eq.s32.totalorder %s18, 0
    %p61 = por %p59, %p60
    %p62 = scmp.ne.s32.totalorder %s48, %s49
    %p63 = scmp.eq.s32.totalorder %s19, 3
    %p64 = por %p62, %p63
    %p66 = scmp.ne.s32.totalorder %s49, %s65
    %p67 = scmp.eq.s32.totalorder %s19, 0
    %p68 = por %p66, %p67
    %s69 = ssub.s32 %s20, %s32
    %s70 = ssub.s32 %s21, %s28
    %s71 = sor.u32 %s69, %s70
    %p72 = scmp.eq.s32.totalorder %s71, 0
    %s74 = sadd.s32 %s73, 1
    %s75 = scalar_select %p72, %s73, %s74
    %p78 = pneg %p72
    %p79 = scmp.eq.s32.totalorder %s13, 3
    %p80 = por %p78, %p79
    %p81 = scmp.ne.s32.totalorder %s73, %s76
    %p82 = scmp.eq.s32.totalorder %s13, 0
    %p83 = por %p81, %p82
    %p84 = scmp.ne.s32.totalorder %s73, %s76
    %p85 = scmp.eq.s32.totalorder %s18, 3
    %p86 = por %p84, %p85
    %p87 = scmp.ne.s32.totalorder %s76, %s77
    %p88 = scmp.eq.s32.totalorder %s18, 0
    %p89 = por %p87, %p88
    %p90 = scmp.ne.s32.totalorder %s76, %s77
    %p91 = scmp.eq.s32.totalorder %s19, 3
    %p92 = por %p90, %p91
    %p94 = scmp.ne.s32.totalorder %s77, %s93
    %p95 = scmp.eq.s32.totalorder %s19, 0
    %p96 = por %p94, %p95
    %s97 = smul.u32 %s21, 8
    %s98 = sadd.s32 %s97, 8
    %p99 = scmp.lt.s32.totalorder %s98, 15
    %s100 = scalar_select %p99, %s98, 15
    %s101 = smul.u32 %s28, 8
    %s102 = sadd.s32 %s101, 8
    %p103 = scmp.lt.s32.totalorder %s102, 15
    %s104 = scalar_select %p103, %s102, 15
    %s105 = ssub.s32 %s20, %s32
    %s106 = ssub.s32 %s100, %s104
    %s107 = sor.u32 %s105, %s106
    %p108 = scmp.eq.s32.totalorder %s107, 0
    %s110 = sadd.s32 %s109, 1
    %s111 = scalar_select %p108, %s109, %s110
    %p114 = pneg %p108
    %p115 = scmp.eq.s32.totalorder %s13, 3
    %p116 = por %p114, %p115
    %p117 = scmp.ne.s32.totalorder %s109, %s112
    %p118 = scmp.eq.s32.totalorder %s13, 0
    %p119 = por %p117, %p118
    %p120 = scmp.ne.s32.totalorder %s109, %s112
    %p121 = scmp.eq.s32.totalorder %s18, 3
    %p122 = por %p120, %p121
    %p123 = scmp.ne.s32.totalorder %s112, %s113
    %p124 = scmp.eq.s32.totalorder %s18, 0
    %p125 = por %p123, %p124
    %p126 = scmp.ne.s32.totalorder %s112, %s113
    %p127 = scmp.eq.s32.totalorder %s19, 3
    %p128 = por %p126, %p127
    %p130 = scmp.ne.s32.totalorder %s113, %s129
    %p131 = scmp.eq.s32.totalorder %s19, 0
    %p132 = por %p130, %p131
    %s134 = sadd.s32 %s133, 1
    %p137 = scmp.eq.s32.totalorder %s13, 3
    %p138 = scmp.ne.s32.totalorder %s133, %s135
    %p139 = scmp.eq.s32.totalorder %s13, 0
    %p140 = por %p138, %p139
    %p141 = scmp.ne.s32.totalorder %s133, %s135
    %p142 = scmp.eq.s32.totalorder %s18, 3
    %p143 = por %p141, %p142
    %p144 = scmp.ne.s32.totalorder %s135, %s136
    %p145 = scmp.eq.s32.totalorder %s18, 0
    %p146 = por %p144, %p145
    %p147 = scmp.ne.s32.totalorder %s135, %s136
    %p148 = scmp.eq.s32.totalorder %s19, 3
    %p149 = por %p147, %p148
    %p151 = scmp.ne.s32.totalorder %s136, %s150
    %p152 = scmp.eq.s32.totalorder %s19, 0
    %p153 = por %p151, %p152
    %s154 = ssub.s32 %s20, %s32
    %s155 = ssub.s32 %s21, %s28
    %s156 = sor.u32 %s154, %s155
    %p157 = scmp.eq.s32.totalorder %s156, 0
    %s159 = sadd.s32 %s158, 1
    %s160 = scalar_select %p157, %s158, %s159
    %p163 = pneg %p157
    %p164 = scmp.eq.s32.totalorder %s13, 3
    %p165 = por %p163, %p164
    %p166 = scmp.ne.s32.totalorder %s158, %s161
    %p167 = scmp.eq.s32.totalorder %s13, 0
    %p168 = por %p166, %p167
    %p169 = scmp.ne.s32.totalorder %s158, %s161
    %p170 = scmp.eq.s32.totalorder %s18, 3
    %p171 = por %p169, %p170
    %p172 = scmp.ne.s32.totalorder %s161, %s162
    %p173 = scmp.eq.s32.totalorder %s18, 0
    %p174 = por %p172, %p173
    %p175 = scmp.ne.s32.totalorder %s161, %s162
    %p176 = scmp.eq.s32.totalorder %s19, 3
    %p177 = por %p175, %p176
    %p179 = scmp.ne.s32.totalorder %s162, %s178
    %p180 = scmp.eq.s32.totalorder %s19, 0
    %p181 = por %p179, %p180
    %s182 = ssub.s32 %s20, %s32
    %p183 = scmp.eq.s32.totalorder %s182, 0
    %s185 = sadd.s32 %s184, 1
    %s186 = scalar_select %p183, %s184, %s185
    %p189 = pneg %p183
    %p190 = scmp.eq.s32.totalorder %s13, 3
    %p191 = por %p189, %p190
    %p192 = scmp.ne.s32.totalorder %s184, %s187
    %p193 = scmp.eq.s32.totalorder %s13, 0
    %p194 = por %p192, %p193
    %p195 = scmp.ne.s32.totalorder %s184, %s187
    %p196 = scmp.eq.s32.totalorder %s18, 3
    %p197 = por %p195, %p196
    %p198 = scmp.ne.s32.totalorder %s187, %s188
    %p199 = scmp.eq.s32.totalorder %s18, 0
    %p200 = por %p198, %p199
    %p201 = scmp.ne.s32.totalorder %s187, %s188
    %p202 = scmp.eq.s32.totalorder %s19, 3
    %p203 = por %p201, %p202
    %p205 = scmp.ne.s32.totalorder %s188, %s204
    %p206 = scmp.eq.s32.totalorder %s19, 0
    %p207 = por %p205, %p206
    %s208 = ssub.s32 %s20, %s32
    %p209 = scmp.eq.s32.totalorder %s208, 0
    %s211 = sadd.s32 %s210, 1
    %s212 = scalar_select %p209, %s210, %s211
    %p215 = pneg %p209
    %p216 = scmp.eq.s32.totalorder %s13, 3
    %p217 = por %p215, %p216
    %p218 = scmp.ne.s32.totalorder %s210, %s213
    %p219 = scmp.eq.s32.totalorder %s13, 0
    %p220 = por %p218, %p219
    %p221 = scmp.ne.s32.totalorder %s210, %s213
    %p222 = scmp.eq.s32.totalorder %s18, 3
    %p223 = por %p221, %p222
    %p224 = scmp.ne.s32.totalorder %s213, %s214
    %p225 = scmp.eq.s32.totalorder %s18, 0
    %p226 = por %p224, %p225
    %p227 = scmp.ne.s32.totalorder %s213, %s214
    %p228 = scmp.eq.s32.totalorder %s19, 3
    %p229 = por %p227, %p228
    %p231 = scmp.ne.s32.totalorder %s214, %s230
    %p232 = scmp.eq.s32.totalorder %s19, 0
    %p233 = por %p231, %p232
    %p234 = scmp.le.s32.totalorder 1, %s13
    %p235 = scmp.lt.s32.totalorder %s13, 5
    %p236 = pnand %p234, %p235
    %p237 = pneg %p236
    // Predicated region
    $region9: #{unet_expansive_block.5} parent=5 // pred_check
      _
    $region10: #{unet_expansive_block.5} parent=5 // pred_check_branch
      %239 = sbr.rel (%p236) target = $region12
    $region11: #{unet_expansive_block.5} parent=5 // pred_region
      %s240 = ssub.s32 %s13, 1
      // Predicated region
      $region13: #{unet_expansive_block.5} parent=11 // pred_check
        %p241 = pneg %p146
      $region14: #{unet_expansive_block.5} parent=11 // pred_check_branch
        %243 = sbr.rel (%p241) target = $region16
      $region15: #{unet_expansive_block.5} parent=11 // pred_region
        _
      $region16: #{unet_expansive_block.5} parent=11 // pred_fallthru
        _
    $region12: #{unet_expansive_block.5} parent=5 // pred_fallthru
      _
    %p244 = scmp.lt.s32.totalorder %s13, 4
    // Predicated region
    $region17: #{unet_expansive_block.5} parent=5 // pred_check
      %p245 = pneg %p244
    $region18: #{unet_expansive_block.5} parent=5 // pred_check_branch
      %247 = sbr.rel (%p245) target = $region20
    $region19: #{unet_expansive_block.5} parent=5 // pred_region
      // Predicated region
      $region21: #{unet_expansive_block.5} parent=19 // pred_check
        %p248 = pneg %p55
      $region22: #{unet_expansive_block.5} parent=19 // pred_check_branch
        %250 = sbr.rel (%p248) target = $region24
      $region23: #{unet_expansive_block.5} parent=19 // pred_region
        %s251 = smul.u32 %s21, 8
        %s252 = ssub.s32 %s251, 1
        %p253 = scmp.gt.s32.totalorder %s252, 0
        %s254 = scalar_select %p253, %s252, 0
        %p255 = scmp.lt.s32.totalorder %s20, 1
        %s256 = scalar_select %p255, %s20, 1
        %p257 = scmp.lt.s32.totalorder %s254, 15
        %s258 = scalar_select %p257, %s254, 15
        %s259 = smul.addr %s258, 3
        %s260 = smul.addr %s256, 48
        %s261 = sadd.s32 %s259, %s260
        %s262 = smul.addr %s261, 4
        %s263 = scalar_lea.vmem %s0, %s262
        %s264 = smul.u32 %s21, 8
        %s265 = ssub.s32 %s264, 1
        %p266 = scmp.gt.s32.totalorder %s265, 0
        %s267 = scalar_select %p266, %s265, 0
      $region24: #{unet_expansive_block.5} parent=19 // pred_fallthru
        _
      // Predicated region
      $region25: #{unet_expansive_block.5} parent=19 // pred_check
        %p268 = pneg %p83
      $region26: #{unet_expansive_block.5} parent=19 // pred_check_branch
        %270 = sbr.rel (%p268) target = $region28
      $region27: #{unet_expansive_block.5} parent=19 // pred_region
        %s271 = smul.u32 8, %s21
        %p272 = scmp.lt.s32.totalorder %s20, 1
        %s273 = scalar_select %p272, %s20, 1
        %p274 = scmp.lt.s32.totalorder %s271, 15
        %s275 = scalar_select %p274, %s271, 15
        %s276 = smul.addr %s275, 3
        %s277 = smul.addr %s273, 48
        %s278 = sadd.s32 %s276, %s277
        %s279 = smul.addr %s278, 4
        %s280 = scalar_lea.vmem %s1, %s279
        %s281 = smul.u32 8, %s21
      $region28: #{unet_expansive_block.5} parent=19 // pred_fallthru
        _
      // Predicated region
      $region29: #{unet_expansive_block.5} parent=19 // pred_check
        %p282 = pneg %p119
      $region30: #{unet_expansive_block.5} parent=19 // pred_check_branch
        %284 = sbr.rel (%p282) target = $region32
      $region31: #{unet_expansive_block.5} parent=19 // pred_region
        %s285 = smul.u32 %s21, 8
        %s286 = sadd.s32 %s285, 8
        %p287 = scmp.lt.s32.totalorder %s286, 15
        %s288 = scalar_select %p287, %s286, 15
        %p289 = scmp.lt.s32.totalorder %s20, 1
        %s290 = scalar_select %p289, %s20, 1
        %p291 = scmp.lt.s32.totalorder %s288, 15
        %s292 = scalar_select %p291, %s288, 15
        %s293 = smul.addr %s292, 3
        %s294 = smul.addr %s290, 48
        %s295 = sadd.s32 %s293, %s294
        %s296 = smul.addr %s295, 4
        %s297 = scalar_lea.vmem %s2, %s296
        %s298 = smul.u32 %s21, 8
        %s299 = sadd.s32 %s298, 8
        %p300 = scmp.lt.s32.totalorder %s299, 15
        %s301 = scalar_select %p300, %s299, 15
      $region32: #{unet_expansive_block.5} parent=19 // pred_fallthru
        _
    $region20: #{unet_expansive_block.5} parent=5 // pred_fallthru
      _
    %p302 = scmp.le.s32.totalorder 1, %s13
    %p303 = scmp.lt.s32.totalorder %s13, 5
    %p304 = pnand %p302, %p303
    %p305 = pneg %p304
    // Predicated region
    $region33: #{unet_expansive_block.5} parent=5 // pred_check
      _
    $region34: #{unet_expansive_block.5} parent=5 // pred_check_branch
      %307 = sbr.rel (%p304) target = $region36
    $region35: #{unet_expansive_block.5} parent=5 // pred_region
      %s308 = ssub.s32 %s13, 1
      %s309 = smul.u32 %s23, 8
      %s310 = ssub.s32 %s309, 1
      %p311 = scmp.gt.s32.totalorder %s310, 0
      %s312 = scalar_select %p311, %s310, 0
      %p313 = scmp.lt.s32.totalorder %s22, 1
      %s314 = scalar_select %p313, %s22, 1
      %p315 = scmp.lt.s32.totalorder %s312, 15
      %s316 = scalar_select %p315, %s312, 15
      %s317 = smul.addr %s316, 3
      %s318 = smul.addr %s314, 48
      %s319 = sadd.s32 %s317, %s318
      %s320 = smul.addr %s319, 4
      %s321 = scalar_lea.vmem %s0, %s320
      %p322 = pneg %p61
      %p323 = pneg %p58
      %s324 = smul.u32 8, %s23
      %p325 = scmp.lt.s32.totalorder %s22, 1
      %s326 = scalar_select %p325, %s22, 1
      %p327 = scmp.lt.s32.totalorder %s324, 15
      %s328 = scalar_select %p327, %s324, 15
      %s329 = smul.addr %s328, 3
      %s330 = smul.addr %s326, 48
      %s331 = sadd.s32 %s329, %s330
      %s332 = smul.addr %s331, 4
      %s333 = scalar_lea.vmem %s1, %s332
      %p334 = pneg %p89
      %p335 = pneg %p86
      %s336 = smul.u32 %s23, 8
      %s337 = sadd.s32 %s336, 8
      %p338 = scmp.lt.s32.totalorder %s337, 15
      %s339 = scalar_select %p338, %s337, 15
      %p340 = scmp.lt.s32.totalorder %s22, 1
      %s341 = scalar_select %p340, %s22, 1
      %p342 = scmp.lt.s32.totalorder %s339, 15
      %s343 = scalar_select %p342, %s339, 15
      %s344 = smul.addr %s343, 3
      %s345 = smul.addr %s341, 48
      %s346 = sadd.s32 %s344, %s345
      %s347 = smul.addr %s346, 4
      %s348 = scalar_lea.vmem %s2, %s347
      %p349 = pneg %p125
      %p350 = pneg %p122
      %p351 = pneg %p146
      %p352 = pneg %p143
      %p353 = pneg %p174
      %p354 = pneg %p171
      %s355 = smul.u32 8, %s23
      %p356 = scmp.lt.s32.totalorder %s22, 1
      %s357 = scalar_select %p356, %s22, 1
      %p358 = scmp.lt.s32.totalorder %s355, 15
      %s359 = scalar_select %p358, %s355, 15
      %s360 = smul.addr %s359, 3
      %s361 = smul.addr %s357, 48
      %s362 = sadd.s32 %s360, %s361
      %s363 = smul.addr %s362, 4
      %s364 = scalar_lea.vmem %s4, %s363
      %p365 = pneg %p200
      %p366 = pneg %p197
      %p367 = scmp.lt.s32.totalorder %s22, 1
      %s368 = scalar_select %p367, %s22, 1
      %s369 = scalar_lea.vmem %s5, %s368
      %p370 = pneg %p226
      %p371 = pneg %p223
      %p372 = scmp.lt.s32.totalorder %s22, 1
      %s373 = scalar_select %p372, %s22, 1
      %s374 = scalar_lea.vmem %s6, %s373
      %s375 = smul.u32 %s23, 8
      %s376 = ssub.s32 %s375, 1
      %p377 = scmp.gt.s32.totalorder %s376, 0
      %s378 = scalar_select %p377, %s376, 0
      %p379 = scmp.lt.s32.totalorder %s22, 1
      %s380 = scalar_select %p379, %s22, 1
      %p381 = scmp.lt.s32.totalorder %s378, 15
      %s382 = scalar_select %p381, %s378, 15
      %s383 = smul.addr %s382, 3
      %s384 = smul.addr %s380, 48
      %s385 = sadd.s32 %s383, %s384
      %s386 = smul.addr %s385, 4
      %s387 = scalar_lea.vmem %s0, %s386
      %s388 = smul.u32 %s23, 8
      %s389 = ssub.s32 %s388, 1
      %p390 = scmp.gt.s32.totalorder %s389, 0
      %s391 = scalar_select %p390, %s389, 0
      %s392 = smul.u32 8, %s23
      %p393 = scmp.lt.s32.totalorder %s22, 1
      %s394 = scalar_select %p393, %s22, 1
      %p395 = scmp.lt.s32.totalorder %s392, 15
      %s396 = scalar_select %p395, %s392, 15
      %s397 = smul.addr %s396, 3
      %s398 = smul.addr %s394, 48
      %s399 = sadd.s32 %s397, %s398
      %s400 = smul.addr %s399, 4
      %s401 = scalar_lea.vmem %s1, %s400
      %s402 = smul.u32 8, %s23
      %s403 = smul.u32 %s23, 8
      %s404 = sadd.s32 %s403, 8
      %p405 = scmp.lt.s32.totalorder %s404, 15
      %s406 = scalar_select %p405, %s404, 15
      %p407 = scmp.lt.s32.totalorder %s22, 1
      %s408 = scalar_select %p407, %s22, 1
      %p409 = scmp.lt.s32.totalorder %s406, 15
      %s410 = scalar_select %p409, %s406, 15
      %s411 = smul.addr %s410, 3
      %s412 = smul.addr %s408, 48
      %s413 = sadd.s32 %s411, %s412
      %s414 = smul.addr %s413, 4
      %s415 = scalar_lea.vmem %s2, %s414
      %s416 = smul.u32 %s23, 8
      %s417 = sadd.s32 %s416, 8
      %p418 = scmp.lt.s32.totalorder %s417, 15
      %s419 = scalar_select %p418, %s417, 15
      %s420 = smul.u32 8, %s23
      %p421 = scmp.lt.s32.totalorder %s22, 1
      %s422 = scalar_select %p421, %s22, 1
      %p423 = scmp.lt.s32.totalorder %s420, 15
      %s424 = scalar_select %p423, %s420, 15
      %s425 = smul.addr %s424, 3
      %s426 = smul.addr %s422, 48
      %s427 = sadd.s32 %s425, %s426
      %s428 = smul.addr %s427, 4
      %s429 = scalar_lea.vmem %s4, %s428
      %s430 = smul.u32 8, %s23
      %p431 = scmp.lt.s32.totalorder %s22, 1
      %s432 = scalar_select %p431, %s22, 1
      %s433 = scalar_lea.vmem %s5, %s432
      %p434 = scmp.lt.s32.totalorder %s22, 1
      %s435 = scalar_select %p434, %s22, 1
      %s436 = scalar_lea.vmem %s6, %s435
      %v438 = vld [vmem:[%s387] sm:$0xf]
      %v439 = vld [vmem:[%s387 + $0x4] sm:$0xf]
      %v440 = vld [vmem:[%s387 + $0x8] sm:$0x1]
      %v441 = vunpack.c.l.bf16 %v438
      %v442 = vunpack.c.l.bf16 %v439
      %v443 = vunpack.c.l.bf16 %v440
      %v444 = vld [vmem:[%s401] sm:$0xf]
      %v445 = vld [vmem:[%s401 + $0x4] sm:$0xf]
      %v446 = vld [vmem:[%s401 + $0x8] sm:$0x1]
      %v447 = vld [vmem:[%s401 + $0xc] sm:$0xf]
      %v448 = vld [vmem:[%s401 + $0x10] sm:$0xf]
      %v449 = vld [vmem:[%s401 + $0x14] sm:$0x1]
      %v450 = vld [vmem:[%s401 + $0x18] sm:$0xf]
      %v451 = vld [vmem:[%s401 + $0x1c] sm:$0xf]
      %v452 = vld [vmem:[%s401 + $0x20] sm:$0x1]
      %v453 = vld [vmem:[%s401 + $0x24] sm:$0xf]
      %v454 = vld [vmem:[%s401 + $0x28] sm:$0xf]
      %v455 = vld [vmem:[%s401 + $0x2c] sm:$0x1]
      %v456 = vld [vmem:[%s401 + $0x30] sm:$0xf]
      %v457 = vld [vmem:[%s401 + $0x34] sm:$0xf]
      %v458 = vld [vmem:[%s401 + $0x38] sm:$0x1]
      %v459 = vld [vmem:[%s401 + $0x3c] sm:$0xf]
      %v460 = vld [vmem:[%s401 + $0x40] sm:$0xf]
      %v461 = vld [vmem:[%s401 + $0x44] sm:$0x1]
      %v462 = vld [vmem:[%s401 + $0x48] sm:$0xf]
      %v463 = vld [vmem:[%s401 + $0x4c] sm:$0xf]
      %v464 = vld [vmem:[%s401 + $0x50] sm:$0x1]
      %v465 = vld [vmem:[%s401 + $0x54] sm:$0xf]
      %v466 = vld [vmem:[%s401 + $0x58] sm:$0xf]
      %v467 = vld [vmem:[%s401 + $0x5c] sm:$0x1]
      %v468 = vunpack.c.l.bf16 %v444
      %v469 = vunpack.c.l.bf16 %v445
      %v470 = vunpack.c.l.bf16 %v446
      %v471 = vunpack.c.l.bf16 %v447
      %v472 = vunpack.c.l.bf16 %v448
      %v473 = vunpack.c.l.bf16 %v449
      %v474 = vunpack.c.l.bf16 %v450
      %v475 = vunpack.c.l.bf16 %v451
      %v476 = vunpack.c.l.bf16 %v452
      %v477 = vunpack.c.l.bf16 %v453
      %v478 = vunpack.c.l.bf16 %v454
      %v479 = vunpack.c.l.bf16 %v455
      %v480 = vunpack.c.l.bf16 %v456
      %v481 = vunpack.c.l.bf16 %v457
      %v482 = vunpack.c.l.bf16 %v458
      %v483 = vunpack.c.l.bf16 %v459
      %v484 = vunpack.c.l.bf16 %v460
      %v485 = vunpack.c.l.bf16 %v461
      %v486 = vunpack.c.l.bf16 %v462
      %v487 = vunpack.c.l.bf16 %v463
      %v488 = vunpack.c.l.bf16 %v464
      %v489 = vunpack.c.l.bf16 %v465
      %v490 = vunpack.c.l.bf16 %v466
      %v491 = vunpack.c.l.bf16 %v467
      %v492 = vld [vmem:[%s415] sm:$0xf]
      %v493 = vld [vmem:[%s415 + $0x4] sm:$0xf]
      %v494 = vld [vmem:[%s415 + $0x8] sm:$0x1]
      %v495 = vunpack.c.l.bf16 %v492
      %v496 = vunpack.c.l.bf16 %v493
      %v497 = vunpack.c.l.bf16 %v494
      %v498 = vlaneseq
      %v499 = vshrl.u32 %v498, 7
      %v500 = vadd.s32 %v499, 8
      %v501 = vadd.s32 %v499, 16
      %vm502 = vcmp.eq.s32.totalorder %v499, 0
      %vm503 = vcmp.eq.s32.totalorder %v500, 0
      %vm504 = vcmp.eq.s32.totalorder %v501, 0
      %vm505 = vcmp.eq.s32.totalorder %v499, 17
      %vm506 = vcmp.eq.s32.totalorder %v500, 17
      %vm507 = vcmp.eq.s32.totalorder %v501, 17
      %vm508 = vmor %vm502, %vm505
      %vm509 = vmor %vm503, %vm506
      %vm510 = vmor %vm504, %vm507
      %p511 = scmp.eq.s32.totalorder %s23, 0
      %s512 = scalar_select %p511, 1, 0
      %v513 = vstv %s512
      %vm514 = vcmp.eq.s32.totalorder %v513, 1
      %vm515 = vmor %vm508, %vm514
      %vm516 = vmor %vm509, %vm514
      %vm517 = vmor %vm510, %vm514
      %vm518 = vmor %vm508, 0
      %vm519 = vmor %vm509, 0
      %vm520 = vmor %vm510, 0
      %p521 = scmp.eq.s32.totalorder %s23, 1
      %s522 = scalar_select %p521, 1, 0
      %v523 = vstv %s522
      %vm524 = vcmp.eq.s32.totalorder %v523, 1
      %vm525 = vmor %vm515, 0
      %vm526 = vmor %vm516, 0
      %vm527 = vmor %vm517, 0
      %vm528 = vmor %vm518, 0
      %vm529 = vmor %vm519, 0
      %vm530 = vmor %vm520, 0
      %vm531 = vmor %vm518, %vm524
      %vm532 = vmor %vm519, %vm524
      %vm533 = vmor %vm520, %vm524
      %v534 = vsel %vm525, 1, 0
      %v535 = vsel %vm526, 1, 0
      %v536 = vsel %vm527, 1, 0
      %v537 = vsel %vm528, 1, 0
      %v538 = vsel %vm529, 1, 0
      %v539 = vsel %vm530, 1, 0
      %v540 = vsel %vm531, 1, 0
      %v541 = vsel %vm532, 1, 0
      %v542 = vsel %vm533, 1, 0
      %vm543 = vcmp.eq.s32.totalorder %v534, 1
      %vm544 = vcmp.eq.s32.totalorder %v535, 1
      %vm545 = vcmp.eq.s32.totalorder %v536, 1
      %vm546 = vcmp.eq.s32.totalorder %v537, 1
      %vm547 = vcmp.eq.s32.totalorder %v538, 1
      %vm548 = vcmp.eq.s32.totalorder %v539, 1
      %vm549 = vcmp.eq.s32.totalorder %v540, 1
      %vm550 = vcmp.eq.s32.totalorder %v541, 1
      %vm551 = vcmp.eq.s32.totalorder %v542, 1
      %v552 = vsel %vm543, 0.0, %v441
      %v553 = vsel %vm544, 0.0, %v442
      %v554 = vsel %vm545, 0.0, %v443
      %v555 = vsel %vm546, 0.0, %v468
      %v556 = vsel %vm547, 0.0, %v469
      %v557 = vsel %vm548, 0.0, %v470
      %v558 = vsel %vm546, 0.0, %v471
      %v559 = vsel %vm547, 0.0, %v472
      %v560 = vsel %vm548, 0.0, %v473
      %v561 = vsel %vm546, 0.0, %v474
      %v562 = vsel %vm547, 0.0, %v475
      %v563 = vsel %vm548, 0.0, %v476
      %v564 = vsel %vm546, 0.0, %v477
      %v565 = vsel %vm547, 0.0, %v478
      %v566 = vsel %vm548, 0.0, %v479
      %v567 = vsel %vm546, 0.0, %v480
      %v568 = vsel %vm547, 0.0, %v481
      %v569 = vsel %vm548, 0.0, %v482
      %v570 = vsel %vm546, 0.0, %v483
      %v571 = vsel %vm547, 0.0, %v484
      %v572 = vsel %vm548, 0.0, %v485
      %v573 = vsel %vm546, 0.0, %v486
      %v574 = vsel %vm547, 0.0, %v487
      %v575 = vsel %vm548, 0.0, %v488
      %v576 = vsel %vm546, 0.0, %v489
      %v577 = vsel %vm547, 0.0, %v490
      %v578 = vsel %vm548, 0.0, %v491
      %v579 = vsel %vm549, 0.0, %v495
      %v580 = vsel %vm550, 0.0, %v496
      %v581 = vsel %vm551, 0.0, %v497
      %vm606 = vcmask 1046528
      %v607 = vrot.slane %v552, 1
      %v608 = vrot.slane %v553, 1
      %v609 = vsel %vm606, %v607, %v608
      %v610 = vrot.slane %v554, 1
      %v611 = vsel %vm606, %v608, %v610
      %v612 = vrot.slane %v555, 1
      %v613 = vrot.slane %v556, 1
      %v614 = vsel %vm606, %v612, %v613
      %v615 = vrot.slane %v557, 1
      %v616 = vsel %vm606, %v613, %v615
      %v617 = vrot.slane %v558, 1
      %v618 = vrot.slane %v559, 1
      %v619 = vsel %vm606, %v617, %v618
      %v620 = vrot.slane %v560, 1
      %v621 = vsel %vm606, %v618, %v620
      %v622 = vrot.slane %v561, 1
      %v623 = vrot.slane %v562, 1
      %v624 = vsel %vm606, %v622, %v623
      %v625 = vrot.slane %v563, 1
      %v626 = vsel %vm606, %v623, %v625
      %v627 = vrot.slane %v564, 1
      %v628 = vrot.slane %v565, 1
      %v629 = vsel %vm606, %v627, %v628
      %v630 = vrot.slane %v566, 1
      %v631 = vsel %vm606, %v628, %v630
      %v632 = vrot.slane %v567, 1
      %v633 = vrot.slane %v568, 1
      %v634 = vsel %vm606, %v632, %v633
      %v635 = vrot.slane %v569, 1
      %v636 = vsel %vm606, %v633, %v635
      %v637 = vrot.slane %v570, 1
      %v638 = vrot.slane %v571, 1
      %v639 = vsel %vm606, %v637, %v638
      %v640 = vrot.slane %v572, 1
      %v641 = vsel %vm606, %v638, %v640
      %v642 = vrot.slane %v573, 1
      %v643 = vrot.slane %v574, 1
      %v644 = vsel %vm606, %v642, %v643
      %v645 = vrot.slane %v575, 1
      %v646 = vsel %vm606, %v643, %v645
      %vm647 = vcmask 1045504
      %v648 = vrot.slane %v552, 2
      %v649 = vrot.slane %v553, 2
      %v650 = vsel %vm647, %v648, %v649
      %v651 = vrot.slane %v554, 2
      %v652 = vsel %vm647, %v649, %v651
      %v653 = vrot.slane %v555, 2
      %v654 = vrot.slane %v556, 2
      %v655 = vsel %vm647, %v653, %v654
      %v656 = vrot.slane %v557, 2
      %v657 = vsel %vm647, %v654, %v656
      %v658 = vrot.slane %v558, 2
      %v659 = vrot.slane %v559, 2
      %v660 = vsel %vm647, %v658, %v659
      %v661 = vrot.slane %v560, 2
      %v662 = vsel %vm647, %v659, %v661
      %v663 = vrot.slane %v561, 2
      %v664 = vrot.slane %v562, 2
      %v665 = vsel %vm647, %v663, %v664
      %v666 = vrot.slane %v563, 2
      %v667 = vsel %vm647, %v664, %v666
      %v668 = vrot.slane %v564, 2
      %v669 = vrot.slane %v565, 2
      %v670 = vsel %vm647, %v668, %v669
      %v671 = vrot.slane %v566, 2
      %v672 = vsel %vm647, %v669, %v671
      %v673 = vrot.slane %v567, 2
      %v674 = vrot.slane %v568, 2
      %v675 = vsel %vm647, %v673, %v674
      %v676 = vrot.slane %v569, 2
      %v677 = vsel %vm647, %v674, %v676
      %v678 = vrot.slane %v570, 2
      %v679 = vrot.slane %v571, 2
      %v680 = vsel %vm647, %v678, %v679
      %v681 = vrot.slane %v572, 2
      %v682 = vsel %vm647, %v679, %v681
      %v683 = vrot.slane %v573, 2
      %v684 = vrot.slane %v574, 2
      %v685 = vsel %vm647, %v683, %v684
      %v686 = vrot.slane %v575, 2
      %v687 = vsel %vm647, %v684, %v686
      %v691 = vrot.slane %v576, 1
      %v692 = vrot.slane %v577, 1
      %v693 = vsel %vm606, %v691, %v692
      %v694 = vrot.slane %v578, 1
      %v695 = vsel %vm606, %v692, %v694
      %v696 = vrot.slane %v576, 2
      %v697 = vrot.slane %v577, 2
      %v698 = vsel %vm647, %v696, %v697
      %v699 = vrot.slane %v578, 2
      %v700 = vsel %vm647, %v697, %v699
      %v704 = vrot.slane %v579, 1
      %v705 = vrot.slane %v580, 1
      %v706 = vsel %vm606, %v704, %v705
      %v707 = vrot.slane %v581, 1
      %v708 = vsel %vm606, %v705, %v707
      %v709 = vrot.slane %v579, 2
      %v710 = vrot.slane %v580, 2
      %v711 = vsel %vm647, %v709, %v710
      %v712 = vrot.slane %v581, 2
      %v713 = vsel %vm647, %v710, %v712
      %714 = vrot.lane.b32.xlu0 %v609, 8
      %v715 = vpop.permute.xlu0 %714
      %716 = vrot.lane.b32.xlu0 %v611, 8
      %v717 = vpop.permute.xlu0 %716
      %718 = vrot.lane.b32.xlu0 %v614, 8
      %v719 = vpop.permute.xlu0 %718
      %720 = vrot.lane.b32.xlu0 %v616, 8
      %v721 = vpop.permute.xlu0 %720
      %722 = vrot.lane.b32.xlu0 %v619, 8
      %v723 = vpop.permute.xlu0 %722
      %724 = vrot.lane.b32.xlu0 %v621, 8
      %v725 = vpop.permute.xlu0 %724
      %726 = vrot.lane.b32.xlu0 %v624, 8
      %v727 = vpop.permute.xlu0 %726
      %728 = vrot.lane.b32.xlu0 %v626, 8
      %v729 = vpop.permute.xlu0 %728
      %730 = vrot.lane.b32.xlu0 %v629, 8
      %v731 = vpop.permute.xlu0 %730
      %732 = vrot.lane.b32.xlu0 %v631, 8
      %v733 = vpop.permute.xlu0 %732
      %734 = vrot.lane.b32.xlu0 %v634, 8
      %v735 = vpop.permute.xlu0 %734
      %736 = vrot.lane.b32.xlu0 %v636, 8
      %v737 = vpop.permute.xlu0 %736
      %738 = vrot.lane.b32.xlu0 %v639, 8
      %v739 = vpop.permute.xlu0 %738
      %740 = vrot.lane.b32.xlu0 %v641, 8
      %v741 = vpop.permute.xlu0 %740
      %742 = vrot.lane.b32.xlu0 %v644, 8
      %v743 = vpop.permute.xlu0 %742
      %744 = vrot.lane.b32.xlu0 %v646, 8
      %v745 = vpop.permute.xlu0 %744
      %762 = vrot.lane.b32.xlu0 %v650, 16
      %v763 = vpop.permute.xlu0 %762
      %764 = vrot.lane.b32.xlu0 %v652, 16
      %v765 = vpop.permute.xlu0 %764
      %766 = vrot.lane.b32.xlu0 %v655, 16
      %v767 = vpop.permute.xlu0 %766
      %768 = vrot.lane.b32.xlu0 %v657, 16
      %v769 = vpop.permute.xlu0 %768
      %770 = vrot.lane.b32.xlu0 %v660, 16
      %v771 = vpop.permute.xlu0 %770
      %772 = vrot.lane.b32.xlu0 %v662, 16
      %v773 = vpop.permute.xlu0 %772
      %774 = vrot.lane.b32.xlu0 %v665, 16
      %v775 = vpop.permute.xlu0 %774
      %776 = vrot.lane.b32.xlu0 %v667, 16
      %v777 = vpop.permute.xlu0 %776
      %778 = vrot.lane.b32.xlu0 %v670, 16
      %v779 = vpop.permute.xlu0 %778
      %780 = vrot.lane.b32.xlu0 %v672, 16
      %v781 = vpop.permute.xlu0 %780
      %782 = vrot.lane.b32.xlu0 %v675, 16
      %v783 = vpop.permute.xlu0 %782
      %784 = vrot.lane.b32.xlu0 %v677, 16
      %v785 = vpop.permute.xlu0 %784
      %786 = vrot.lane.b32.xlu0 %v680, 16
      %v787 = vpop.permute.xlu0 %786
      %788 = vrot.lane.b32.xlu0 %v682, 16
      %v789 = vpop.permute.xlu0 %788
      %790 = vrot.lane.b32.xlu0 %v685, 16
      %v791 = vpop.permute.xlu0 %790
      %792 = vrot.lane.b32.xlu0 %v687, 16
      %v793 = vpop.permute.xlu0 %792
      %810 = vrot.lane.b32.xlu0 %v555, 24
      %v811 = vpop.permute.xlu0 %810
      %812 = vrot.lane.b32.xlu0 %v556, 24
      %v813 = vpop.permute.xlu0 %812
      %814 = vrot.lane.b32.xlu0 %v558, 24
      %v815 = vpop.permute.xlu0 %814
      %816 = vrot.lane.b32.xlu0 %v559, 24
      %v817 = vpop.permute.xlu0 %816
      %818 = vrot.lane.b32.xlu0 %v561, 24
      %v819 = vpop.permute.xlu0 %818
      %820 = vrot.lane.b32.xlu0 %v562, 24
      %v821 = vpop.permute.xlu0 %820
      %822 = vrot.lane.b32.xlu0 %v564, 24
      %v823 = vpop.permute.xlu0 %822
      %824 = vrot.lane.b32.xlu0 %v565, 24
      %v825 = vpop.permute.xlu0 %824
      %826 = vrot.lane.b32.xlu0 %v567, 24
      %v827 = vpop.permute.xlu0 %826
      %828 = vrot.lane.b32.xlu0 %v568, 24
      %v829 = vpop.permute.xlu0 %828
      %830 = vrot.lane.b32.xlu0 %v570, 24
      %v831 = vpop.permute.xlu0 %830
      %832 = vrot.lane.b32.xlu0 %v571, 24
      %v833 = vpop.permute.xlu0 %832
      %834 = vrot.lane.b32.xlu0 %v573, 24
      %v835 = vpop.permute.xlu0 %834
      %836 = vrot.lane.b32.xlu0 %v574, 24
      %v837 = vpop.permute.xlu0 %836
      %838 = vrot.lane.b32.xlu0 %v576, 24
      %v839 = vpop.permute.xlu0 %838
      %840 = vrot.lane.b32.xlu0 %v577, 24
      %v841 = vpop.permute.xlu0 %840
      %858 = vrot.lane.b32.xlu0 %v614, 32
      %v859 = vpop.permute.xlu0 %858
      %860 = vrot.lane.b32.xlu0 %v616, 32
      %v861 = vpop.permute.xlu0 %860
      %862 = vrot.lane.b32.xlu0 %v619, 32
      %v863 = vpop.permute.xlu0 %862
      %864 = vrot.lane.b32.xlu0 %v621, 32
      %v865 = vpop.permute.xlu0 %864
      %866 = vrot.lane.b32.xlu0 %v624, 32
      %v867 = vpop.permute.xlu0 %866
      %868 = vrot.lane.b32.xlu0 %v626, 32
      %v869 = vpop.permute.xlu0 %868
      %870 = vrot.lane.b32.xlu0 %v629, 32
      %v871 = vpop.permute.xlu0 %870
      %872 = vrot.lane.b32.xlu0 %v631, 32
      %v873 = vpop.permute.xlu0 %872
      %874 = vrot.lane.b32.xlu0 %v634, 32
      %v875 = vpop.permute.xlu0 %874
      %876 = vrot.lane.b32.xlu0 %v636, 32
      %v877 = vpop.permute.xlu0 %876
      %878 = vrot.lane.b32.xlu0 %v639, 32
      %v879 = vpop.permute.xlu0 %878
      %880 = vrot.lane.b32.xlu0 %v641, 32
      %v881 = vpop.permute.xlu0 %880
      %882 = vrot.lane.b32.xlu0 %v644, 32
      %v883 = vpop.permute.xlu0 %882
      %884 = vrot.lane.b32.xlu0 %v646, 32
      %v885 = vpop.permute.xlu0 %884
      %886 = vrot.lane.b32.xlu0 %v693, 32
      %v887 = vpop.permute.xlu0 %886
      %888 = vrot.lane.b32.xlu0 %v695, 32
      %v889 = vpop.permute.xlu0 %888
      %906 = vrot.lane.b32.xlu0 %v655, 40
      %v907 = vpop.permute.xlu0 %906
      %908 = vrot.lane.b32.xlu0 %v657, 40
      %v909 = vpop.permute.xlu0 %908
      %910 = vrot.lane.b32.xlu0 %v660, 40
      %v911 = vpop.permute.xlu0 %910
      %912 = vrot.lane.b32.xlu0 %v662, 40
      %v913 = vpop.permute.xlu0 %912
      %914 = vrot.lane.b32.xlu0 %v665, 40
      %v915 = vpop.permute.xlu0 %914
      %916 = vrot.lane.b32.xlu0 %v667, 40
      %v917 = vpop.permute.xlu0 %916
      %918 = vrot.lane.b32.xlu0 %v670, 40
      %v919 = vpop.permute.xlu0 %918
      %920 = vrot.lane.b32.xlu0 %v672, 40
      %v921 = vpop.permute.xlu0 %920
      %922 = vrot.lane.b32.xlu0 %v675, 40
      %v923 = vpop.permute.xlu0 %922
      %924 = vrot.lane.b32.xlu0 %v677, 40
      %v925 = vpop.permute.xlu0 %924
      %926 = vrot.lane.b32.xlu0 %v680, 40
      %v927 = vpop.permute.xlu0 %926
      %928 = vrot.lane.b32.xlu0 %v682, 40
      %v929 = vpop.permute.xlu0 %928
      %930 = vrot.lane.b32.xlu0 %v685, 40
      %v931 = vpop.permute.xlu0 %930
      %932 = vrot.lane.b32.xlu0 %v687, 40
      %v933 = vpop.permute.xlu0 %932
      %934 = vrot.lane.b32.xlu0 %v698, 40
      %v935 = vpop.permute.xlu0 %934
      %936 = vrot.lane.b32.xlu0 %v700, 40
      %v937 = vpop.permute.xlu0 %936
      %954 = vrot.lane.b32.xlu0 %v558, 48
      %v955 = vpop.permute.xlu0 %954
      %956 = vrot.lane.b32.xlu0 %v559, 48
      %v957 = vpop.permute.xlu0 %956
      %958 = vrot.lane.b32.xlu0 %v561, 48
      %v959 = vpop.permute.xlu0 %958
      %960 = vrot.lane.b32.xlu0 %v562, 48
      %v961 = vpop.permute.xlu0 %960
      %962 = vrot.lane.b32.xlu0 %v564, 48
      %v963 = vpop.permute.xlu0 %962
      %964 = vrot.lane.b32.xlu0 %v565, 48
      %v965 = vpop.permute.xlu0 %964
      %966 = vrot.lane.b32.xlu0 %v567, 48
      %v967 = vpop.permute.xlu0 %966
      %968 = vrot.lane.b32.xlu0 %v568, 48
      %v969 = vpop.permute.xlu0 %968
      %970 = vrot.lane.b32.xlu0 %v570, 48
      %v971 = vpop.permute.xlu0 %970
      %972 = vrot.lane.b32.xlu0 %v571, 48
      %v973 = vpop.permute.xlu0 %972
      %974 = vrot.lane.b32.xlu0 %v573, 48
      %v975 = vpop.permute.xlu0 %974
      %976 = vrot.lane.b32.xlu0 %v574, 48
      %v977 = vpop.permute.xlu0 %976
      %978 = vrot.lane.b32.xlu0 %v576, 48
      %v979 = vpop.permute.xlu0 %978
      %980 = vrot.lane.b32.xlu0 %v577, 48
      %v981 = vpop.permute.xlu0 %980
      %982 = vrot.lane.b32.xlu0 %v579, 48
      %v983 = vpop.permute.xlu0 %982
      %984 = vrot.lane.b32.xlu0 %v580, 48
      %v985 = vpop.permute.xlu0 %984
      %1002 = vrot.lane.b32.xlu0 %v619, 56
      %v1003 = vpop.permute.xlu0 %1002
      %1004 = vrot.lane.b32.xlu0 %v621, 56
      %v1005 = vpop.permute.xlu0 %1004
      %1006 = vrot.lane.b32.xlu0 %v624, 56
      %v1007 = vpop.permute.xlu0 %1006
      %1008 = vrot.lane.b32.xlu0 %v626, 56
      %v1009 = vpop.permute.xlu0 %1008
      %1010 = vrot.lane.b32.xlu0 %v629, 56
      %v1011 = vpop.permute.xlu0 %1010
      %1012 = vrot.lane.b32.xlu0 %v631, 56
      %v1013 = vpop.permute.xlu0 %1012
      %1014 = vrot.lane.b32.xlu0 %v634, 56
      %v1015 = vpop.permute.xlu0 %1014
      %1016 = vrot.lane.b32.xlu0 %v636, 56
      %v1017 = vpop.permute.xlu0 %1016
      %1018 = vrot.lane.b32.xlu0 %v639, 56
      %v1019 = vpop.permute.xlu0 %1018
      %1020 = vrot.lane.b32.xlu0 %v641, 56
      %v1021 = vpop.permute.xlu0 %1020
      %1022 = vrot.lane.b32.xlu0 %v644, 56
      %v1023 = vpop.permute.xlu0 %1022
      %1024 = vrot.lane.b32.xlu0 %v646, 56
      %v1025 = vpop.permute.xlu0 %1024
      %1026 = vrot.lane.b32.xlu0 %v693, 56
      %v1027 = vpop.permute.xlu0 %1026
      %1028 = vrot.lane.b32.xlu0 %v695, 56
      %v1029 = vpop.permute.xlu0 %1028
      %1030 = vrot.lane.b32.xlu0 %v706, 56
      %v1031 = vpop.permute.xlu0 %1030
      %1032 = vrot.lane.b32.xlu0 %v708, 56
      %v1033 = vpop.permute.xlu0 %1032
      %1050 = vrot.lane.b32.xlu0 %v660, 64
      %v1051 = vpop.permute.xlu0 %1050
      %1052 = vrot.lane.b32.xlu0 %v662, 64
      %v1053 = vpop.permute.xlu0 %1052
      %1054 = vrot.lane.b32.xlu0 %v665, 64
      %v1055 = vpop.permute.xlu0 %1054
      %1056 = vrot.lane.b32.xlu0 %v667, 64
      %v1057 = vpop.permute.xlu0 %1056
      %1058 = vrot.lane.b32.xlu0 %v670, 64
      %v1059 = vpop.permute.xlu0 %1058
      %1060 = vrot.lane.b32.xlu0 %v672, 64
      %v1061 = vpop.permute.xlu0 %1060
      %1062 = vrot.lane.b32.xlu0 %v675, 64
      %v1063 = vpop.permute.xlu0 %1062
      %1064 = vrot.lane.b32.xlu0 %v677, 64
      %v1065 = vpop.permute.xlu0 %1064
      %1066 = vrot.lane.b32.xlu0 %v680, 64
      %v1067 = vpop.permute.xlu0 %1066
      %1068 = vrot.lane.b32.xlu0 %v682, 64
      %v1069 = vpop.permute.xlu0 %1068
      %1070 = vrot.lane.b32.xlu0 %v685, 64
      %v1071 = vpop.permute.xlu0 %1070
      %1072 = vrot.lane.b32.xlu0 %v687, 64
      %v1073 = vpop.permute.xlu0 %1072
      %1074 = vrot.lane.b32.xlu0 %v698, 64
      %v1075 = vpop.permute.xlu0 %1074
      %1076 = vrot.lane.b32.xlu0 %v700, 64
      %v1077 = vpop.permute.xlu0 %1076
      %1078 = vrot.lane.b32.xlu0 %v711, 64
      %v1079 = vpop.permute.xlu0 %1078
      %1080 = vrot.lane.b32.xlu0 %v713, 64
      %v1081 = vpop.permute.xlu0 %1080
      %vm1098 = vcmask 64512
      %v1099 = vsel %vm1098, %v552, %v715
      %v1100 = vsel %vm1098, %v553, %v717
      %v1101 = vsel %vm1098, %v555, %v719
      %v1102 = vsel %vm1098, %v556, %v721
      %v1103 = vsel %vm1098, %v558, %v723
      %v1104 = vsel %vm1098, %v559, %v725
      %v1105 = vsel %vm1098, %v561, %v727
      %v1106 = vsel %vm1098, %v562, %v729
      %v1107 = vsel %vm1098, %v564, %v731
      %v1108 = vsel %vm1098, %v565, %v733
      %v1109 = vsel %vm1098, %v567, %v735
      %v1110 = vsel %vm1098, %v568, %v737
      %v1111 = vsel %vm1098, %v570, %v739
      %v1112 = vsel %vm1098, %v571, %v741
      %v1113 = vsel %vm1098, %v573, %v743
      %v1114 = vsel %vm1098, %v574, %v745
      %vm1115 = vcmask 130048
      %v1116 = vsel %vm1115, %v1099, %v763
      %v1117 = vsel %vm1115, %v1100, %v765
      %v1118 = vsel %vm1115, %v1101, %v767
      %v1119 = vsel %vm1115, %v1102, %v769
      %v1120 = vsel %vm1115, %v1103, %v771
      %v1121 = vsel %vm1115, %v1104, %v773
      %v1122 = vsel %vm1115, %v1105, %v775
      %v1123 = vsel %vm1115, %v1106, %v777
      %v1124 = vsel %vm1115, %v1107, %v779
      %v1125 = vsel %vm1115, %v1108, %v781
      %v1126 = vsel %vm1115, %v1109, %v783
      %v1127 = vsel %vm1115, %v1110, %v785
      %v1128 = vsel %vm1115, %v1111, %v787
      %v1129 = vsel %vm1115, %v1112, %v789
      %v1130 = vsel %vm1115, %v1113, %v791
      %v1131 = vsel %vm1115, %v1114, %v793
      %vm1132 = vcmask 195584
      %v1133 = vsel %vm1132, %v1116, %v811
      %v1134 = vsel %vm1132, %v1117, %v813
      %v1135 = vsel %vm1132, %v1118, %v815
      %v1136 = vsel %vm1132, %v1119, %v817
      %v1137 = vsel %vm1132, %v1120, %v819
      %v1138 = vsel %vm1132, %v1121, %v821
      %v1139 = vsel %vm1132, %v1122, %v823
      %v1140 = vsel %vm1132, %v1123, %v825
      %v1141 = vsel %vm1132, %v1124, %v827
      %v1142 = vsel %vm1132, %v1125, %v829
      %v1143 = vsel %vm1132, %v1126, %v831
      %v1144 = vsel %vm1132, %v1127, %v833
      %v1145 = vsel %vm1132, %v1128, %v835
      %v1146 = vsel %vm1132, %v1129, %v837
      %v1147 = vsel %vm1132, %v1130, %v839
      %v1148 = vsel %vm1132, %v1131, %v841
      %vm1149 = vcmask 261120
      %v1150 = vsel %vm1149, %v1133, %v859
      %v1151 = vsel %vm1149, %v1134, %v861
      %v1152 = vsel %vm1149, %v1135, %v863
      %v1153 = vsel %vm1149, %v1136, %v865
      %v1154 = vsel %vm1149, %v1137, %v867
      %v1155 = vsel %vm1149, %v1138, %v869
      %v1156 = vsel %vm1149, %v1139, %v871
      %v1157 = vsel %vm1149, %v1140, %v873
      %v1158 = vsel %vm1149, %v1141, %v875
      %v1159 = vsel %vm1149, %v1142, %v877
      %v1160 = vsel %vm1149, %v1143, %v879
      %v1161 = vsel %vm1149, %v1144, %v881
      %v1162 = vsel %vm1149, %v1145, %v883
      %v1163 = vsel %vm1149, %v1146, %v885
      %v1164 = vsel %vm1149, %v1147, %v887
      %v1165 = vsel %vm1149, %v1148, %v889
      %vm1166 = vcmask 326656
      %v1167 = vsel %vm1166, %v1150, %v907
      %v1168 = vsel %vm1166, %v1151, %v909
      %v1169 = vsel %vm1166, %v1152, %v911
      %v1170 = vsel %vm1166, %v1153, %v913
      %v1171 = vsel %vm1166, %v1154, %v915
      %v1172 = vsel %vm1166, %v1155, %v917
      %v1173 = vsel %vm1166, %v1156, %v919
      %v1174 = vsel %vm1166, %v1157, %v921
      %v1175 = vsel %vm1166, %v1158, %v923
      %v1176 = vsel %vm1166, %v1159, %v925
      %v1177 = vsel %vm1166, %v1160, %v927
      %v1178 = vsel %vm1166, %v1161, %v929
      %v1179 = vsel %vm1166, %v1162, %v931
      %v1180 = vsel %vm1166, %v1163, %v933
      %v1181 = vsel %vm1166, %v1164, %v935
      %v1182 = vsel %vm1166, %v1165, %v937
      %vm1183 = vcmask 392192
      %v1184 = vsel %vm1183, %v1167, %v955
      %v1185 = vsel %vm1183, %v1168, %v957
      %v1186 = vsel %vm1183, %v1169, %v959
      %v1187 = vsel %vm1183, %v1170, %v961
      %v1188 = vsel %vm1183, %v1171, %v963
      %v1189 = vsel %vm1183, %v1172, %v965
      %v1190 = vsel %vm1183, %v1173, %v967
      %v1191 = vsel %vm1183, %v1174, %v969
      %v1192 = vsel %vm1183, %v1175, %v971
      %v1193 = vsel %vm1183, %v1176, %v973
      %v1194 = vsel %vm1183, %v1177, %v975
      %v1195 = vsel %vm1183, %v1178, %v977
      %v1196 = vsel %vm1183, %v1179, %v979
      %v1197 = vsel %vm1183, %v1180, %v981
      %v1198 = vsel %vm1183, %v1181, %v983
      %v1199 = vsel %vm1183, %v1182, %v985
      %vm1200 = vcmask 457728
      %v1201 = vsel %vm1200, %v1184, %v1003
      %v1202 = vsel %vm1200, %v1185, %v1005
      %v1203 = vsel %vm1200, %v1186, %v1007
      %v1204 = vsel %vm1200, %v1187, %v1009
      %v1205 = vsel %vm1200, %v1188, %v1011
      %v1206 = vsel %vm1200, %v1189, %v1013
      %v1207 = vsel %vm1200, %v1190, %v1015
      %v1208 = vsel %vm1200, %v1191, %v1017
      %v1209 = vsel %vm1200, %v1192, %v1019
      %v1210 = vsel %vm1200, %v1193, %v1021
      %v1211 = vsel %vm1200, %v1194, %v1023
      %v1212 = vsel %vm1200, %v1195, %v1025
      %v1213 = vsel %vm1200, %v1196, %v1027
      %v1214 = vsel %vm1200, %v1197, %v1029
      %v1215 = vsel %vm1200, %v1198, %v1031
      %v1216 = vsel %vm1200, %v1199, %v1033
      %vm1217 = vcmask 523264
      %v1218 = vsel %vm1217, %v1201, %v1051
      %v1219 = vsel %vm1217, %v1202, %v1053
      %v1220 = vsel %vm1217, %v1203, %v1055
      %v1221 = vsel %vm1217, %v1204, %v1057
      %v1222 = vsel %vm1217, %v1205, %v1059
      %v1223 = vsel %vm1217, %v1206, %v1061
      %v1224 = vsel %vm1217, %v1207, %v1063
      %v1225 = vsel %vm1217, %v1208, %v1065
      %v1226 = vsel %vm1217, %v1209, %v1067
      %v1227 = vsel %vm1217, %v1210, %v1069
      %v1228 = vsel %vm1217, %v1211, %v1071
      %v1229 = vsel %vm1217, %v1212, %v1073
      %v1230 = vsel %vm1217, %v1213, %v1075
      %v1231 = vsel %vm1217, %v1214, %v1077
      %v1232 = vsel %vm1217, %v1215, %v1079
      %v1233 = vsel %vm1217, %v1216, %v1081
      %v1234 = vpack.c.bf16 %v1219, %v1218
      %v1235 = vpack.c.bf16 %v1221, %v1220
      %v1236 = vpack.c.bf16 %v1223, %v1222
      %v1237 = vpack.c.bf16 %v1225, %v1224
      %v1238 = vpack.c.bf16 %v1227, %v1226
      %v1239 = vpack.c.bf16 %v1229, %v1228
      %v1240 = vpack.c.bf16 %v1231, %v1230
      %v1241 = vpack.c.bf16 %v1233, %v1232
      %v1242 = vld [vmem:[%s3] sm:$0xf]
      %v1243 = vld [vmem:[%s3 + $0x4] sm:$0xf]
      %v1244 = vld [vmem:[%s3 + $0x8] sm:$0xf]
      %v1245 = vld [vmem:[%s3 + $0xc] sm:$0xf]
      %v1246 = vld [vmem:[%s3 + $0x10] sm:$0xf]
      %v1247 = vld [vmem:[%s3 + $0x14] sm:$0xf]
      %v1248 = vld [vmem:[%s3 + $0x18] sm:$0xf]
      %v1249 = vld [vmem:[%s3 + $0x1c] sm:$0xf]
      %v1250 = vld [vmem:[%s3 + $0x20] sm:$0xf]
      %v1260 = vunpack.c.l.b16 %v1242
      %v1261 = vunpack.c.l.b16 %v1243
      %v1262 = vunpack.c.l.b16 %v1244
      %v1263 = vunpack.c.l.b16 %v1245
      %v1264 = vunpack.c.l.b16 %v1246
      %v1265 = vunpack.c.l.b16 %v1247
      %v1266 = vunpack.c.l.b16 %v1248
      %v1267 = vunpack.c.l.b16 %v1249
      %v1268 = vunpack.c.l.b16 %v1250
      %v1269 = vpack.c.b16 %v1261, %v1260
      %v1270 = vpack.c.b16 %v1263, %v1262
      %v1271 = vpack.c.b16 %v1265, %v1264
      %v1272 = vpack.c.b16 %v1267, %v1266
      %v1273 = vpack.c.b16 %v1268, %v1268
      %vm1278 = vcmask 588800
      %v1280 = vsel %vm1278, %v1234, 0
      %v1283 = vsel %vm1278, %v1235, 0
      %v1286 = vsel %vm1278, %v1236, 0
      %v1289 = vsel %vm1278, %v1237, 0
      %v1292 = vsel %vm1278, %v1238, 0
      %v1295 = vsel %vm1278, %v1239, 0
      %v1298 = vsel %vm1278, %v1240, 0
      %v1301 = vsel %vm1278, %v1241, 0
      %vm1303 = vcmask 1043456
      %v1305 = vsel %vm1303, %v1273, 0
      %1307 = vmatprep.subr.bf16.mxu0 0
      %1308 = vmatpush1.bf16.msra.mxu0 %v1269
      %1309 = vmatprep.subr.bf16.mxu0 0
      %1310 = vmatpush1.bf16.msra.mxu0 %v1270
      %1311 = vmatprep.subr.bf16.mxu0 0
      %1312 = vmatpush1.bf16.msra.mxu0 %v1271
      %1313 = vmatprep.subr.bf16.mxu0 0
      %1314 = vmatpush1.bf16.msra.mxu0 %v1272
      %1315 = vmatprep.subr.bf16.mxu0 0
      %1316 = vmatpush1.bf16.msra.mxu0 %v1305
      %1317 = vmatprep.subr.bf16.mxu0 0
      %1318 = vmatpush1.bf16.msra.mxu0 0
      %1319 = vmatprep.subr.bf16.mxu0 0
      %1320 = vmatpush1.bf16.msra.mxu0 0
      %1321 = vmatprep.subr.bf16.mxu0 0
      %1322 = vmatpush1.bf16.msra.mxu0 0
      %1323 = vmatprep.subr.bf16.mxu0 0
      %1324 = vmatpush1.bf16.msra.mxu0 0
      %1325 = vmatprep.subr.bf16.mxu0 0
      %1326 = vmatpush1.bf16.msra.mxu0 0
      %1327 = vmatprep.subr.bf16.mxu0 0
      %1328 = vmatpush1.bf16.msra.mxu0 0
      %1329 = vmatprep.subr.bf16.mxu0 0
      %1330 = vmatpush1.bf16.msra.mxu0 0
      %1331 = vmatprep.subr.bf16.mxu0 0
      %1332 = vmatpush1.bf16.msra.mxu0 0
      %1333 = vmatprep.subr.bf16.mxu0 0
      %1334 = vmatpush1.bf16.msra.mxu0 0
      %1335 = vmatprep.subr.bf16.mxu0 0
      %1336 = vmatpush1.bf16.msra.mxu0 0
      %1337 = vmatprep.subr.bf16.mxu0 0
      %1338 = vmatpush1.bf16.msra.mxu0 0
      %1339 = vmatprep.mubr.bf16.mxu0 0
      %1340 = vmatmul.mubr.bf16.gmra.mrb[0].mxu0 %v1280
      %v1341 = vpop.f32.mrb[0].mxu0
      %v1342 = vadd.f32 0.0, %v1341
      %v1343 = vpop.f32.mrb[0].mxu0
      %v1344 = vpop.f32.mrb[0].mxu0
      %v1345 = vadd.f32 0.0, %v1344
      %v1346 = vpop.f32.mrb[0].mxu0
      %1347 = vmatprep.mubr.bf16.mxu0 0
      %1348 = vmatmul.mubr.bf16.gmra.mrb[0].mxu0 %v1283
      %v1349 = vpop.f32.mrb[0].mxu0
      %v1350 = vadd.f32 0.0, %v1349
      %v1351 = vpop.f32.mrb[0].mxu0
      %v1352 = vpop.f32.mrb[0].mxu0
      %v1353 = vadd.f32 0.0, %v1352
      %v1354 = vpop.f32.mrb[0].mxu0
      %1355 = vmatprep.mubr.bf16.mxu0 0
      %1356 = vmatmul.mubr.bf16.gmra.mrb[0].mxu0 %v1286
      %v1357 = vpop.f32.mrb[0].mxu0
      %v1358 = vadd.f32 0.0, %v1357
      %v1359 = vpop.f32.mrb[0].mxu0
      %v1360 = vpop.f32.mrb[0].mxu0
      %v1361 = vadd.f32 0.0, %v1360
      %v1362 = vpop.f32.mrb[0].mxu0
      %1363 = vmatprep.mubr.bf16.mxu0 0
      %1364 = vmatmul.mubr.bf16.gmra.mrb[0].mxu0 %v1289
      %v1365 = vpop.f32.mrb[0].mxu0
      %v1366 = vadd.f32 0.0, %v1365
      %v1367 = vpop.f32.mrb[0].mxu0
      %v1368 = vpop.f32.mrb[0].mxu0
      %v1369 = vadd.f32 0.0, %v1368
      %v1370 = vpop.f32.mrb[0].mxu0
      %1371 = vmatprep.mubr.bf16.mxu0 0
      %1372 = vmatmul.mubr.bf16.gmra.mrb[0].mxu0 %v1292
      %v1373 = vpop.f32.mrb[0].mxu0
      %v1374 = vadd.f32 0.0, %v1373
      %v1375 = vpop.f32.mrb[0].mxu0
      %v1376 = vpop.f32.mrb[0].mxu0
      %v1377 = vadd.f32 0.0, %v1376
      %v1378 = vpop.f32.mrb[0].mxu0
      %1379 = vmatprep.mubr.bf16.mxu0 0
      %1380 = vmatmul.mubr.bf16.gmra.mrb[0].mxu0 %v1295
      %v1381 = vpop.f32.mrb[0].mxu0
      %v1382 = vadd.f32 0.0, %v1381
      %v1383 = vpop.f32.mrb[0].mxu0
      %v1384 = vpop.f32.mrb[0].mxu0
      %v1385 = vadd.f32 0.0, %v1384
      %v1386 = vpop.f32.mrb[0].mxu0
      %1387 = vmatprep.mubr.bf16.mxu0 0
      %1388 = vmatmul.mubr.bf16.gmra.mrb[0].mxu0 %v1298
      %v1389 = vpop.f32.mrb[0].mxu0
      %v1390 = vadd.f32 0.0, %v1389
      %v1391 = vpop.f32.mrb[0].mxu0
      %v1392 = vpop.f32.mrb[0].mxu0
      %v1393 = vadd.f32 0.0, %v1392
      %v1394 = vpop.f32.mrb[0].mxu0
      %1395 = vmatprep.mubr.bf16.mxu0 0
      %1396 = vmatmul.mubr.bf16.gmra.mrb[0].mxu0 %v1301
      %v1397 = vpop.f32.mrb[0].mxu0
      %v1398 = vadd.f32 0.0, %v1397
      %v1399 = vpop.f32.mrb[0].mxu0
      %v1400 = vpop.f32.mrb[0].mxu0
      %v1401 = vadd.f32 0.0, %v1400
      %v1402 = vpop.f32.mrb[0].mxu0
      %1403 = vdwg.mxu0
      // Predicated region
      $region37: #{unet_expansive_block.5} parent=35 // pred_check
        %p1404 = pneg %p511
      $region38: #{unet_expansive_block.5} parent=35 // pred_check_branch
        %1406 = sbr.rel (%p1404) target = $region40
      $region39: #{unet_expansive_block.5} parent=35 // pred_region
        %vm1407 = vcmask 57344
        %1408 = vst.msk [vmem:[%s433] sm:$0x1] %vm1407, 0.0
        %1409 = vst.msk [vmem:[%s436] sm:$0x1] %vm1407, 0.0
      $region40: #{unet_expansive_block.5} parent=35 // pred_fallthru
        _
      %v1410 = vld [vmem:[%s433] sm:$0x1]
      %v1411 = vsel %vm1098, %v1342, 0.0
      %v1412 = vsel %vm1098, %v1345, 0.0
      %v1413 = vadd.f32 %v1411, %v1412
      %v1414 = vsel %vm1098, %v1350, 0.0
      %v1415 = vadd.f32 %v1413, %v1414
      %v1416 = vsel %vm1098, %v1353, 0.0
      %v1417 = vadd.f32 %v1415, %v1416
      %v1418 = vsel %vm1098, %v1358, 0.0
      %v1419 = vadd.f32 %v1417, %v1418
      %v1420 = vsel %vm1098, %v1361, 0.0
      %v1421 = vadd.f32 %v1419, %v1420
      %v1422 = vsel %vm1098, %v1366, 0.0
      %v1423 = vadd.f32 %v1421, %v1422
      %v1424 = vsel %vm1098, %v1369, 0.0
      %v1425 = vadd.f32 %v1423, %v1424
      %v1426 = vsel %vm1098, %v1374, 0.0
      %v1427 = vadd.f32 %v1425, %v1426
      %v1428 = vsel %vm1098, %v1377, 0.0
      %v1429 = vadd.f32 %v1427, %v1428
      %v1430 = vsel %vm1098, %v1382, 0.0
      %v1431 = vadd.f32 %v1429, %v1430
      %v1432 = vsel %vm1098, %v1385, 0.0
      %v1433 = vadd.f32 %v1431, %v1432
      %v1434 = vsel %vm1098, %v1390, 0.0
      %v1435 = vadd.f32 %v1433, %v1434
      %v1436 = vsel %vm1098, %v1393, 0.0
      %v1437 = vadd.f32 %v1435, %v1436
      %v1438 = vsel %vm1098, %v1398, 0.0
      %v1439 = vadd.f32 %v1437, %v1438
      %v1440 = vsel %vm1098, %v1401, 0.0
      %v1441 = vadd.f32 %v1439, %v1440
      %v1442 = vrot.slane %v1441, 4
      %v1443 = vadd.f32 %v1441, %v1442
      %v1444 = vrot.slane %v1443, 2
      %v1445 = vadd.f32 %v1443, %v1444
      %v1446 = vrot.slane %v1445, 1
      %v1447 = vadd.f32 %v1445, %v1446
      %v1448 = vadd.f32 %v1410, %v1447
      %vm1449 = vcmask 57344
      %1450 = vst.msk [vmem:[%s433] sm:$0x1] %vm1449, %v1448
      %v1451 = vld [vmem:[%s436] sm:$0x1]
      %v1452 = vmul.f32 %v1342, %v1342
      %v1453 = vmul.f32 %v1345, %v1345
      %v1454 = vmul.f32 %v1350, %v1350
      %v1455 = vmul.f32 %v1353, %v1353
      %v1456 = vmul.f32 %v1358, %v1358
      %v1457 = vmul.f32 %v1361, %v1361
      %v1458 = vmul.f32 %v1366, %v1366
      %v1459 = vmul.f32 %v1369, %v1369
      %v1460 = vmul.f32 %v1374, %v1374
      %v1461 = vmul.f32 %v1377, %v1377
      %v1462 = vmul.f32 %v1382, %v1382
      %v1463 = vmul.f32 %v1385, %v1385
      %v1464 = vmul.f32 %v1390, %v1390
      %v1465 = vmul.f32 %v1393, %v1393
      %v1466 = vmul.f32 %v1398, %v1398
      %v1467 = vmul.f32 %v1401, %v1401
      %v1468 = vsel %vm1098, %v1452, 0.0
      %v1469 = vsel %vm1098, %v1453, 0.0
      %v1470 = vadd.f32 %v1468, %v1469
      %v1471 = vsel %vm1098, %v1454, 0.0
      %v1472 = vadd.f32 %v1470, %v1471
      %v1473 = vsel %vm1098, %v1455, 0.0
      %v1474 = vadd.f32 %v1472, %v1473
      %v1475 = vsel %vm1098, %v1456, 0.0
      %v1476 = vadd.f32 %v1474, %v1475
      %v1477 = vsel %vm1098, %v1457, 0.0
      %v1478 = vadd.f32 %v1476, %v1477
      %v1479 = vsel %vm1098, %v1458, 0.0
      %v1480 = vadd.f32 %v1478, %v1479
      %v1481 = vsel %vm1098, %v1459, 0.0
      %v1482 = vadd.f32 %v1480, %v1481
      %v1483 = vsel %vm1098, %v1460, 0.0
      %v1484 = vadd.f32 %v1482, %v1483
      %v1485 = vsel %vm1098, %v1461, 0.0
      %v1486 = vadd.f32 %v1484, %v1485
      %v1487 = vsel %vm1098, %v1462, 0.0
      %v1488 = vadd.f32 %v1486, %v1487
      %v1489 = vsel %vm1098, %v1463, 0.0
      %v1490 = vadd.f32 %v1488, %v1489
      %v1491 = vsel %vm1098, %v1464, 0.0
      %v1492 = vadd.f32 %v1490, %v1491
      %v1493 = vsel %vm1098, %v1465, 0.0
      %v1494 = vadd.f32 %v1492, %v1493
      %v1495 = vsel %vm1098, %v1466, 0.0
      %v1496 = vadd.f32 %v1494, %v1495
      %v1497 = vsel %vm1098, %v1467, 0.0
      %v1498 = vadd.f32 %v1496, %v1497
      %v1499 = vrot.slane %v1498, 4
      %v1500 = vadd.f32 %v1498, %v1499
      %v1501 = vrot.slane %v1500, 2
      %v1502 = vadd.f32 %v1500, %v1501
      %v1503 = vrot.slane %v1502, 1
      %v1504 = vadd.f32 %v1502, %v1503
      %v1505 = vadd.f32 %v1451, %v1504
      %1506 = vst.msk [vmem:[%s436] sm:$0x1] %vm1449, %v1505
      %v1507 = vpack.c.bf16 %v1345, %v1342
      %v1508 = vpack.c.bf16 %v1353, %v1350
      %v1509 = vpack.c.bf16 %v1361, %v1358
      %v1510 = vpack.c.bf16 %v1369, %v1366
      %v1511 = vpack.c.bf16 %v1377, %v1374
      %v1512 = vpack.c.bf16 %v1385, %v1382
      %v1513 = vpack.c.bf16 %v1393, %v1390
      %v1514 = vpack.c.bf16 %v1401, %v1398
      %v1523 = vunpack.c.l.b16 %v1507
      %v1524 = vunpack.c.h.b16 %v1507
      %v1525 = vunpack.c.l.b16 %v1508
      %v1526 = vunpack.c.h.b16 %v1508
      %v1527 = vunpack.c.l.b16 %v1509
      %v1528 = vunpack.c.h.b16 %v1509
      %v1529 = vunpack.c.l.b16 %v1510
      %v1530 = vunpack.c.h.b16 %v1510
      %v1531 = vunpack.c.l.b16 %v1511
      %v1532 = vunpack.c.h.b16 %v1511
      %v1533 = vunpack.c.l.b16 %v1512
      %v1534 = vunpack.c.h.b16 %v1512
      %v1535 = vunpack.c.l.b16 %v1513
      %v1536 = vunpack.c.h.b16 %v1513
      %v1537 = vunpack.c.l.b16 %v1514
      %v1538 = vunpack.c.h.b16 %v1514
      %v1539 = vpack.c.b16 %v1523, %v1523
      %v1540 = vpack.c.b16 %v1524, %v1524
      %v1541 = vpack.c.b16 %v1525, %v1525
      %v1542 = vpack.c.b16 %v1526, %v1526
      %v1543 = vpack.c.b16 %v1527, %v1527
      %v1544 = vpack.c.b16 %v1528, %v1528
      %v1545 = vpack.c.b16 %v1529, %v1529
      %v1546 = vpack.c.b16 %v1530, %v1530
      %v1547 = vpack.c.b16 %v1531, %v1531
      %v1548 = vpack.c.b16 %v1532, %v1532
      %v1549 = vpack.c.b16 %v1533, %v1533
      %v1550 = vpack.c.b16 %v1534, %v1534
      %v1551 = vpack.c.b16 %v1535, %v1535
      %v1552 = vpack.c.b16 %v1536, %v1536
      %v1553 = vpack.c.b16 %v1537, %v1537
      %v1554 = vpack.c.b16 %v1538, %v1538
      %vm1555 = vsmask.f32 256
      %vm1556 = vsmask.f32 4368
      %vm1557 = vmor %vm1555, %vm1556
      %v1559 = vshrl.u32 %v1539, 16
      %v1561 = vrot.slane %v1559, 7
      %v1562 = vshll.u32 %v1539, 16
      %v1564 = vor.u32 %v1561, %v1562
      %v1565 = vrot.slane %v1561, 4
      %v1567 = vshrl.u32 %v1540, 16
      %v1569 = vrot.slane %v1567, 7
      %v1570 = vshll.u32 %v1540, 16
      %v1572 = vor.u32 %v1569, %v1570
      %v1573 = vsel %vm1557, %v1565, %v1572
      %v1574 = vrot.slane %v1569, 4
      %v1576 = vshrl.u32 %v1541, 16
      %v1578 = vrot.slane %v1576, 7
      %v1579 = vshll.u32 %v1541, 16
      %v1581 = vor.u32 %v1578, %v1579
      %v1582 = vrot.slane %v1578, 4
      %v1584 = vshrl.u32 %v1542, 16
      %v1586 = vrot.slane %v1584, 7
      %v1587 = vshll.u32 %v1542, 16
      %v1589 = vor.u32 %v1586, %v1587
      %v1590 = vsel %vm1557, %v1582, %v1589
      %v1591 = vrot.slane %v1586, 4
      %v1593 = vshrl.u32 %v1543, 16
      %v1595 = vrot.slane %v1593, 7
      %v1596 = vshll.u32 %v1543, 16
      %v1598 = vor.u32 %v1595, %v1596
      %v1599 = vrot.slane %v1595, 4
      %v1601 = vshrl.u32 %v1544, 16
      %v1603 = vrot.slane %v1601, 7
      %v1604 = vshll.u32 %v1544, 16
      %v1606 = vor.u32 %v1603, %v1604
      %v1607 = vsel %vm1557, %v1599, %v1606
      %v1608 = vrot.slane %v1603, 4
      %v1610 = vshrl.u32 %v1545, 16
      %v1612 = vrot.slane %v1610, 7
      %v1613 = vshll.u32 %v1545, 16
      %v1615 = vor.u32 %v1612, %v1613
      %v1616 = vrot.slane %v1612, 4
      %v1618 = vshrl.u32 %v1546, 16
      %v1620 = vrot.slane %v1618, 7
      %v1621 = vshll.u32 %v1546, 16
      %v1623 = vor.u32 %v1620, %v1621
      %v1624 = vsel %vm1557, %v1616, %v1623
      %v1625 = vrot.slane %v1620, 4
      %v1627 = vshrl.u32 %v1547, 16
      %v1629 = vrot.slane %v1627, 7
      %v1630 = vshll.u32 %v1547, 16
      %v1632 = vor.u32 %v1629, %v1630
      %v1633 = vrot.slane %v1629, 4
      %v1635 = vshrl.u32 %v1548, 16
      %v1637 = vrot.slane %v1635, 7
      %v1638 = vshll.u32 %v1548, 16
      %v1640 = vor.u32 %v1637, %v1638
      %v1641 = vsel %vm1557, %v1633, %v1640
      %v1642 = vrot.slane %v1637, 4
      %v1644 = vshrl.u32 %v1549, 16
      %v1646 = vrot.slane %v1644, 7
      %v1647 = vshll.u32 %v1549, 16
      %v1649 = vor.u32 %v1646, %v1647
      %v1650 = vrot.slane %v1646, 4
      %v1652 = vshrl.u32 %v1550, 16
      %v1654 = vrot.slane %v1652, 7
      %v1655 = vshll.u32 %v1550, 16
      %v1657 = vor.u32 %v1654, %v1655
      %v1658 = vsel %vm1557, %v1650, %v1657
      %v1659 = vrot.slane %v1654, 4
      %v1661 = vshrl.u32 %v1551, 16
      %v1663 = vrot.slane %v1661, 7
      %v1664 = vshll.u32 %v1551, 16
      %v1666 = vor.u32 %v1663, %v1664
      %v1667 = vrot.slane %v1663, 4
      %v1669 = vshrl.u32 %v1552, 16
      %v1671 = vrot.slane %v1669, 7
      %v1672 = vshll.u32 %v1552, 16
      %v1674 = vor.u32 %v1671, %v1672
      %v1675 = vsel %vm1557, %v1667, %v1674
      %v1676 = vrot.slane %v1671, 4
      %v1678 = vshrl.u32 %v1553, 16
      %v1680 = vrot.slane %v1678, 7
      %v1681 = vshll.u32 %v1553, 16
      %v1683 = vor.u32 %v1680, %v1681
      %v1684 = vrot.slane %v1680, 4
      %v1686 = vshrl.u32 %v1554, 16
      %v1688 = vrot.slane %v1686, 7
      %v1689 = vshll.u32 %v1554, 16
      %v1691 = vor.u32 %v1688, %v1689
      %v1692 = vsel %vm1557, %v1684, %v1691
      %v1693 = vrot.slane %v1688, 4
      %vm1718 = vcmask 60416
      %vm1719 = vsmask.f32 7938
      %vm1720 = vmand %vm1718, %vm1719
      %v1721 = vld [vmem:[%s429] sm:$0xf]
      %v1722 = vsel %vm1720, %v1564, %v1721
      %1723 = vst [vmem:[%s429] sm:$0xf] %v1722
      %vm1724 = vcmask 60416
      %1725 = vst.msk [vmem:[%s429 + $0x4] sm:$0xf] %vm1724, %v1573
      %vm1726 = vcmask 57344
      %vm1727 = vmand %vm1726, %vm1555
      %v1728 = vld [vmem:[%s429 + $0x8] sm:$0x1]
      %v1729 = vsel %vm1727, %v1574, %v1728
      %1730 = vst [vmem:[%s429 + $0x8] sm:$0x1] %v1729
      %v1731 = vld [vmem:[%s429 + $0xc] sm:$0xf]
      %v1732 = vsel %vm1720, %v1581, %v1731
      %1733 = vst [vmem:[%s429 + $0xc] sm:$0xf] %v1732
      %1734 = vst.msk [vmem:[%s429 + $0x10] sm:$0xf] %vm1724, %v1590
      %v1735 = vld [vmem:[%s429 + $0x14] sm:$0x1]
      %v1736 = vsel %vm1727, %v1591, %v1735
      %1737 = vst [vmem:[%s429 + $0x14] sm:$0x1] %v1736
      %v1738 = vld [vmem:[%s429 + $0x18] sm:$0xf]
      %v1739 = vsel %vm1720, %v1598, %v1738
      %1740 = vst [vmem:[%s429 + $0x18] sm:$0xf] %v1739
      %1741 = vst.msk [vmem:[%s429 + $0x1c] sm:$0xf] %vm1724, %v1607
      %v1742 = vld [vmem:[%s429 + $0x20] sm:$0x1]
      %v1743 = vsel %vm1727, %v1608, %v1742
      %1744 = vst [vmem:[%s429 + $0x20] sm:$0x1] %v1743
      %v1745 = vld [vmem:[%s429 + $0x24] sm:$0xf]
      %v1746 = vsel %vm1720, %v1615, %v1745
      %1747 = vst [vmem:[%s429 + $0x24] sm:$0xf] %v1746
      %1748 = vst.msk [vmem:[%s429 + $0x28] sm:$0xf] %vm1724, %v1624
      %v1749 = vld [vmem:[%s429 + $0x2c] sm:$0x1]
      %v1750 = vsel %vm1727, %v1625, %v1749
      %1751 = vst [vmem:[%s429 + $0x2c] sm:$0x1] %v1750
      %v1752 = vld [vmem:[%s429 + $0x30] sm:$0xf]
      %v1753 = vsel %vm1720, %v1632, %v1752
      %1754 = vst [vmem:[%s429 + $0x30] sm:$0xf] %v1753
      %1755 = vst.msk [vmem:[%s429 + $0x34] sm:$0xf] %vm1724, %v1641
      %v1756 = vld [vmem:[%s429 + $0x38] sm:$0x1]
      %v1757 = vsel %vm1727, %v1642, %v1756
      %1758 = vst [vmem:[%s429 + $0x38] sm:$0x1] %v1757
      %v1759 = vld [vmem:[%s429 + $0x3c] sm:$0xf]
      %v1760 = vsel %vm1720, %v1649, %v1759
      %1761 = vst [vmem:[%s429 + $0x3c] sm:$0xf] %v1760
      %1762 = vst.msk [vmem:[%s429 + $0x40] sm:$0xf] %vm1724, %v1658
      %v1763 = vld [vmem:[%s429 + $0x44] sm:$0x1]
      %v1764 = vsel %vm1727, %v1659, %v1763
      %1765 = vst [vmem:[%s429 + $0x44] sm:$0x1] %v1764
      %v1766 = vld [vmem:[%s429 + $0x48] sm:$0xf]
      %v1767 = vsel %vm1720, %v1666, %v1766
      %1768 = vst [vmem:[%s429 + $0x48] sm:$0xf] %v1767
      %1769 = vst.msk [vmem:[%s429 + $0x4c] sm:$0xf] %vm1724, %v1675
      %v1770 = vld [vmem:[%s429 + $0x50] sm:$0x1]
      %v1771 = vsel %vm1727, %v1676, %v1770
      %1772 = vst [vmem:[%s429 + $0x50] sm:$0x1] %v1771
      %v1773 = vld [vmem:[%s429 + $0x54] sm:$0xf]
      %v1774 = vsel %vm1720, %v1683, %v1773
      %1775 = vst [vmem:[%s429 + $0x54] sm:$0xf] %v1774
      %1776 = vst.msk [vmem:[%s429 + $0x58] sm:$0xf] %vm1724, %v1692
      %v1777 = vld [vmem:[%s429 + $0x5c] sm:$0x1]
      %v1778 = vsel %vm1727, %v1693, %v1777
      %1779 = vst [vmem:[%s429 + $0x5c] sm:$0x1] %v1778
      %v1780 = vld [vmem:[%s429] sm:$0x1]
      %v1781 = vsel %vm1727, 0, %v1780
      %1782 = vst [vmem:[%s429] sm:$0x1] %v1781
      %v1783 = vld [vmem:[%s429 + $0xc] sm:$0x1]
      %v1784 = vsel %vm1727, 0, %v1783
      %1785 = vst [vmem:[%s429 + $0xc] sm:$0x1] %v1784
      %v1786 = vld [vmem:[%s429 + $0x18] sm:$0x1]
      %v1787 = vsel %vm1727, 0, %v1786
      %1788 = vst [vmem:[%s429 + $0x18] sm:$0x1] %v1787
      %v1789 = vld [vmem:[%s429 + $0x24] sm:$0x1]
      %v1790 = vsel %vm1727, 0, %v1789
      %1791 = vst [vmem:[%s429 + $0x24] sm:$0x1] %v1790
      %v1792 = vld [vmem:[%s429 + $0x30] sm:$0x1]
      %v1793 = vsel %vm1727, 0, %v1792
      %1794 = vst [vmem:[%s429 + $0x30] sm:$0x1] %v1793
      %v1795 = vld [vmem:[%s429 + $0x3c] sm:$0x1]
      %v1796 = vsel %vm1727, 0, %v1795
      %1797 = vst [vmem:[%s429 + $0x3c] sm:$0x1] %v1796
      %v1798 = vld [vmem:[%s429 + $0x48] sm:$0x1]
      %v1799 = vsel %vm1727, 0, %v1798
      %1800 = vst [vmem:[%s429 + $0x48] sm:$0x1] %v1799
      %v1801 = vld [vmem:[%s429 + $0x54] sm:$0x1]
      %v1802 = vsel %vm1727, 0, %v1801
      %1803 = vst [vmem:[%s429 + $0x54] sm:$0x1] %v1802
      %vm1804 = vmand %vm1726, %vm1719
      %v1805 = vld [vmem:[%s429 + $0x8] sm:$0x1]
      %v1806 = vsel %vm1804, 0, %v1805
      %1807 = vst [vmem:[%s429 + $0x8] sm:$0x1] %v1806
      %v1808 = vld [vmem:[%s429 + $0x14] sm:$0x1]
      %v1809 = vsel %vm1804, 0, %v1808
      %1810 = vst [vmem:[%s429 + $0x14] sm:$0x1] %v1809
      %v1811 = vld [vmem:[%s429 + $0x20] sm:$0x1]
      %v1812 = vsel %vm1804, 0, %v1811
      %1813 = vst [vmem:[%s429 + $0x20] sm:$0x1] %v1812
      %v1814 = vld [vmem:[%s429 + $0x2c] sm:$0x1]
      %v1815 = vsel %vm1804, 0, %v1814
      %1816 = vst [vmem:[%s429 + $0x2c] sm:$0x1] %v1815
      %v1817 = vld [vmem:[%s429 + $0x38] sm:$0x1]
      %v1818 = vsel %vm1804, 0, %v1817
      %1819 = vst [vmem:[%s429 + $0x38] sm:$0x1] %v1818
      %v1820 = vld [vmem:[%s429 + $0x44] sm:$0x1]
      %v1821 = vsel %vm1804, 0, %v1820
      %1822 = vst [vmem:[%s429 + $0x44] sm:$0x1] %v1821
      %v1823 = vld [vmem:[%s429 + $0x50] sm:$0x1]
      %v1824 = vsel %vm1804, 0, %v1823
      %1825 = vst [vmem:[%s429 + $0x50] sm:$0x1] %v1824
      %v1826 = vld [vmem:[%s429 + $0x5c] sm:$0x1]
      %v1827 = vsel %vm1804, 0, %v1826
      %1828 = vst [vmem:[%s429 + $0x5c] sm:$0x1] %v1827
      %s1829 = smul.u32 8, %s23
      %p1830 = scmp.lt.s32.totalorder %s22, 1
      %s1831 = scalar_select %p1830, %s22, 1
      %p1832 = scmp.lt.s32.totalorder %s1829, 15
      %s1833 = scalar_select %p1832, %s1829, 15
      %s1834 = smul.addr %s1833, 3
      %s1835 = smul.addr %s1831, 48
      %s1836 = sadd.s32 %s1834, %s1835
      %s1837 = smul.addr %s1836, 4
      %s1838 = scalar_lea.vmem %s4, %s1837
      %p1839 = scmp.lt.s32.totalorder %s22, 1
      %s1840 = scalar_select %p1839, %s22, 1
      %s1841 = scalar_lea.vmem %s5, %s1840
      %p1842 = scmp.lt.s32.totalorder %s22, 1
      %s1843 = scalar_select %p1842, %s22, 1
      %s1844 = scalar_lea.vmem %s6, %s1843
      // Predicated region
      $region41: #{unet_expansive_block.5} parent=35 // pred_check
        %p1845 = pneg %p171
      $region42: #{unet_expansive_block.5} parent=35 // pred_check_branch
        %1847 = sbr.rel (%p1845) target = $region44
      $region43: #{unet_expansive_block.5} parent=35 // pred_region
        %s1848 = smul.u32 8, %s23
      $region44: #{unet_expansive_block.5} parent=35 // pred_fallthru
        _
      // Predicated region
      $region45: #{unet_expansive_block.5} parent=35 // pred_check
        %p1849 = pneg %p197
      $region46: #{unet_expansive_block.5} parent=35 // pred_check_branch
        %1851 = sbr.rel (%p1849) target = $region48
      $region47: #{unet_expansive_block.5} parent=35 // pred_region
        _
      $region48: #{unet_expansive_block.5} parent=35 // pred_fallthru
        _
      // Predicated region
      $region49: #{unet_expansive_block.5} parent=35 // pred_check
        %p1852 = pneg %p223
      $region50: #{unet_expansive_block.5} parent=35 // pred_check_branch
        %1854 = sbr.rel (%p1852) target = $region52
      $region51: #{unet_expansive_block.5} parent=35 // pred_region
        _
      $region52: #{unet_expansive_block.5} parent=35 // pred_fallthru
        _
    $region36: #{unet_expansive_block.5} parent=5 // pred_fallthru
      _
    %p1855 = scmp.le.s32.totalorder 2, %s13
    // Predicated region
    $region53: #{unet_expansive_block.5} parent=5 // pred_check
      %p1856 = pneg %p1855
    $region54: #{unet_expansive_block.5} parent=5 // pred_check_branch
      %1858 = sbr.rel (%p1856) target = $region56
    $region55: #{unet_expansive_block.5} parent=5 // pred_region
      %s1859 = ssub.s32 %s13, 2
      // Predicated region
      $region57: #{unet_expansive_block.5} parent=55 // pred_check
        %p1860 = pneg %p177
      $region58: #{unet_expansive_block.5} parent=55 // pred_check_branch
        %1862 = sbr.rel (%p1860) target = $region60
      $region59: #{unet_expansive_block.5} parent=55 // pred_region
        %s1863 = smul.u32 8, %s25
        %p1864 = scmp.lt.s32.totalorder %s24, 1
        %s1865 = scalar_select %p1864, %s24, 1
        %p1866 = scmp.lt.s32.totalorder %s1863, 15
        %s1867 = scalar_select %p1866, %s1863, 15
        %s1868 = smul.addr %s1867, 3
        %s1869 = smul.addr %s1865, 48
        %s1870 = sadd.s32 %s1868, %s1869
        %s1871 = smul.addr %s1870, 4
        %s1872 = scalar_lea.vmem %s4, %s1871
      $region60: #{unet_expansive_block.5} parent=55 // pred_fallthru
        _
      // Predicated region
      $region61: #{unet_expansive_block.5} parent=55 // pred_check
        %p1873 = pneg %p203
      $region62: #{unet_expansive_block.5} parent=55 // pred_check_branch
        %1875 = sbr.rel (%p1873) target = $region64
      $region63: #{unet_expansive_block.5} parent=55 // pred_region
        %p1876 = scmp.lt.s32.totalorder %s24, 1
        %s1877 = scalar_select %p1876, %s24, 1
        %s1878 = scalar_lea.vmem %s5, %s1877
      $region64: #{unet_expansive_block.5} parent=55 // pred_fallthru
        _
      // Predicated region
      $region65: #{unet_expansive_block.5} parent=55 // pred_check
        %p1879 = pneg %p229
      $region66: #{unet_expansive_block.5} parent=55 // pred_check_branch
        %1881 = sbr.rel (%p1879) target = $region68
      $region67: #{unet_expansive_block.5} parent=55 // pred_region
        %p1882 = scmp.lt.s32.totalorder %s24, 1
        %s1883 = scalar_select %p1882, %s24, 1
        %s1884 = scalar_lea.vmem %s6, %s1883
      $region68: #{unet_expansive_block.5} parent=55 // pred_fallthru
        _
    $region56: #{unet_expansive_block.5} parent=5 // pred_fallthru
      _
  $region6: #{unet_expansive_block.5} parent=0 // loop_footer
    %s17 = sadd.s32 1, %s13
  $region7: #{unet_expansive_block.5} parent=0 // loop_footer_branch
    %12 = sbr.rel target = $region3
  $region8: #{unet_expansive_block.5} parent=0 // loop_exit
    _

// kernel: unet_expansive_block.6
$region0: #{unet_expansive_block.6}
  #allocation0 [shape = 'u32[]', space=smem, size = 0x4, offset = 0x4, fixed_abs, tag = 'smem constant byte address 0x4 - core index']
  #allocation1 [shape = 'u32[144,128]{1,0:T(1,128)}', space=vmem, size = 0x12000, scoped, tag = 'internal scratch']
  %s0 = inlined_call_operand.vmem [shape: bf16[2,16,18,8], index: 0, kind: input, shape index: {}, may-alias: {0,1,2}]
  %s1 = inlined_call_operand.vmem [shape: bf16[2,16,18,8], index: 1, kind: input, shape index: {}, may-alias: {0,1,2}]
  %s2 = inlined_call_operand.vmem [shape: bf16[2,16,18,8], index: 2, kind: input, shape index: {}, may-alias: {0,1,2}]
  %s3 = inlined_call_operand.vmem [shape: bf16[72,8], index: 3, kind: input, shape index: {}]
  %s4 = inlined_call_operand.vmem [shape: f32[1,8], index: 4, kind: input, shape index: {}]
  %s5 = inlined_call_operand.vmem [shape: f32[1,8], index: 5, kind: input, shape index: {}]
  %s6 = inlined_call_operand.vmem [shape: bf16[2,16,18,8], index: 6, kind: output, shape index: {0}]
  %s7 = inlined_call_operand.vmem [shape: f32[2,1,8], index: 7, kind: output, shape index: {1}]
  %s8 = inlined_call_operand.vmem [shape: f32[2,1,8], index: 8, kind: output, shape index: {2}]
  %9 = xla_tuple %s6, %s7, %s8
  %s10 = sld [smem:[#allocation0]]
  $region77: #{unet_expansive_block.6} parent=0
    _
  %s12 = ssub.s32 1, %s10
  %s13 = scalar_select 0, %s12, %s10
  loop: start=0, step=1, limit=6
  $region2: #{unet_expansive_block.6} parent=0 // loop_pre_header
    _
  $region3: #{unet_expansive_block.6} parent=0 // loop_header
    %s15 = sphi 0, %s19
    %p16 = scmp.ge.s32.totalorder %s15, 6
    %s22 = sphi 0, %s34
    %s23 = sphi 0, %s30
    %s24 = sphi 0, %s22
    %s25 = sphi 0, %s23
    %s26 = sphi 0, %s24
    %s27 = sphi 0, %s25
    %s47 = sphi 0, %s49
    %s50 = sphi 0, %s47
    %s51 = sphi 0, %s50
    %s67 = sphi 0, %s51
    %s75 = sphi 0, %s77
    %s78 = sphi 0, %s75
    %s79 = sphi 0, %s78
    %s95 = sphi 0, %s79
    %s111 = sphi 0, %s113
    %s114 = sphi 0, %s111
    %s115 = sphi 0, %s114
    %s131 = sphi 0, %s115
    %s135 = sphi 0, %s135
    %s137 = sphi 0, %s135
    %s138 = sphi 0, %s137
    %s152 = sphi 0, %s138
    %s156 = sphi 0, %s156
    %s158 = sphi 0, %s156
    %s159 = sphi 0, %s158
    %s173 = sphi 0, %s159
    %s177 = sphi 0, %s177
    %s179 = sphi 0, %s177
    %s180 = sphi 0, %s179
    %s194 = sphi 0, %s180
    %s202 = sphi 0, %s204
    %s205 = sphi 0, %s202
    %s206 = sphi 0, %s205
    %s222 = sphi 0, %s206
    %s228 = sphi 0, %s230
    %s231 = sphi 0, %s228
    %s232 = sphi 0, %s231
    %s248 = sphi 0, %s232
    %s254 = sphi 0, %s256
    %s257 = sphi 0, %s254
    %s258 = sphi 0, %s257
    %s274 = sphi 0, %s258
  $region4: #{unet_expansive_block.6} parent=0 // loop_header_branch
    %18 = sbr.rel (%p16) target = $region8
  $region5: #{unet_expansive_block.6} parent=0 // loop_body
    %s20 = ssub.s32 %s15, 1
    %s21 = ssub.s32 %s15, 2
    %s28 = sadd.s32 1, %s23
    %p29 = scmp.ge.s32.totalorder %s28, 2
    %s30 = scalar_select %p29, 0, %s28
    %s31 = sadd.s32 1, %s22
    %s32 = scalar_select %p29, %s31, %s22
    %p33 = scmp.ge.s32.totalorder %s32, 2
    %s34 = scalar_select %p33, 0, %s32
    %s35 = smul.u32 %s23, 8
    %s36 = ssub.s32 %s35, 1
    %p37 = scmp.gt.s32.totalorder %s36, 0
    %s38 = scalar_select %p37, %s36, 0
    %s39 = smul.u32 %s30, 8
    %s40 = ssub.s32 %s39, 1
    %p41 = scmp.gt.s32.totalorder %s40, 0
    %s42 = scalar_select %p41, %s40, 0
    %s43 = ssub.s32 %s22, %s34
    %s44 = ssub.s32 %s38, %s42
    %s45 = sor.u32 %s43, %s44
    %p46 = scmp.eq.s32.totalorder %s45, 0
    %s48 = sadd.s32 %s47, 1
    %s49 = scalar_select %p46, %s47, %s48
    %p52 = pneg %p46
    %p53 = scmp.eq.s32.totalorder %s15, 3
    %p54 = por %p52, %p53
    %p55 = scmp.ne.s32.totalorder %s47, %s50
    %p56 = scmp.eq.s32.totalorder %s15, 0
    %p57 = por %p55, %p56
    %p58 = scmp.ne.s32.totalorder %s47, %s50
    %p59 = scmp.eq.s32.totalorder %s20, 3
    %p60 = por %p58, %p59
    %p61 = scmp.ne.s32.totalorder %s50, %s51
    %p62 = scmp.eq.s32.totalorder %s20, 0
    %p63 = por %p61, %p62
    %p64 = scmp.ne.s32.totalorder %s50, %s51
    %p65 = scmp.eq.s32.totalorder %s21, 3
    %p66 = por %p64, %p65
    %p68 = scmp.ne.s32.totalorder %s51, %s67
    %p69 = scmp.eq.s32.totalorder %s21, 0
    %p70 = por %p68, %p69
    %s71 = ssub.s32 %s22, %s34
    %s72 = ssub.s32 %s23, %s30
    %s73 = sor.u32 %s71, %s72
    %p74 = scmp.eq.s32.totalorder %s73, 0
    %s76 = sadd.s32 %s75, 1
    %s77 = scalar_select %p74, %s75, %s76
    %p80 = pneg %p74
    %p81 = scmp.eq.s32.totalorder %s15, 3
    %p82 = por %p80, %p81
    %p83 = scmp.ne.s32.totalorder %s75, %s78
    %p84 = scmp.eq.s32.totalorder %s15, 0
    %p85 = por %p83, %p84
    %p86 = scmp.ne.s32.totalorder %s75, %s78
    %p87 = scmp.eq.s32.totalorder %s20, 3
    %p88 = por %p86, %p87
    %p89 = scmp.ne.s32.totalorder %s78, %s79
    %p90 = scmp.eq.s32.totalorder %s20, 0
    %p91 = por %p89, %p90
    %p92 = scmp.ne.s32.totalorder %s78, %s79
    %p93 = scmp.eq.s32.totalorder %s21, 3
    %p94 = por %p92, %p93
    %p96 = scmp.ne.s32.totalorder %s79, %s95
    %p97 = scmp.eq.s32.totalorder %s21, 0
    %p98 = por %p96, %p97
    %s99 = smul.u32 %s23, 8
    %s100 = sadd.s32 %s99, 8
    %p101 = scmp.lt.s32.totalorder %s100, 15
    %s102 = scalar_select %p101, %s100, 15
    %s103 = smul.u32 %s30, 8
    %s104 = sadd.s32 %s103, 8
    %p105 = scmp.lt.s32.totalorder %s104, 15
    %s106 = scalar_select %p105, %s104, 15
    %s107 = ssub.s32 %s22, %s34
    %s108 = ssub.s32 %s102, %s106
    %s109 = sor.u32 %s107, %s108
    %p110 = scmp.eq.s32.totalorder %s109, 0
    %s112 = sadd.s32 %s111, 1
    %s113 = scalar_select %p110, %s111, %s112
    %p116 = pneg %p110
    %p117 = scmp.eq.s32.totalorder %s15, 3
    %p118 = por %p116, %p117
    %p119 = scmp.ne.s32.totalorder %s111, %s114
    %p120 = scmp.eq.s32.totalorder %s15, 0
    %p121 = por %p119, %p120
    %p122 = scmp.ne.s32.totalorder %s111, %s114
    %p123 = scmp.eq.s32.totalorder %s20, 3
    %p124 = por %p122, %p123
    %p125 = scmp.ne.s32.totalorder %s114, %s115
    %p126 = scmp.eq.s32.totalorder %s20, 0
    %p127 = por %p125, %p126
    %p128 = scmp.ne.s32.totalorder %s114, %s115
    %p129 = scmp.eq.s32.totalorder %s21, 3
    %p130 = por %p128, %p129
    %p132 = scmp.ne.s32.totalorder %s115, %s131
    %p133 = scmp.eq.s32.totalorder %s21, 0
    %p134 = por %p132, %p133
    %s136 = sadd.s32 %s135, 1
    %p139 = scmp.eq.s32.totalorder %s15, 3
    %p140 = scmp.ne.s32.totalorder %s135, %s137
    %p141 = scmp.eq.s32.totalorder %s15, 0
    %p142 = por %p140, %p141
    %p143 = scmp.ne.s32.totalorder %s135, %s137
    %p144 = scmp.eq.s32.totalorder %s20, 3
    %p145 = por %p143, %p144
    %p146 = scmp.ne.s32.totalorder %s137, %s138
    %p147 = scmp.eq.s32.totalorder %s20, 0
    %p148 = por %p146, %p147
    %p149 = scmp.ne.s32.totalorder %s137, %s138
    %p150 = scmp.eq.s32.totalorder %s21, 3
    %p151 = por %p149, %p150
    %p153 = scmp.ne.s32.totalorder %s138, %s152
    %p154 = scmp.eq.s32.totalorder %s21, 0
    %p155 = por %p153, %p154
    %s157 = sadd.s32 %s156, 1
    %p160 = scmp.eq.s32.totalorder %s15, 3
    %p161 = scmp.ne.s32.totalorder %s156, %s158
    %p162 = scmp.eq.s32.totalorder %s15, 0
    %p163 = por %p161, %p162
    %p164 = scmp.ne.s32.totalorder %s156, %s158
    %p165 = scmp.eq.s32.totalorder %s20, 3
    %p166 = por %p164, %p165
    %p167 = scmp.ne.s32.totalorder %s158, %s159
    %p168 = scmp.eq.s32.totalorder %s20, 0
    %p169 = por %p167, %p168
    %p170 = scmp.ne.s32.totalorder %s158, %s159
    %p171 = scmp.eq.s32.totalorder %s21, 3
    %p172 = por %p170, %p171
    %p174 = scmp.ne.s32.totalorder %s159, %s173
    %p175 = scmp.eq.s32.totalorder %s21, 0
    %p176 = por %p174, %p175
    %s178 = sadd.s32 %s177, 1
    %p181 = scmp.eq.s32.totalorder %s15, 3
    %p182 = scmp.ne.s32.totalorder %s177, %s179
    %p183 = scmp.eq.s32.totalorder %s15, 0
    %p184 = por %p182, %p183
    %p185 = scmp.ne.s32.totalorder %s177, %s179
    %p186 = scmp.eq.s32.totalorder %s20, 3
    %p187 = por %p185, %p186
    %p188 = scmp.ne.s32.totalorder %s179, %s180
    %p189 = scmp.eq.s32.totalorder %s20, 0
    %p190 = por %p188, %p189
    %p191 = scmp.ne.s32.totalorder %s179, %s180
    %p192 = scmp.eq.s32.totalorder %s21, 3
    %p193 = por %p191, %p192
    %p195 = scmp.ne.s32.totalorder %s180, %s194
    %p196 = scmp.eq.s32.totalorder %s21, 0
    %p197 = por %p195, %p196
    %s198 = ssub.s32 %s22, %s34
    %s199 = ssub.s32 %s23, %s30
    %s200 = sor.u32 %s198, %s199
    %p201 = scmp.eq.s32.totalorder %s200, 0
    %s203 = sadd.s32 %s202, 1
    %s204 = scalar_select %p201, %s202, %s203
    %p207 = pneg %p201
    %p208 = scmp.eq.s32.totalorder %s15, 3
    %p209 = por %p207, %p208
    %p210 = scmp.ne.s32.totalorder %s202, %s205
    %p211 = scmp.eq.s32.totalorder %s15, 0
    %p212 = por %p210, %p211
    %p213 = scmp.ne.s32.totalorder %s202, %s205
    %p214 = scmp.eq.s32.totalorder %s20, 3
    %p215 = por %p213, %p214
    %p216 = scmp.ne.s32.totalorder %s205, %s206
    %p217 = scmp.eq.s32.totalorder %s20, 0
    %p218 = por %p216, %p217
    %p219 = scmp.ne.s32.totalorder %s205, %s206
    %p220 = scmp.eq.s32.totalorder %s21, 3
    %p221 = por %p219, %p220
    %p223 = scmp.ne.s32.totalorder %s206, %s222
    %p224 = scmp.eq.s32.totalorder %s21, 0
    %p225 = por %p223, %p224
    %s226 = ssub.s32 %s22, %s34
    %p227 = scmp.eq.s32.totalorder %s226, 0
    %s229 = sadd.s32 %s228, 1
    %s230 = scalar_select %p227, %s228, %s229
    %p233 = pneg %p227
    %p234 = scmp.eq.s32.totalorder %s15, 3
    %p235 = por %p233, %p234
    %p236 = scmp.ne.s32.totalorder %s228, %s231
    %p237 = scmp.eq.s32.totalorder %s15, 0
    %p238 = por %p236, %p237
    %p239 = scmp.ne.s32.totalorder %s228, %s231
    %p240 = scmp.eq.s32.totalorder %s20, 3
    %p241 = por %p239, %p240
    %p242 = scmp.ne.s32.totalorder %s231, %s232
    %p243 = scmp.eq.s32.totalorder %s20, 0
    %p244 = por %p242, %p243
    %p245 = scmp.ne.s32.totalorder %s231, %s232
    %p246 = scmp.eq.s32.totalorder %s21, 3
    %p247 = por %p245, %p246
    %p249 = scmp.ne.s32.totalorder %s232, %s248
    %p250 = scmp.eq.s32.totalorder %s21, 0
    %p251 = por %p249, %p250
    %s252 = ssub.s32 %s22, %s34
    %p253 = scmp.eq.s32.totalorder %s252, 0
    %s255 = sadd.s32 %s254, 1
    %s256 = scalar_select %p253, %s254, %s255
    %p259 = pneg %p253
    %p260 = scmp.eq.s32.totalorder %s15, 3
    %p261 = por %p259, %p260
    %p262 = scmp.ne.s32.totalorder %s254, %s257
    %p263 = scmp.eq.s32.totalorder %s15, 0
    %p264 = por %p262, %p263
    %p265 = scmp.ne.s32.totalorder %s254, %s257
    %p266 = scmp.eq.s32.totalorder %s20, 3
    %p267 = por %p265, %p266
    %p268 = scmp.ne.s32.totalorder %s257, %s258
    %p269 = scmp.eq.s32.totalorder %s20, 0
    %p270 = por %p268, %p269
    %p271 = scmp.ne.s32.totalorder %s257, %s258
    %p272 = scmp.eq.s32.totalorder %s21, 3
    %p273 = por %p271, %p272
    %p275 = scmp.ne.s32.totalorder %s258, %s274
    %p276 = scmp.eq.s32.totalorder %s21, 0
    %p277 = por %p275, %p276
    %p278 = scmp.le.s32.totalorder 1, %s15
    %p279 = scmp.lt.s32.totalorder %s15, 5
    %p280 = pnand %p278, %p279
    %p281 = pneg %p280
    // Predicated region
    $region9: #{unet_expansive_block.6} parent=5 // pred_check
      _
    $region10: #{unet_expansive_block.6} parent=5 // pred_check_branch
      %283 = sbr.rel (%p280) target = $region12
    $region11: #{unet_expansive_block.6} parent=5 // pred_region
      %s284 = ssub.s32 %s15, 1
      // Predicated region
      $region13: #{unet_expansive_block.6} parent=11 // pred_check
        %p285 = pneg %p148
      $region14: #{unet_expansive_block.6} parent=11 // pred_check_branch
        %287 = sbr.rel (%p285) target = $region16
      $region15: #{unet_expansive_block.6} parent=11 // pred_region
        _
      $region16: #{unet_expansive_block.6} parent=11 // pred_fallthru
        _
      // Predicated region
      $region17: #{unet_expansive_block.6} parent=11 // pred_check
        %p288 = pneg %p169
      $region18: #{unet_expansive_block.6} parent=11 // pred_check_branch
        %290 = sbr.rel (%p288) target = $region20
      $region19: #{unet_expansive_block.6} parent=11 // pred_region
        _
      $region20: #{unet_expansive_block.6} parent=11 // pred_fallthru
        _
      // Predicated region
      $region21: #{unet_expansive_block.6} parent=11 // pred_check
        %p291 = pneg %p190
      $region22: #{unet_expansive_block.6} parent=11 // pred_check_branch
        %293 = sbr.rel (%p291) target = $region24
      $region23: #{unet_expansive_block.6} parent=11 // pred_region
        _
      $region24: #{unet_expansive_block.6} parent=11 // pred_fallthru
        _
    $region12: #{unet_expansive_block.6} parent=5 // pred_fallthru
      _
    %p294 = scmp.lt.s32.totalorder %s15, 4
    // Predicated region
    $region25: #{unet_expansive_block.6} parent=5 // pred_check
      %p295 = pneg %p294
    $region26: #{unet_expansive_block.6} parent=5 // pred_check_branch
      %297 = sbr.rel (%p295) target = $region28
    $region27: #{unet_expansive_block.6} parent=5 // pred_region
      // Predicated region
      $region29: #{unet_expansive_block.6} parent=27 // pred_check
        %p298 = pneg %p57
      $region30: #{unet_expansive_block.6} parent=27 // pred_check_branch
        %300 = sbr.rel (%p298) target = $region32
      $region31: #{unet_expansive_block.6} parent=27 // pred_region
        %s301 = smul.u32 %s23, 8
        %s302 = ssub.s32 %s301, 1
        %p303 = scmp.gt.s32.totalorder %s302, 0
        %s304 = scalar_select %p303, %s302, 0
        %p305 = scmp.lt.s32.totalorder %s22, 1
        %s306 = scalar_select %p305, %s22, 1
        %p307 = scmp.lt.s32.totalorder %s304, 15
        %s308 = scalar_select %p307, %s304, 15
        %s309 = smul.addr %s308, 3
        %s310 = smul.addr %s306, 48
        %s311 = sadd.s32 %s309, %s310
        %s312 = smul.addr %s311, 4
        %s313 = scalar_lea.vmem %s0, %s312
        %s314 = smul.u32 %s23, 8
        %s315 = ssub.s32 %s314, 1
        %p316 = scmp.gt.s32.totalorder %s315, 0
        %s317 = scalar_select %p316, %s315, 0
      $region32: #{unet_expansive_block.6} parent=27 // pred_fallthru
        _
      // Predicated region
      $region33: #{unet_expansive_block.6} parent=27 // pred_check
        %p318 = pneg %p85
      $region34: #{unet_expansive_block.6} parent=27 // pred_check_branch
        %320 = sbr.rel (%p318) target = $region36
      $region35: #{unet_expansive_block.6} parent=27 // pred_region
        %s321 = smul.u32 8, %s23
        %p322 = scmp.lt.s32.totalorder %s22, 1
        %s323 = scalar_select %p322, %s22, 1
        %p324 = scmp.lt.s32.totalorder %s321, 15
        %s325 = scalar_select %p324, %s321, 15
        %s326 = smul.addr %s325, 3
        %s327 = smul.addr %s323, 48
        %s328 = sadd.s32 %s326, %s327
        %s329 = smul.addr %s328, 4
        %s330 = scalar_lea.vmem %s1, %s329
        %s331 = smul.u32 8, %s23
      $region36: #{unet_expansive_block.6} parent=27 // pred_fallthru
        _
      // Predicated region
      $region37: #{unet_expansive_block.6} parent=27 // pred_check
        %p332 = pneg %p121
      $region38: #{unet_expansive_block.6} parent=27 // pred_check_branch
        %334 = sbr.rel (%p332) target = $region40
      $region39: #{unet_expansive_block.6} parent=27 // pred_region
        %s335 = smul.u32 %s23, 8
        %s336 = sadd.s32 %s335, 8
        %p337 = scmp.lt.s32.totalorder %s336, 15
        %s338 = scalar_select %p337, %s336, 15
        %p339 = scmp.lt.s32.totalorder %s22, 1
        %s340 = scalar_select %p339, %s22, 1
        %p341 = scmp.lt.s32.totalorder %s338, 15
        %s342 = scalar_select %p341, %s338, 15
        %s343 = smul.addr %s342, 3
        %s344 = smul.addr %s340, 48
        %s345 = sadd.s32 %s343, %s344
        %s346 = smul.addr %s345, 4
        %s347 = scalar_lea.vmem %s2, %s346
        %s348 = smul.u32 %s23, 8
        %s349 = sadd.s32 %s348, 8
        %p350 = scmp.lt.s32.totalorder %s349, 15
        %s351 = scalar_select %p350, %s349, 15
      $region40: #{unet_expansive_block.6} parent=27 // pred_fallthru
        _
    $region28: #{unet_expansive_block.6} parent=5 // pred_fallthru
      _
    %p352 = scmp.le.s32.totalorder 1, %s15
    %p353 = scmp.lt.s32.totalorder %s15, 5
    %p354 = pnand %p352, %p353
    %p355 = pneg %p354
    // Predicated region
    $region41: #{unet_expansive_block.6} parent=5 // pred_check
      _
    $region42: #{unet_expansive_block.6} parent=5 // pred_check_branch
      %357 = sbr.rel (%p354) target = $region44
    $region43: #{unet_expansive_block.6} parent=5 // pred_region
      %s358 = ssub.s32 %s15, 1
      %s359 = smul.u32 %s25, 8
      %s360 = ssub.s32 %s359, 1
      %p361 = scmp.gt.s32.totalorder %s360, 0
      %s362 = scalar_select %p361, %s360, 0
      %p363 = scmp.lt.s32.totalorder %s24, 1
      %s364 = scalar_select %p363, %s24, 1
      %p365 = scmp.lt.s32.totalorder %s362, 15
      %s366 = scalar_select %p365, %s362, 15
      %s367 = smul.addr %s366, 3
      %s368 = smul.addr %s364, 48
      %s369 = sadd.s32 %s367, %s368
      %s370 = smul.addr %s369, 4
      %s371 = scalar_lea.vmem %s0, %s370
      %p372 = pneg %p63
      %p373 = pneg %p60
      %s374 = smul.u32 8, %s25
      %p375 = scmp.lt.s32.totalorder %s24, 1
      %s376 = scalar_select %p375, %s24, 1
      %p377 = scmp.lt.s32.totalorder %s374, 15
      %s378 = scalar_select %p377, %s374, 15
      %s379 = smul.addr %s378, 3
      %s380 = smul.addr %s376, 48
      %s381 = sadd.s32 %s379, %s380
      %s382 = smul.addr %s381, 4
      %s383 = scalar_lea.vmem %s1, %s382
      %p384 = pneg %p91
      %p385 = pneg %p88
      %s386 = smul.u32 %s25, 8
      %s387 = sadd.s32 %s386, 8
      %p388 = scmp.lt.s32.totalorder %s387, 15
      %s389 = scalar_select %p388, %s387, 15
      %p390 = scmp.lt.s32.totalorder %s24, 1
      %s391 = scalar_select %p390, %s24, 1
      %p392 = scmp.lt.s32.totalorder %s389, 15
      %s393 = scalar_select %p392, %s389, 15
      %s394 = smul.addr %s393, 3
      %s395 = smul.addr %s391, 48
      %s396 = sadd.s32 %s394, %s395
      %s397 = smul.addr %s396, 4
      %s398 = scalar_lea.vmem %s2, %s397
      %p399 = pneg %p127
      %p400 = pneg %p124
      %p401 = pneg %p148
      %p402 = pneg %p145
      %p403 = pneg %p169
      %p404 = pneg %p166
      %p405 = pneg %p190
      %p406 = pneg %p187
      %p407 = pneg %p218
      %p408 = pneg %p215
      %s409 = smul.u32 8, %s25
      %p410 = scmp.lt.s32.totalorder %s24, 1
      %s411 = scalar_select %p410, %s24, 1
      %p412 = scmp.lt.s32.totalorder %s409, 15
      %s413 = scalar_select %p412, %s409, 15
      %s414 = smul.addr %s413, 3
      %s415 = smul.addr %s411, 48
      %s416 = sadd.s32 %s414, %s415
      %s417 = smul.addr %s416, 4
      %s418 = scalar_lea.vmem %s6, %s417
      %p419 = pneg %p244
      %p420 = pneg %p241
      %p421 = scmp.lt.s32.totalorder %s24, 1
      %s422 = scalar_select %p421, %s24, 1
      %s423 = scalar_lea.vmem %s7, %s422
      %p424 = pneg %p270
      %p425 = pneg %p267
      %p426 = scmp.lt.s32.totalorder %s24, 1
      %s427 = scalar_select %p426, %s24, 1
      %s428 = scalar_lea.vmem %s8, %s427
      %s429 = smul.u32 %s25, 8
      %s430 = ssub.s32 %s429, 1
      %p431 = scmp.gt.s32.totalorder %s430, 0
      %s432 = scalar_select %p431, %s430, 0
      %p433 = scmp.lt.s32.totalorder %s24, 1
      %s434 = scalar_select %p433, %s24, 1
      %p435 = scmp.lt.s32.totalorder %s432, 15
      %s436 = scalar_select %p435, %s432, 15
      %s437 = smul.addr %s436, 3
      %s438 = smul.addr %s434, 48
      %s439 = sadd.s32 %s437, %s438
      %s440 = smul.addr %s439, 4
      %s441 = scalar_lea.vmem %s0, %s440
      %s442 = smul.u32 %s25, 8
      %s443 = ssub.s32 %s442, 1
      %p444 = scmp.gt.s32.totalorder %s443, 0
      %s445 = scalar_select %p444, %s443, 0
      %s446 = smul.u32 8, %s25
      %p447 = scmp.lt.s32.totalorder %s24, 1
      %s448 = scalar_select %p447, %s24, 1
      %p449 = scmp.lt.s32.totalorder %s446, 15
      %s450 = scalar_select %p449, %s446, 15
      %s451 = smul.addr %s450, 3
      %s452 = smul.addr %s448, 48
      %s453 = sadd.s32 %s451, %s452
      %s454 = smul.addr %s453, 4
      %s455 = scalar_lea.vmem %s1, %s454
      %s456 = smul.u32 8, %s25
      %s457 = smul.u32 %s25, 8
      %s458 = sadd.s32 %s457, 8
      %p459 = scmp.lt.s32.totalorder %s458, 15
      %s460 = scalar_select %p459, %s458, 15
      %p461 = scmp.lt.s32.totalorder %s24, 1
      %s462 = scalar_select %p461, %s24, 1
      %p463 = scmp.lt.s32.totalorder %s460, 15
      %s464 = scalar_select %p463, %s460, 15
      %s465 = smul.addr %s464, 3
      %s466 = smul.addr %s462, 48
      %s467 = sadd.s32 %s465, %s466
      %s468 = smul.addr %s467, 4
      %s469 = scalar_lea.vmem %s2, %s468
      %s470 = smul.u32 %s25, 8
      %s471 = sadd.s32 %s470, 8
      %p472 = scmp.lt.s32.totalorder %s471, 15
      %s473 = scalar_select %p472, %s471, 15
      %s474 = smul.u32 8, %s25
      %p475 = scmp.lt.s32.totalorder %s24, 1
      %s476 = scalar_select %p475, %s24, 1
      %p477 = scmp.lt.s32.totalorder %s474, 15
      %s478 = scalar_select %p477, %s474, 15
      %s479 = smul.addr %s478, 3
      %s480 = smul.addr %s476, 48
      %s481 = sadd.s32 %s479, %s480
      %s482 = smul.addr %s481, 4
      %s483 = scalar_lea.vmem %s6, %s482
      %s484 = smul.u32 8, %s25
      %p485 = scmp.lt.s32.totalorder %s24, 1
      %s486 = scalar_select %p485, %s24, 1
      %s487 = scalar_lea.vmem %s7, %s486
      %p488 = scmp.lt.s32.totalorder %s24, 1
      %s489 = scalar_select %p488, %s24, 1
      %s490 = scalar_lea.vmem %s8, %s489
      %v492 = vld [vmem:[%s441] sm:$0xf]
      %v493 = vld [vmem:[%s441 + $0x4] sm:$0xf]
      %v494 = vld [vmem:[%s441 + $0x8] sm:$0x1]
      %v495 = vunpack.c.l.bf16 %v492
      %v496 = vunpack.c.l.bf16 %v493
      %v497 = vunpack.c.l.bf16 %v494
      %v498 = vld [vmem:[%s455] sm:$0xf]
      %v499 = vld [vmem:[%s455 + $0x4] sm:$0xf]
      %v500 = vld [vmem:[%s455 + $0x8] sm:$0x1]
      %v501 = vld [vmem:[%s455 + $0xc] sm:$0xf]
      %v502 = vld [vmem:[%s455 + $0x10] sm:$0xf]
      %v503 = vld [vmem:[%s455 + $0x14] sm:$0x1]
      %v504 = vld [vmem:[%s455 + $0x18] sm:$0xf]
      %v505 = vld [vmem:[%s455 + $0x1c] sm:$0xf]
      %v506 = vld [vmem:[%s455 + $0x20] sm:$0x1]
      %v507 = vld [vmem:[%s455 + $0x24] sm:$0xf]
      %v508 = vld [vmem:[%s455 + $0x28] sm:$0xf]
      %v509 = vld [vmem:[%s455 + $0x2c] sm:$0x1]
      %v510 = vld [vmem:[%s455 + $0x30] sm:$0xf]
      %v511 = vld [vmem:[%s455 + $0x34] sm:$0xf]
      %v512 = vld [vmem:[%s455 + $0x38] sm:$0x1]
      %v513 = vld [vmem:[%s455 + $0x3c] sm:$0xf]
      %v514 = vld [vmem:[%s455 + $0x40] sm:$0xf]
      %v515 = vld [vmem:[%s455 + $0x44] sm:$0x1]
      %v516 = vld [vmem:[%s455 + $0x48] sm:$0xf]
      %v517 = vld [vmem:[%s455 + $0x4c] sm:$0xf]
      %v518 = vld [vmem:[%s455 + $0x50] sm:$0x1]
      %v519 = vld [vmem:[%s455 + $0x54] sm:$0xf]
      %v520 = vld [vmem:[%s455 + $0x58] sm:$0xf]
      %v521 = vld [vmem:[%s455 + $0x5c] sm:$0x1]
      %v522 = vunpack.c.l.bf16 %v498
      %v523 = vunpack.c.l.bf16 %v499
      %v524 = vunpack.c.l.bf16 %v500
      %v525 = vunpack.c.l.bf16 %v501
      %v526 = vunpack.c.l.bf16 %v502
      %v527 = vunpack.c.l.bf16 %v503
      %v528 = vunpack.c.l.bf16 %v504
      %v529 = vunpack.c.l.bf16 %v505
      %v530 = vunpack.c.l.bf16 %v506
      %v531 = vunpack.c.l.bf16 %v507
      %v532 = vunpack.c.l.bf16 %v508
      %v533 = vunpack.c.l.bf16 %v509
      %v534 = vunpack.c.l.bf16 %v510
      %v535 = vunpack.c.l.bf16 %v511
      %v536 = vunpack.c.l.bf16 %v512
      %v537 = vunpack.c.l.bf16 %v513
      %v538 = vunpack.c.l.bf16 %v514
      %v539 = vunpack.c.l.bf16 %v515
      %v540 = vunpack.c.l.bf16 %v516
      %v541 = vunpack.c.l.bf16 %v517
      %v542 = vunpack.c.l.bf16 %v518
      %v543 = vunpack.c.l.bf16 %v519
      %v544 = vunpack.c.l.bf16 %v520
      %v545 = vunpack.c.l.bf16 %v521
      %v546 = vld [vmem:[%s469] sm:$0xf]
      %v547 = vld [vmem:[%s469 + $0x4] sm:$0xf]
      %v548 = vld [vmem:[%s469 + $0x8] sm:$0x1]
      %v549 = vunpack.c.l.bf16 %v546
      %v550 = vunpack.c.l.bf16 %v547
      %v551 = vunpack.c.l.bf16 %v548
      %v552 = vld [vmem:[%s4] sm:$0x1]
      %v554 = vlaneseq
      %v555 = vshrl.u32 %v554, 7
      %v556 = vsub.s32 0, %v555
      %v557 = vrot.slane %v552, %v556
      %v559 = vmul.f32 %v495, %v557
      %v560 = vmul.f32 %v496, %v557
      %v561 = vmul.f32 %v497, %v557
      %v562 = vmul.f32 %v522, %v557
      %v563 = vmul.f32 %v523, %v557
      %v564 = vmul.f32 %v524, %v557
      %v565 = vmul.f32 %v525, %v557
      %v566 = vmul.f32 %v526, %v557
      %v567 = vmul.f32 %v527, %v557
      %v568 = vmul.f32 %v528, %v557
      %v569 = vmul.f32 %v529, %v557
      %v570 = vmul.f32 %v530, %v557
      %v571 = vmul.f32 %v531, %v557
      %v572 = vmul.f32 %v532, %v557
      %v573 = vmul.f32 %v533, %v557
      %v574 = vmul.f32 %v534, %v557
      %v575 = vmul.f32 %v535, %v557
      %v576 = vmul.f32 %v536, %v557
      %v577 = vmul.f32 %v537, %v557
      %v578 = vmul.f32 %v538, %v557
      %v579 = vmul.f32 %v539, %v557
      %v580 = vmul.f32 %v540, %v557
      %v581 = vmul.f32 %v541, %v557
      %v582 = vmul.f32 %v542, %v557
      %v583 = vmul.f32 %v543, %v557
      %v584 = vmul.f32 %v544, %v557
      %v585 = vmul.f32 %v545, %v557
      %v586 = vmul.f32 %v549, %v557
      %v587 = vmul.f32 %v550, %v557
      %v588 = vmul.f32 %v551, %v557
      %v589 = vld [vmem:[%s5] sm:$0x1]
      %v591 = vlaneseq
      %v592 = vshrl.u32 %v591, 7
      %v593 = vsub.s32 0, %v592
      %v594 = vrot.slane %v589, %v593
      %v596 = vadd.f32 %v559, %v594
      %v597 = vadd.f32 %v560, %v594
      %v598 = vadd.f32 %v561, %v594
      %v599 = vadd.f32 %v562, %v594
      %v600 = vadd.f32 %v563, %v594
      %v601 = vadd.f32 %v564, %v594
      %v602 = vadd.f32 %v565, %v594
      %v603 = vadd.f32 %v566, %v594
      %v604 = vadd.f32 %v567, %v594
      %v605 = vadd.f32 %v568, %v594
      %v606 = vadd.f32 %v569, %v594
      %v607 = vadd.f32 %v570, %v594
      %v608 = vadd.f32 %v571, %v594
      %v609 = vadd.f32 %v572, %v594
      %v610 = vadd.f32 %v573, %v594
      %v611 = vadd.f32 %v574, %v594
      %v612 = vadd.f32 %v575, %v594
      %v613 = vadd.f32 %v576, %v594
      %v614 = vadd.f32 %v577, %v594
      %v615 = vadd.f32 %v578, %v594
      %v616 = vadd.f32 %v579, %v594
      %v617 = vadd.f32 %v580, %v594
      %v618 = vadd.f32 %v581, %v594
      %v619 = vadd.f32 %v582, %v594
      %v620 = vadd.f32 %v583, %v594
      %v621 = vadd.f32 %v584, %v594
      %v622 = vadd.f32 %v585, %v594
      %v623 = vadd.f32 %v586, %v594
      %v624 = vadd.f32 %v587, %v594
      %v625 = vadd.f32 %v588, %v594
      %v626 = vmax.f32 %v596, 0.0
      %v627 = vmax.f32 %v597, 0.0
      %v628 = vmax.f32 %v598, 0.0
      %v629 = vmax.f32 %v599, 0.0
      %v630 = vmax.f32 %v600, 0.0
      %v631 = vmax.f32 %v601, 0.0
      %v632 = vmax.f32 %v602, 0.0
      %v633 = vmax.f32 %v603, 0.0
      %v634 = vmax.f32 %v604, 0.0
      %v635 = vmax.f32 %v605, 0.0
      %v636 = vmax.f32 %v606, 0.0
      %v637 = vmax.f32 %v607, 0.0
      %v638 = vmax.f32 %v608, 0.0
      %v639 = vmax.f32 %v609, 0.0
      %v640 = vmax.f32 %v610, 0.0
      %v641 = vmax.f32 %v611, 0.0
      %v642 = vmax.f32 %v612, 0.0
      %v643 = vmax.f32 %v613, 0.0
      %v644 = vmax.f32 %v614, 0.0
      %v645 = vmax.f32 %v615, 0.0
      %v646 = vmax.f32 %v616, 0.0
      %v647 = vmax.f32 %v617, 0.0
      %v648 = vmax.f32 %v618, 0.0
      %v649 = vmax.f32 %v619, 0.0
      %v650 = vmax.f32 %v620, 0.0
      %v651 = vmax.f32 %v621, 0.0
      %v652 = vmax.f32 %v622, 0.0
      %v653 = vmax.f32 %v623, 0.0
      %v654 = vmax.f32 %v624, 0.0
      %v655 = vmax.f32 %v625, 0.0
      %v656 = vlaneseq
      %v657 = vshrl.u32 %v656, 7
      %v658 = vadd.s32 %v657, 8
      %v659 = vadd.s32 %v657, 16
      %vm660 = vcmp.eq.s32.totalorder %v657, 0
      %vm661 = vcmp.eq.s32.totalorder %v658, 0
      %vm662 = vcmp.eq.s32.totalorder %v659, 0
      %vm663 = vcmp.eq.s32.totalorder %v657, 17
      %vm664 = vcmp.eq.s32.totalorder %v658, 17
      %vm665 = vcmp.eq.s32.totalorder %v659, 17
      %vm666 = vmor %vm660, %vm663
      %vm667 = vmor %vm661, %vm664
      %vm668 = vmor %vm662, %vm665
      %p669 = scmp.eq.s32.totalorder %s25, 0
      %s670 = scalar_select %p669, 1, 0
      %v671 = vstv %s670
      %vm672 = vcmp.eq.s32.totalorder %v671, 1
      %vm673 = vmor %vm666, %vm672
      %vm674 = vmor %vm667, %vm672
      %vm675 = vmor %vm668, %vm672
      %vm676 = vmor %vm666, 0
      %vm677 = vmor %vm667, 0
      %vm678 = vmor %vm668, 0
      %p679 = scmp.eq.s32.totalorder %s25, 1
      %s680 = scalar_select %p679, 1, 0
      %v681 = vstv %s680
      %vm682 = vcmp.eq.s32.totalorder %v681, 1
      %vm683 = vmor %vm673, 0
      %vm684 = vmor %vm674, 0
      %vm685 = vmor %vm675, 0
      %vm686 = vmor %vm676, 0
      %vm687 = vmor %vm677, 0
      %vm688 = vmor %vm678, 0
      %vm689 = vmor %vm676, %vm682
      %vm690 = vmor %vm677, %vm682
      %vm691 = vmor %vm678, %vm682
      %v692 = vsel %vm683, 1, 0
      %v693 = vsel %vm684, 1, 0
      %v694 = vsel %vm685, 1, 0
      %v695 = vsel %vm686, 1, 0
      %v696 = vsel %vm687, 1, 0
      %v697 = vsel %vm688, 1, 0
      %v698 = vsel %vm689, 1, 0
      %v699 = vsel %vm690, 1, 0
      %v700 = vsel %vm691, 1, 0
      %vm701 = vcmp.eq.s32.totalorder %v692, 1
      %vm702 = vcmp.eq.s32.totalorder %v693, 1
      %vm703 = vcmp.eq.s32.totalorder %v694, 1
      %vm704 = vcmp.eq.s32.totalorder %v695, 1
      %vm705 = vcmp.eq.s32.totalorder %v696, 1
      %vm706 = vcmp.eq.s32.totalorder %v697, 1
      %vm707 = vcmp.eq.s32.totalorder %v698, 1
      %vm708 = vcmp.eq.s32.totalorder %v699, 1
      %vm709 = vcmp.eq.s32.totalorder %v700, 1
      %v710 = vsel %vm701, 0.0, %v626
      %v711 = vsel %vm702, 0.0, %v627
      %v712 = vsel %vm703, 0.0, %v628
      %v713 = vsel %vm704, 0.0, %v629
      %v714 = vsel %vm705, 0.0, %v630
      %v715 = vsel %vm706, 0.0, %v631
      %v716 = vsel %vm704, 0.0, %v632
      %v717 = vsel %vm705, 0.0, %v633
      %v718 = vsel %vm706, 0.0, %v634
      %v719 = vsel %vm704, 0.0, %v635
      %v720 = vsel %vm705, 0.0, %v636
      %v721 = vsel %vm706, 0.0, %v637
      %v722 = vsel %vm704, 0.0, %v638
      %v723 = vsel %vm705, 0.0, %v639
      %v724 = vsel %vm706, 0.0, %v640
      %v725 = vsel %vm704, 0.0, %v641
      %v726 = vsel %vm705, 0.0, %v642
      %v727 = vsel %vm706, 0.0, %v643
      %v728 = vsel %vm704, 0.0, %v644
      %v729 = vsel %vm705, 0.0, %v645
      %v730 = vsel %vm706, 0.0, %v646
      %v731 = vsel %vm704, 0.0, %v647
      %v732 = vsel %vm705, 0.0, %v648
      %v733 = vsel %vm706, 0.0, %v649
      %v734 = vsel %vm704, 0.0, %v650
      %v735 = vsel %vm705, 0.0, %v651
      %v736 = vsel %vm706, 0.0, %v652
      %v737 = vsel %vm707, 0.0, %v653
      %v738 = vsel %vm708, 0.0, %v654
      %v739 = vsel %vm709, 0.0, %v655
      %vm764 = vcmask 1046528
      %v765 = vrot.slane %v710, 1
      %v766 = vrot.slane %v711, 1
      %v767 = vsel %vm764, %v765, %v766
      %v768 = vrot.slane %v712, 1
      %v769 = vsel %vm764, %v766, %v768
      %v770 = vrot.slane %v713, 1
      %v771 = vrot.slane %v714, 1
      %v772 = vsel %vm764, %v770, %v771
      %v773 = vrot.slane %v715, 1
      %v774 = vsel %vm764, %v771, %v773
      %v775 = vrot.slane %v716, 1
      %v776 = vrot.slane %v717, 1
      %v777 = vsel %vm764, %v775, %v776
      %v778 = vrot.slane %v718, 1
      %v779 = vsel %vm764, %v776, %v778
      %v780 = vrot.slane %v719, 1
      %v781 = vrot.slane %v720, 1
      %v782 = vsel %vm764, %v780, %v781
      %v783 = vrot.slane %v721, 1
      %v784 = vsel %vm764, %v781, %v783
      %v785 = vrot.slane %v722, 1
      %v786 = vrot.slane %v723, 1
      %v787 = vsel %vm764, %v785, %v786
      %v788 = vrot.slane %v724, 1
      %v789 = vsel %vm764, %v786, %v788
      %v790 = vrot.slane %v725, 1
      %v791 = vrot.slane %v726, 1
      %v792 = vsel %vm764, %v790, %v791
      %v793 = vrot.slane %v727, 1
      %v794 = vsel %vm764, %v791, %v793
      %v795 = vrot.slane %v728, 1
      %v796 = vrot.slane %v729, 1
      %v797 = vsel %vm764, %v795, %v796
      %v798 = vrot.slane %v730, 1
      %v799 = vsel %vm764, %v796, %v798
      %v800 = vrot.slane %v731, 1
      %v801 = vrot.slane %v732, 1
      %v802 = vsel %vm764, %v800, %v801
      %v803 = vrot.slane %v733, 1
      %v804 = vsel %vm764, %v801, %v803
      %vm805 = vcmask 1045504
      %v806 = vrot.slane %v710, 2
      %v807 = vrot.slane %v711, 2
      %v808 = vsel %vm805, %v806, %v807
      %v809 = vrot.slane %v712, 2
      %v810 = vsel %vm805, %v807, %v809
      %v811 = vrot.slane %v713, 2
      %v812 = vrot.slane %v714, 2
      %v813 = vsel %vm805, %v811, %v812
      %v814 = vrot.slane %v715, 2
      %v815 = vsel %vm805, %v812, %v814
      %v816 = vrot.slane %v716, 2
      %v817 = vrot.slane %v717, 2
      %v818 = vsel %vm805, %v816, %v817
      %v819 = vrot.slane %v718, 2
      %v820 = vsel %vm805, %v817, %v819
      %v821 = vrot.slane %v719, 2
      %v822 = vrot.slane %v720, 2
      %v823 = vsel %vm805, %v821, %v822
      %v824 = vrot.slane %v721, 2
      %v825 = vsel %vm805, %v822, %v824
      %v826 = vrot.slane %v722, 2
      %v827 = vrot.slane %v723, 2
      %v828 = vsel %vm805, %v826, %v827
      %v829 = vrot.slane %v724, 2
      %v830 = vsel %vm805, %v827, %v829
      %v831 = vrot.slane %v725, 2
      %v832 = vrot.slane %v726, 2
      %v833 = vsel %vm805, %v831, %v832
      %v834 = vrot.slane %v727, 2
      %v835 = vsel %vm805, %v832, %v834
      %v836 = vrot.slane %v728, 2
      %v837 = vrot.slane %v729, 2
      %v838 = vsel %vm805, %v836, %v837
      %v839 = vrot.slane %v730, 2
      %v840 = vsel %vm805, %v837, %v839
      %v841 = vrot.slane %v731, 2
      %v842 = vrot.slane %v732, 2
      %v843 = vsel %vm805, %v841, %v842
      %v844 = vrot.slane %v733, 2
      %v845 = vsel %vm805, %v842, %v844
      %v849 = vrot.slane %v734, 1
      %v850 = vrot.slane %v735, 1
      %v851 = vsel %vm764, %v849, %v850
      %v852 = vrot.slane %v736, 1
      %v853 = vsel %vm764, %v850, %v852
      %v854 = vrot.slane %v734, 2
      %v855 = vrot.slane %v735, 2
      %v856 = vsel %vm805, %v854, %v855
      %v857 = vrot.slane %v736, 2
      %v858 = vsel %vm805, %v855, %v857
      %v862 = vrot.slane %v737, 1
      %v863 = vrot.slane %v738, 1
      %v864 = vsel %vm764, %v862, %v863
      %v865 = vrot.slane %v739, 1
      %v866 = vsel %vm764, %v863, %v865
      %v867 = vrot.slane %v737, 2
      %v868 = vrot.slane %v738, 2
      %v869 = vsel %vm805, %v867, %v868
      %v870 = vrot.slane %v739, 2
      %v871 = vsel %vm805, %v868, %v870
      %872 = vrot.lane.b32.xlu0 %v767, 8
      %v873 = vpop.permute.xlu0 %872
      %874 = vrot.lane.b32.xlu0 %v769, 8
      %v875 = vpop.permute.xlu0 %874
      %876 = vrot.lane.b32.xlu0 %v772, 8
      %v877 = vpop.permute.xlu0 %876
      %878 = vrot.lane.b32.xlu0 %v774, 8
      %v879 = vpop.permute.xlu0 %878
      %880 = vrot.lane.b32.xlu0 %v777, 8
      %v881 = vpop.permute.xlu0 %880
      %882 = vrot.lane.b32.xlu0 %v779, 8
      %v883 = vpop.permute.xlu0 %882
      %884 = vrot.lane.b32.xlu0 %v782, 8
      %v885 = vpop.permute.xlu0 %884
      %886 = vrot.lane.b32.xlu0 %v784, 8
      %v887 = vpop.permute.xlu0 %886
      %888 = vrot.lane.b32.xlu0 %v787, 8
      %v889 = vpop.permute.xlu0 %888
      %890 = vrot.lane.b32.xlu0 %v789, 8
      %v891 = vpop.permute.xlu0 %890
      %892 = vrot.lane.b32.xlu0 %v792, 8
      %v893 = vpop.permute.xlu0 %892
      %894 = vrot.lane.b32.xlu0 %v794, 8
      %v895 = vpop.permute.xlu0 %894
      %896 = vrot.lane.b32.xlu0 %v797, 8
      %v897 = vpop.permute.xlu0 %896
      %898 = vrot.lane.b32.xlu0 %v799, 8
      %v899 = vpop.permute.xlu0 %898
      %900 = vrot.lane.b32.xlu0 %v802, 8
      %v901 = vpop.permute.xlu0 %900
      %902 = vrot.lane.b32.xlu0 %v804, 8
      %v903 = vpop.permute.xlu0 %902
      %920 = vrot.lane.b32.xlu0 %v808, 16
      %v921 = vpop.permute.xlu0 %920
      %922 = vrot.lane.b32.xlu0 %v810, 16
      %v923 = vpop.permute.xlu0 %922
      %924 = vrot.lane.b32.xlu0 %v813, 16
      %v925 = vpop.permute.xlu0 %924
      %926 = vrot.lane.b32.xlu0 %v815, 16
      %v927 = vpop.permute.xlu0 %926
      %928 = vrot.lane.b32.xlu0 %v818, 16
      %v929 = vpop.permute.xlu0 %928
      %930 = vrot.lane.b32.xlu0 %v820, 16
      %v931 = vpop.permute.xlu0 %930
      %932 = vrot.lane.b32.xlu0 %v823, 16
      %v933 = vpop.permute.xlu0 %932
      %934 = vrot.lane.b32.xlu0 %v825, 16
      %v935 = vpop.permute.xlu0 %934
      %936 = vrot.lane.b32.xlu0 %v828, 16
      %v937 = vpop.permute.xlu0 %936
      %938 = vrot.lane.b32.xlu0 %v830, 16
      %v939 = vpop.permute.xlu0 %938
      %940 = vrot.lane.b32.xlu0 %v833, 16
      %v941 = vpop.permute.xlu0 %940
      %942 = vrot.lane.b32.xlu0 %v835, 16
      %v943 = vpop.permute.xlu0 %942
      %944 = vrot.lane.b32.xlu0 %v838, 16
      %v945 = vpop.permute.xlu0 %944
      %946 = vrot.lane.b32.xlu0 %v840, 16
      %v947 = vpop.permute.xlu0 %946
      %948 = vrot.lane.b32.xlu0 %v843, 16
      %v949 = vpop.permute.xlu0 %948
      %950 = vrot.lane.b32.xlu0 %v845, 16
      %v951 = vpop.permute.xlu0 %950
      %968 = vrot.lane.b32.xlu0 %v713, 24
      %v969 = vpop.permute.xlu0 %968
      %970 = vrot.lane.b32.xlu0 %v714, 24
      %v971 = vpop.permute.xlu0 %970
      %972 = vrot.lane.b32.xlu0 %v716, 24
      %v973 = vpop.permute.xlu0 %972
      %974 = vrot.lane.b32.xlu0 %v717, 24
      %v975 = vpop.permute.xlu0 %974
      %976 = vrot.lane.b32.xlu0 %v719, 24
      %v977 = vpop.permute.xlu0 %976
      %978 = vrot.lane.b32.xlu0 %v720, 24
      %v979 = vpop.permute.xlu0 %978
      %980 = vrot.lane.b32.xlu0 %v722, 24
      %v981 = vpop.permute.xlu0 %980
      %982 = vrot.lane.b32.xlu0 %v723, 24
      %v983 = vpop.permute.xlu0 %982
      %984 = vrot.lane.b32.xlu0 %v725, 24
      %v985 = vpop.permute.xlu0 %984
      %986 = vrot.lane.b32.xlu0 %v726, 24
      %v987 = vpop.permute.xlu0 %986
      %988 = vrot.lane.b32.xlu0 %v728, 24
      %v989 = vpop.permute.xlu0 %988
      %990 = vrot.lane.b32.xlu0 %v729, 24
      %v991 = vpop.permute.xlu0 %990
      %992 = vrot.lane.b32.xlu0 %v731, 24
      %v993 = vpop.permute.xlu0 %992
      %994 = vrot.lane.b32.xlu0 %v732, 24
      %v995 = vpop.permute.xlu0 %994
      %996 = vrot.lane.b32.xlu0 %v734, 24
      %v997 = vpop.permute.xlu0 %996
      %998 = vrot.lane.b32.xlu0 %v735, 24
      %v999 = vpop.permute.xlu0 %998
      %1016 = vrot.lane.b32.xlu0 %v772, 32
      %v1017 = vpop.permute.xlu0 %1016
      %1018 = vrot.lane.b32.xlu0 %v774, 32
      %v1019 = vpop.permute.xlu0 %1018
      %1020 = vrot.lane.b32.xlu0 %v777, 32
      %v1021 = vpop.permute.xlu0 %1020
      %1022 = vrot.lane.b32.xlu0 %v779, 32
      %v1023 = vpop.permute.xlu0 %1022
      %1024 = vrot.lane.b32.xlu0 %v782, 32
      %v1025 = vpop.permute.xlu0 %1024
      %1026 = vrot.lane.b32.xlu0 %v784, 32
      %v1027 = vpop.permute.xlu0 %1026
      %1028 = vrot.lane.b32.xlu0 %v787, 32
      %v1029 = vpop.permute.xlu0 %1028
      %1030 = vrot.lane.b32.xlu0 %v789, 32
      %v1031 = vpop.permute.xlu0 %1030
      %1032 = vrot.lane.b32.xlu0 %v792, 32
      %v1033 = vpop.permute.xlu0 %1032
      %1034 = vrot.lane.b32.xlu0 %v794, 32
      %v1035 = vpop.permute.xlu0 %1034
      %1036 = vrot.lane.b32.xlu0 %v797, 32
      %v1037 = vpop.permute.xlu0 %1036
      %1038 = vrot.lane.b32.xlu0 %v799, 32
      %v1039 = vpop.permute.xlu0 %1038
      %1040 = vrot.lane.b32.xlu0 %v802, 32
      %v1041 = vpop.permute.xlu0 %1040
      %1042 = vrot.lane.b32.xlu0 %v804, 32
      %v1043 = vpop.permute.xlu0 %1042
      %1044 = vrot.lane.b32.xlu0 %v851, 32
      %v1045 = vpop.permute.xlu0 %1044
      %1046 = vrot.lane.b32.xlu0 %v853, 32
      %v1047 = vpop.permute.xlu0 %1046
      %1064 = vrot.lane.b32.xlu0 %v813, 40
      %v1065 = vpop.permute.xlu0 %1064
      %1066 = vrot.lane.b32.xlu0 %v815, 40
      %v1067 = vpop.permute.xlu0 %1066
      %1068 = vrot.lane.b32.xlu0 %v818, 40
      %v1069 = vpop.permute.xlu0 %1068
      %1070 = vrot.lane.b32.xlu0 %v820, 40
      %v1071 = vpop.permute.xlu0 %1070
      %1072 = vrot.lane.b32.xlu0 %v823, 40
      %v1073 = vpop.permute.xlu0 %1072
      %1074 = vrot.lane.b32.xlu0 %v825, 40
      %v1075 = vpop.permute.xlu0 %1074
      %1076 = vrot.lane.b32.xlu0 %v828, 40
      %v1077 = vpop.permute.xlu0 %1076
      %1078 = vrot.lane.b32.xlu0 %v830, 40
      %v1079 = vpop.permute.xlu0 %1078
      %1080 = vrot.lane.b32.xlu0 %v833, 40
      %v1081 = vpop.permute.xlu0 %1080
      %1082 = vrot.lane.b32.xlu0 %v835, 40
      %v1083 = vpop.permute.xlu0 %1082
      %1084 = vrot.lane.b32.xlu0 %v838, 40
      %v1085 = vpop.permute.xlu0 %1084
      %1086 = vrot.lane.b32.xlu0 %v840, 40
      %v1087 = vpop.permute.xlu0 %1086
      %1088 = vrot.lane.b32.xlu0 %v843, 40
      %v1089 = vpop.permute.xlu0 %1088
      %1090 = vrot.lane.b32.xlu0 %v845, 40
      %v1091 = vpop.permute.xlu0 %1090
      %1092 = vrot.lane.b32.xlu0 %v856, 40
      %v1093 = vpop.permute.xlu0 %1092
      %1094 = vrot.lane.b32.xlu0 %v858, 40
      %v1095 = vpop.permute.xlu0 %1094
      %1112 = vrot.lane.b32.xlu0 %v716, 48
      %v1113 = vpop.permute.xlu0 %1112
      %1114 = vrot.lane.b32.xlu0 %v717, 48
      %v1115 = vpop.permute.xlu0 %1114
      %1116 = vrot.lane.b32.xlu0 %v719, 48
      %v1117 = vpop.permute.xlu0 %1116
      %1118 = vrot.lane.b32.xlu0 %v720, 48
      %v1119 = vpop.permute.xlu0 %1118
      %1120 = vrot.lane.b32.xlu0 %v722, 48
      %v1121 = vpop.permute.xlu0 %1120
      %1122 = vrot.lane.b32.xlu0 %v723, 48
      %v1123 = vpop.permute.xlu0 %1122
      %1124 = vrot.lane.b32.xlu0 %v725, 48
      %v1125 = vpop.permute.xlu0 %1124
      %1126 = vrot.lane.b32.xlu0 %v726, 48
      %v1127 = vpop.permute.xlu0 %1126
      %1128 = vrot.lane.b32.xlu0 %v728, 48
      %v1129 = vpop.permute.xlu0 %1128
      %1130 = vrot.lane.b32.xlu0 %v729, 48
      %v1131 = vpop.permute.xlu0 %1130
      %1132 = vrot.lane.b32.xlu0 %v731, 48
      %v1133 = vpop.permute.xlu0 %1132
      %1134 = vrot.lane.b32.xlu0 %v732, 48
      %v1135 = vpop.permute.xlu0 %1134
      %1136 = vrot.lane.b32.xlu0 %v734, 48
      %v1137 = vpop.permute.xlu0 %1136
      %1138 = vrot.lane.b32.xlu0 %v735, 48
      %v1139 = vpop.permute.xlu0 %1138
      %1140 = vrot.lane.b32.xlu0 %v737, 48
      %v1141 = vpop.permute.xlu0 %1140
      %1142 = vrot.lane.b32.xlu0 %v738, 48
      %v1143 = vpop.permute.xlu0 %1142
      %1160 = vrot.lane.b32.xlu0 %v777, 56
      %v1161 = vpop.permute.xlu0 %1160
      %1162 = vrot.lane.b32.xlu0 %v779, 56
      %v1163 = vpop.permute.xlu0 %1162
      %1164 = vrot.lane.b32.xlu0 %v782, 56
      %v1165 = vpop.permute.xlu0 %1164
      %1166 = vrot.lane.b32.xlu0 %v784, 56
      %v1167 = vpop.permute.xlu0 %1166
      %1168 = vrot.lane.b32.xlu0 %v787, 56
      %v1169 = vpop.permute.xlu0 %1168
      %1170 = vrot.lane.b32.xlu0 %v789, 56
      %v1171 = vpop.permute.xlu0 %1170
      %1172 = vrot.lane.b32.xlu0 %v792, 56
      %v1173 = vpop.permute.xlu0 %1172
      %1174 = vrot.lane.b32.xlu0 %v794, 56
      %v1175 = vpop.permute.xlu0 %1174
      %1176 = vrot.lane.b32.xlu0 %v797, 56
      %v1177 = vpop.permute.xlu0 %1176
      %1178 = vrot.lane.b32.xlu0 %v799, 56
      %v1179 = vpop.permute.xlu0 %1178
      %1180 = vrot.lane.b32.xlu0 %v802, 56
      %v1181 = vpop.permute.xlu0 %1180
      %1182 = vrot.lane.b32.xlu0 %v804, 56
      %v1183 = vpop.permute.xlu0 %1182
      %1184 = vrot.lane.b32.xlu0 %v851, 56
      %v1185 = vpop.permute.xlu0 %1184
      %1186 = vrot.lane.b32.xlu0 %v853, 56
      %v1187 = vpop.permute.xlu0 %1186
      %1188 = vrot.lane.b32.xlu0 %v864, 56
      %v1189 = vpop.permute.xlu0 %1188
      %1190 = vrot.lane.b32.xlu0 %v866, 56
      %v1191 = vpop.permute.xlu0 %1190
      %1208 = vrot.lane.b32.xlu0 %v818, 64
      %v1209 = vpop.permute.xlu0 %1208
      %1210 = vrot.lane.b32.xlu0 %v820, 64
      %v1211 = vpop.permute.xlu0 %1210
      %1212 = vrot.lane.b32.xlu0 %v823, 64
      %v1213 = vpop.permute.xlu0 %1212
      %1214 = vrot.lane.b32.xlu0 %v825, 64
      %v1215 = vpop.permute.xlu0 %1214
      %1216 = vrot.lane.b32.xlu0 %v828, 64
      %v1217 = vpop.permute.xlu0 %1216
      %1218 = vrot.lane.b32.xlu0 %v830, 64
      %v1219 = vpop.permute.xlu0 %1218
      %1220 = vrot.lane.b32.xlu0 %v833, 64
      %v1221 = vpop.permute.xlu0 %1220
      %1222 = vrot.lane.b32.xlu0 %v835, 64
      %v1223 = vpop.permute.xlu0 %1222
      %1224 = vrot.lane.b32.xlu0 %v838, 64
      %v1225 = vpop.permute.xlu0 %1224
      %1226 = vrot.lane.b32.xlu0 %v840, 64
      %v1227 = vpop.permute.xlu0 %1226
      %1228 = vrot.lane.b32.xlu0 %v843, 64
      %v1229 = vpop.permute.xlu0 %1228
      %1230 = vrot.lane.b32.xlu0 %v845, 64
      %v1231 = vpop.permute.xlu0 %1230
      %1232 = vrot.lane.b32.xlu0 %v856, 64
      %v1233 = vpop.permute.xlu0 %1232
      %1234 = vrot.lane.b32.xlu0 %v858, 64
      %v1235 = vpop.permute.xlu0 %1234
      %1236 = vrot.lane.b32.xlu0 %v869, 64
      %v1237 = vpop.permute.xlu0 %1236
      %1238 = vrot.lane.b32.xlu0 %v871, 64
      %v1239 = vpop.permute.xlu0 %1238
      %vm1256 = vcmask 64512
      %v1257 = vsel %vm1256, %v710, %v873
      %v1258 = vsel %vm1256, %v711, %v875
      %v1259 = vsel %vm1256, %v713, %v877
      %v1260 = vsel %vm1256, %v714, %v879
      %v1261 = vsel %vm1256, %v716, %v881
      %v1262 = vsel %vm1256, %v717, %v883
      %v1263 = vsel %vm1256, %v719, %v885
      %v1264 = vsel %vm1256, %v720, %v887
      %v1265 = vsel %vm1256, %v722, %v889
      %v1266 = vsel %vm1256, %v723, %v891
      %v1267 = vsel %vm1256, %v725, %v893
      %v1268 = vsel %vm1256, %v726, %v895
      %v1269 = vsel %vm1256, %v728, %v897
      %v1270 = vsel %vm1256, %v729, %v899
      %v1271 = vsel %vm1256, %v731, %v901
      %v1272 = vsel %vm1256, %v732, %v903
      %vm1273 = vcmask 130048
      %v1274 = vsel %vm1273, %v1257, %v921
      %v1275 = vsel %vm1273, %v1258, %v923
      %v1276 = vsel %vm1273, %v1259, %v925
      %v1277 = vsel %vm1273, %v1260, %v927
      %v1278 = vsel %vm1273, %v1261, %v929
      %v1279 = vsel %vm1273, %v1262, %v931
      %v1280 = vsel %vm1273, %v1263, %v933
      %v1281 = vsel %vm1273, %v1264, %v935
      %v1282 = vsel %vm1273, %v1265, %v937
      %v1283 = vsel %vm1273, %v1266, %v939
      %v1284 = vsel %vm1273, %v1267, %v941
      %v1285 = vsel %vm1273, %v1268, %v943
      %v1286 = vsel %vm1273, %v1269, %v945
      %v1287 = vsel %vm1273, %v1270, %v947
      %v1288 = vsel %vm1273, %v1271, %v949
      %v1289 = vsel %vm1273, %v1272, %v951
      %vm1290 = vcmask 195584
      %v1291 = vsel %vm1290, %v1274, %v969
      %v1292 = vsel %vm1290, %v1275, %v971
      %v1293 = vsel %vm1290, %v1276, %v973
      %v1294 = vsel %vm1290, %v1277, %v975
      %v1295 = vsel %vm1290, %v1278, %v977
      %v1296 = vsel %vm1290, %v1279, %v979
      %v1297 = vsel %vm1290, %v1280, %v981
      %v1298 = vsel %vm1290, %v1281, %v983
      %v1299 = vsel %vm1290, %v1282, %v985
      %v1300 = vsel %vm1290, %v1283, %v987
      %v1301 = vsel %vm1290, %v1284, %v989
      %v1302 = vsel %vm1290, %v1285, %v991
      %v1303 = vsel %vm1290, %v1286, %v993
      %v1304 = vsel %vm1290, %v1287, %v995
      %v1305 = vsel %vm1290, %v1288, %v997
      %v1306 = vsel %vm1290, %v1289, %v999
      %vm1307 = vcmask 261120
      %v1308 = vsel %vm1307, %v1291, %v1017
      %v1309 = vsel %vm1307, %v1292, %v1019
      %v1310 = vsel %vm1307, %v1293, %v1021
      %v1311 = vsel %vm1307, %v1294, %v1023
      %v1312 = vsel %vm1307, %v1295, %v1025
      %v1313 = vsel %vm1307, %v1296, %v1027
      %v1314 = vsel %vm1307, %v1297, %v1029
      %v1315 = vsel %vm1307, %v1298, %v1031
      %v1316 = vsel %vm1307, %v1299, %v1033
      %v1317 = vsel %vm1307, %v1300, %v1035
      %v1318 = vsel %vm1307, %v1301, %v1037
      %v1319 = vsel %vm1307, %v1302, %v1039
      %v1320 = vsel %vm1307, %v1303, %v1041
      %v1321 = vsel %vm1307, %v1304, %v1043
      %v1322 = vsel %vm1307, %v1305, %v1045
      %v1323 = vsel %vm1307, %v1306, %v1047
      %vm1324 = vcmask 326656
      %v1325 = vsel %vm1324, %v1308, %v1065
      %v1326 = vsel %vm1324, %v1309, %v1067
      %v1327 = vsel %vm1324, %v1310, %v1069
      %v1328 = vsel %vm1324, %v1311, %v1071
      %v1329 = vsel %vm1324, %v1312, %v1073
      %v1330 = vsel %vm1324, %v1313, %v1075
      %v1331 = vsel %vm1324, %v1314, %v1077
      %v1332 = vsel %vm1324, %v1315, %v1079
      %v1333 = vsel %vm1324, %v1316, %v1081
      %v1334 = vsel %vm1324, %v1317, %v1083
      %v1335 = vsel %vm1324, %v1318, %v1085
      %v1336 = vsel %vm1324, %v1319, %v1087
      %v1337 = vsel %vm1324, %v1320, %v1089
      %v1338 = vsel %vm1324, %v1321, %v1091
      %v1339 = vsel %vm1324, %v1322, %v1093
      %v1340 = vsel %vm1324, %v1323, %v1095
      %vm1341 = vcmask 392192
      %v1342 = vsel %vm1341, %v1325, %v1113
      %v1343 = vsel %vm1341, %v1326, %v1115
      %v1344 = vsel %vm1341, %v1327, %v1117
      %v1345 = vsel %vm1341, %v1328, %v1119
      %v1346 = vsel %vm1341, %v1329, %v1121
      %v1347 = vsel %vm1341, %v1330, %v1123
      %v1348 = vsel %vm1341, %v1331, %v1125
      %v1349 = vsel %vm1341, %v1332, %v1127
      %v1350 = vsel %vm1341, %v1333, %v1129
      %v1351 = vsel %vm1341, %v1334, %v1131
      %v1352 = vsel %vm1341, %v1335, %v1133
      %v1353 = vsel %vm1341, %v1336, %v1135
      %v1354 = vsel %vm1341, %v1337, %v1137
      %v1355 = vsel %vm1341, %v1338, %v1139
      %v1356 = vsel %vm1341, %v1339, %v1141
      %v1357 = vsel %vm1341, %v1340, %v1143
      %vm1358 = vcmask 457728
      %v1359 = vsel %vm1358, %v1342, %v1161
      %v1360 = vsel %vm1358, %v1343, %v1163
      %v1361 = vsel %vm1358, %v1344, %v1165
      %v1362 = vsel %vm1358, %v1345, %v1167
      %v1363 = vsel %vm1358, %v1346, %v1169
      %v1364 = vsel %vm1358, %v1347, %v1171
      %v1365 = vsel %vm1358, %v1348, %v1173
      %v1366 = vsel %vm1358, %v1349, %v1175
      %v1367 = vsel %vm1358, %v1350, %v1177
      %v1368 = vsel %vm1358, %v1351, %v1179
      %v1369 = vsel %vm1358, %v1352, %v1181
      %v1370 = vsel %vm1358, %v1353, %v1183
      %v1371 = vsel %vm1358, %v1354, %v1185
      %v1372 = vsel %vm1358, %v1355, %v1187
      %v1373 = vsel %vm1358, %v1356, %v1189
      %v1374 = vsel %vm1358, %v1357, %v1191
      %vm1375 = vcmask 523264
      %v1376 = vsel %vm1375, %v1359, %v1209
      %v1377 = vsel %vm1375, %v1360, %v1211
      %v1378 = vsel %vm1375, %v1361, %v1213
      %v1379 = vsel %vm1375, %v1362, %v1215
      %v1380 = vsel %vm1375, %v1363, %v1217
      %v1381 = vsel %vm1375, %v1364, %v1219
      %v1382 = vsel %vm1375, %v1365, %v1221
      %v1383 = vsel %vm1375, %v1366, %v1223
      %v1384 = vsel %vm1375, %v1367, %v1225
      %v1385 = vsel %vm1375, %v1368, %v1227
      %v1386 = vsel %vm1375, %v1369, %v1229
      %v1387 = vsel %vm1375, %v1370, %v1231
      %v1388 = vsel %vm1375, %v1371, %v1233
      %v1389 = vsel %vm1375, %v1372, %v1235
      %v1390 = vsel %vm1375, %v1373, %v1237
      %v1391 = vsel %vm1375, %v1374, %v1239
      %v1392 = vpack.c.bf16 %v1377, %v1376
      %v1393 = vpack.c.bf16 %v1379, %v1378
      %v1394 = vpack.c.bf16 %v1381, %v1380
      %v1395 = vpack.c.bf16 %v1383, %v1382
      %v1396 = vpack.c.bf16 %v1385, %v1384
      %v1397 = vpack.c.bf16 %v1387, %v1386
      %v1398 = vpack.c.bf16 %v1389, %v1388
      %v1399 = vpack.c.bf16 %v1391, %v1390
      %v1400 = vld [vmem:[%s3] sm:$0xf]
      %v1401 = vld [vmem:[%s3 + $0x4] sm:$0xf]
      %v1402 = vld [vmem:[%s3 + $0x8] sm:$0xf]
      %v1403 = vld [vmem:[%s3 + $0xc] sm:$0xf]
      %v1404 = vld [vmem:[%s3 + $0x10] sm:$0xf]
      %v1405 = vld [vmem:[%s3 + $0x14] sm:$0xf]
      %v1406 = vld [vmem:[%s3 + $0x18] sm:$0xf]
      %v1407 = vld [vmem:[%s3 + $0x1c] sm:$0xf]
      %v1408 = vld [vmem:[%s3 + $0x20] sm:$0xf]
      %v1418 = vunpack.c.l.b16 %v1400
      %v1419 = vunpack.c.l.b16 %v1401
      %v1420 = vunpack.c.l.b16 %v1402
      %v1421 = vunpack.c.l.b16 %v1403
      %v1422 = vunpack.c.l.b16 %v1404
      %v1423 = vunpack.c.l.b16 %v1405
      %v1424 = vunpack.c.l.b16 %v1406
      %v1425 = vunpack.c.l.b16 %v1407
      %v1426 = vunpack.c.l.b16 %v1408
      %v1427 = vpack.c.b16 %v1419, %v1418
      %v1428 = vpack.c.b16 %v1421, %v1420
      %v1429 = vpack.c.b16 %v1423, %v1422
      %v1430 = vpack.c.b16 %v1425, %v1424
      %v1431 = vpack.c.b16 %v1426, %v1426
      %vm1436 = vcmask 588800
      %v1438 = vsel %vm1436, %v1392, 0
      %v1441 = vsel %vm1436, %v1393, 0
      %v1444 = vsel %vm1436, %v1394, 0
      %v1447 = vsel %vm1436, %v1395, 0
      %v1450 = vsel %vm1436, %v1396, 0
      %v1453 = vsel %vm1436, %v1397, 0
      %v1456 = vsel %vm1436, %v1398, 0
      %v1459 = vsel %vm1436, %v1399, 0
      %vm1461 = vcmask 1043456
      %v1463 = vsel %vm1461, %v1431, 0
      %1465 = vmatprep.subr.bf16.mxu0 0
      %1466 = vmatpush1.bf16.msra.mxu0 %v1427
      %1467 = vmatprep.subr.bf16.mxu0 0
      %1468 = vmatpush1.bf16.msra.mxu0 %v1428
      %1469 = vmatprep.subr.bf16.mxu0 0
      %1470 = vmatpush1.bf16.msra.mxu0 %v1429
      %1471 = vmatprep.subr.bf16.mxu0 0
      %1472 = vmatpush1.bf16.msra.mxu0 %v1430
      %1473 = vmatprep.subr.bf16.mxu0 0
      %1474 = vmatpush1.bf16.msra.mxu0 %v1463
      %1475 = vmatprep.subr.bf16.mxu0 0
      %1476 = vmatpush1.bf16.msra.mxu0 0
      %1477 = vmatprep.subr.bf16.mxu0 0
      %1478 = vmatpush1.bf16.msra.mxu0 0
      %1479 = vmatprep.subr.bf16.mxu0 0
      %1480 = vmatpush1.bf16.msra.mxu0 0
      %1481 = vmatprep.subr.bf16.mxu0 0
      %1482 = vmatpush1.bf16.msra.mxu0 0
      %1483 = vmatprep.subr.bf16.mxu0 0
      %1484 = vmatpush1.bf16.msra.mxu0 0
      %1485 = vmatprep.subr.bf16.mxu0 0
      %1486 = vmatpush1.bf16.msra.mxu0 0
      %1487 = vmatprep.subr.bf16.mxu0 0
      %1488 = vmatpush1.bf16.msra.mxu0 0
      %1489 = vmatprep.subr.bf16.mxu0 0
      %1490 = vmatpush1.bf16.msra.mxu0 0
      %1491 = vmatprep.subr.bf16.mxu0 0
      %1492 = vmatpush1.bf16.msra.mxu0 0
      %1493 = vmatprep.subr.bf16.mxu0 0
      %1494 = vmatpush1.bf16.msra.mxu0 0
      %1495 = vmatprep.subr.bf16.mxu0 0
      %1496 = vmatpush1.bf16.msra.mxu0 0
      %1497 = vmatprep.mubr.bf16.mxu0 0
      %1498 = vmatmul.mubr.bf16.gmra.mrb[0].mxu0 %v1438
      %v1499 = vpop.f32.mrb[0].mxu0
      %v1500 = vadd.f32 0.0, %v1499
      %v1501 = vpop.f32.mrb[0].mxu0
      %v1502 = vpop.f32.mrb[0].mxu0
      %v1503 = vadd.f32 0.0, %v1502
      %v1504 = vpop.f32.mrb[0].mxu0
      %1505 = vmatprep.mubr.bf16.mxu0 0
      %1506 = vmatmul.mubr.bf16.gmra.mrb[0].mxu0 %v1441
      %v1507 = vpop.f32.mrb[0].mxu0
      %v1508 = vadd.f32 0.0, %v1507
      %v1509 = vpop.f32.mrb[0].mxu0
      %v1510 = vpop.f32.mrb[0].mxu0
      %v1511 = vadd.f32 0.0, %v1510
      %v1512 = vpop.f32.mrb[0].mxu0
      %1513 = vmatprep.mubr.bf16.mxu0 0
      %1514 = vmatmul.mubr.bf16.gmra.mrb[0].mxu0 %v1444
      %v1515 = vpop.f32.mrb[0].mxu0
      %v1516 = vadd.f32 0.0, %v1515
      %v1517 = vpop.f32.mrb[0].mxu0
      %v1518 = vpop.f32.mrb[0].mxu0
      %v1519 = vadd.f32 0.0, %v1518
      %v1520 = vpop.f32.mrb[0].mxu0
      %1521 = vmatprep.mubr.bf16.mxu0 0
      %1522 = vmatmul.mubr.bf16.gmra.mrb[0].mxu0 %v1447
      %v1523 = vpop.f32.mrb[0].mxu0
      %v1524 = vadd.f32 0.0, %v1523
      %v1525 = vpop.f32.mrb[0].mxu0
      %v1526 = vpop.f32.mrb[0].mxu0
      %v1527 = vadd.f32 0.0, %v1526
      %v1528 = vpop.f32.mrb[0].mxu0
      %1529 = vmatprep.mubr.bf16.mxu0 0
      %1530 = vmatmul.mubr.bf16.gmra.mrb[0].mxu0 %v1450
      %v1531 = vpop.f32.mrb[0].mxu0
      %v1532 = vadd.f32 0.0, %v1531
      %v1533 = vpop.f32.mrb[0].mxu0
      %v1534 = vpop.f32.mrb[0].mxu0
      %v1535 = vadd.f32 0.0, %v1534
      %v1536 = vpop.f32.mrb[0].mxu0
      %1537 = vmatprep.mubr.bf16.mxu0 0
      %1538 = vmatmul.mubr.bf16.gmra.mrb[0].mxu0 %v1453
      %v1539 = vpop.f32.mrb[0].mxu0
      %v1540 = vadd.f32 0.0, %v1539
      %v1541 = vpop.f32.mrb[0].mxu0
      %v1542 = vpop.f32.mrb[0].mxu0
      %v1543 = vadd.f32 0.0, %v1542
      %v1544 = vpop.f32.mrb[0].mxu0
      %1545 = vmatprep.mubr.bf16.mxu0 0
      %1546 = vmatmul.mubr.bf16.gmra.mrb[0].mxu0 %v1456
      %v1547 = vpop.f32.mrb[0].mxu0
      %v1548 = vadd.f32 0.0, %v1547
      %v1549 = vpop.f32.mrb[0].mxu0
      %v1550 = vpop.f32.mrb[0].mxu0
      %v1551 = vadd.f32 0.0, %v1550
      %v1552 = vpop.f32.mrb[0].mxu0
      %1553 = vmatprep.mubr.bf16.mxu0 0
      %1554 = vmatmul.mubr.bf16.gmra.mrb[0].mxu0 %v1459
      %v1555 = vpop.f32.mrb[0].mxu0
      %v1556 = vadd.f32 0.0, %v1555
      %v1557 = vpop.f32.mrb[0].mxu0
      %v1558 = vpop.f32.mrb[0].mxu0
      %v1559 = vadd.f32 0.0, %v1558
      %v1560 = vpop.f32.mrb[0].mxu0
      %1561 = vdwg.mxu0
      // Predicated region
      $region45: #{unet_expansive_block.6} parent=43 // pred_check
        %p1562 = pneg %p669
      $region46: #{unet_expansive_block.6} parent=43 // pred_check_branch
        %1564 = sbr.rel (%p1562) target = $region48
      $region47: #{unet_expansive_block.6} parent=43 // pred_region
        %vm1565 = vcmask 57344
        %1566 = vst.msk [vmem:[%s487] sm:$0x1] %vm1565, 0.0
        %1567 = vst.msk [vmem:[%s490] sm:$0x1] %vm1565, 0.0
      $region48: #{unet_expansive_block.6} parent=43 // pred_fallthru
        _
      %v1568 = vld [vmem:[%s487] sm:$0x1]
      %v1569 = vsel %vm1256, %v1500, 0.0
      %v1570 = vsel %vm1256, %v1503, 0.0
      %v1571 = vadd.f32 %v1569, %v1570
      %v1572 = vsel %vm1256, %v1508, 0.0
      %v1573 = vadd.f32 %v1571, %v1572
      %v1574 = vsel %vm1256, %v1511, 0.0
      %v1575 = vadd.f32 %v1573, %v1574
      %v1576 = vsel %vm1256, %v1516, 0.0
      %v1577 = vadd.f32 %v1575, %v1576
      %v1578 = vsel %vm1256, %v1519, 0.0
      %v1579 = vadd.f32 %v1577, %v1578
      %v1580 = vsel %vm1256, %v1524, 0.0
      %v1581 = vadd.f32 %v1579, %v1580
      %v1582 = vsel %vm1256, %v1527, 0.0
      %v1583 = vadd.f32 %v1581, %v1582
      %v1584 = vsel %vm1256, %v1532, 0.0
      %v1585 = vadd.f32 %v1583, %v1584
      %v1586 = vsel %vm1256, %v1535, 0.0
      %v1587 = vadd.f32 %v1585, %v1586
      %v1588 = vsel %vm1256, %v1540, 0.0
      %v1589 = vadd.f32 %v1587, %v1588
      %v1590 = vsel %vm1256, %v1543, 0.0
      %v1591 = vadd.f32 %v1589, %v1590
      %v1592 = vsel %vm1256, %v1548, 0.0
      %v1593 = vadd.f32 %v1591, %v1592
      %v1594 = vsel %vm1256, %v1551, 0.0
      %v1595 = vadd.f32 %v1593, %v1594
      %v1596 = vsel %vm1256, %v1556, 0.0
      %v1597 = vadd.f32 %v1595, %v1596
      %v1598 = vsel %vm1256, %v1559, 0.0
      %v1599 = vadd.f32 %v1597, %v1598
      %v1600 = vrot.slane %v1599, 4
      %v1601 = vadd.f32 %v1599, %v1600
      %v1602 = vrot.slane %v1601, 2
      %v1603 = vadd.f32 %v1601, %v1602
      %v1604 = vrot.slane %v1603, 1
      %v1605 = vadd.f32 %v1603, %v1604
      %v1606 = vadd.f32 %v1568, %v1605
      %vm1607 = vcmask 57344
      %1608 = vst.msk [vmem:[%s487] sm:$0x1] %vm1607, %v1606
      %v1609 = vld [vmem:[%s490] sm:$0x1]
      %v1610 = vmul.f32 %v1500, %v1500
      %v1611 = vmul.f32 %v1503, %v1503
      %v1612 = vmul.f32 %v1508, %v1508
      %v1613 = vmul.f32 %v1511, %v1511
      %v1614 = vmul.f32 %v1516, %v1516
      %v1615 = vmul.f32 %v1519, %v1519
      %v1616 = vmul.f32 %v1524, %v1524
      %v1617 = vmul.f32 %v1527, %v1527
      %v1618 = vmul.f32 %v1532, %v1532
      %v1619 = vmul.f32 %v1535, %v1535
      %v1620 = vmul.f32 %v1540, %v1540
      %v1621 = vmul.f32 %v1543, %v1543
      %v1622 = vmul.f32 %v1548, %v1548
      %v1623 = vmul.f32 %v1551, %v1551
      %v1624 = vmul.f32 %v1556, %v1556
      %v1625 = vmul.f32 %v1559, %v1559
      %v1626 = vsel %vm1256, %v1610, 0.0
      %v1627 = vsel %vm1256, %v1611, 0.0
      %v1628 = vadd.f32 %v1626, %v1627
      %v1629 = vsel %vm1256, %v1612, 0.0
      %v1630 = vadd.f32 %v1628, %v1629
      %v1631 = vsel %vm1256, %v1613, 0.0
      %v1632 = vadd.f32 %v1630, %v1631
      %v1633 = vsel %vm1256, %v1614, 0.0
      %v1634 = vadd.f32 %v1632, %v1633
      %v1635 = vsel %vm1256, %v1615, 0.0
      %v1636 = vadd.f32 %v1634, %v1635
      %v1637 = vsel %vm1256, %v1616, 0.0
      %v1638 = vadd.f32 %v1636, %v1637
      %v1639 = vsel %vm1256, %v1617, 0.0
      %v1640 = vadd.f32 %v1638, %v1639
      %v1641 = vsel %vm1256, %v1618, 0.0
      %v1642 = vadd.f32 %v1640, %v1641
      %v1643 = vsel %vm1256, %v1619, 0.0
      %v1644 = vadd.f32 %v1642, %v1643
      %v1645 = vsel %vm1256, %v1620, 0.0
      %v1646 = vadd.f32 %v1644, %v1645
      %v1647 = vsel %vm1256, %v1621, 0.0
      %v1648 = vadd.f32 %v1646, %v1647
      %v1649 = vsel %vm1256, %v1622, 0.0
      %v1650 = vadd.f32 %v1648, %v1649
      %v1651 = vsel %vm1256, %v1623, 0.0
      %v1652 = vadd.f32 %v1650, %v1651
      %v1653 = vsel %vm1256, %v1624, 0.0
      %v1654 = vadd.f32 %v1652, %v1653
      %v1655 = vsel %vm1256, %v1625, 0.0
      %v1656 = vadd.f32 %v1654, %v1655
      %v1657 = vrot.slane %v1656, 4
      %v1658 = vadd.f32 %v1656, %v1657
      %v1659 = vrot.slane %v1658, 2
      %v1660 = vadd.f32 %v1658, %v1659
      %v1661 = vrot.slane %v1660, 1
      %v1662 = vadd.f32 %v1660, %v1661
      %v1663 = vadd.f32 %v1609, %v1662
      %1664 = vst.msk [vmem:[%s490] sm:$0x1] %vm1607, %v1663
      %v1665 = vpack.c.bf16 %v1503, %v1500
      %v1666 = vpack.c.bf16 %v1511, %v1508
      %v1667 = vpack.c.bf16 %v1519, %v1516
      %v1668 = vpack.c.bf16 %v1527, %v1524
      %v1669 = vpack.c.bf16 %v1535, %v1532
      %v1670 = vpack.c.bf16 %v1543, %v1540
      %v1671 = vpack.c.bf16 %v1551, %v1548
      %v1672 = vpack.c.bf16 %v1559, %v1556
      %v1681 = vunpack.c.l.b16 %v1665
      %v1682 = vunpack.c.h.b16 %v1665
      %v1683 = vunpack.c.l.b16 %v1666
      %v1684 = vunpack.c.h.b16 %v1666
      %v1685 = vunpack.c.l.b16 %v1667
      %v1686 = vunpack.c.h.b16 %v1667
      %v1687 = vunpack.c.l.b16 %v1668
      %v1688 = vunpack.c.h.b16 %v1668
      %v1689 = vunpack.c.l.b16 %v1669
      %v1690 = vunpack.c.h.b16 %v1669
      %v1691 = vunpack.c.l.b16 %v1670
      %v1692 = vunpack.c.h.b16 %v1670
      %v1693 = vunpack.c.l.b16 %v1671
      %v1694 = vunpack.c.h.b16 %v1671
      %v1695 = vunpack.c.l.b16 %v1672
      %v1696 = vunpack.c.h.b16 %v1672
      %v1697 = vpack.c.b16 %v1681, %v1681
      %v1698 = vpack.c.b16 %v1682, %v1682
      %v1699 = vpack.c.b16 %v1683, %v1683
      %v1700 = vpack.c.b16 %v1684, %v1684
      %v1701 = vpack.c.b16 %v1685, %v1685
      %v1702 = vpack.c.b16 %v1686, %v1686
      %v1703 = vpack.c.b16 %v1687, %v1687
      %v1704 = vpack.c.b16 %v1688, %v1688
      %v1705 = vpack.c.b16 %v1689, %v1689
      %v1706 = vpack.c.b16 %v1690, %v1690
      %v1707 = vpack.c.b16 %v1691, %v1691
      %v1708 = vpack.c.b16 %v1692, %v1692
      %v1709 = vpack.c.b16 %v1693, %v1693
      %v1710 = vpack.c.b16 %v1694, %v1694
      %v1711 = vpack.c.b16 %v1695, %v1695
      %v1712 = vpack.c.b16 %v1696, %v1696
      %vm1713 = vsmask.f32 256
      %vm1714 = vsmask.f32 4368
      %vm1715 = vmor %vm1713, %vm1714
      %v1717 = vshrl.u32 %v1697, 16
      %v1719 = vrot.slane %v1717, 7
      %v1720 = vshll.u32 %v1697, 16
      %v1722 = vor.u32 %v1719, %v1720
      %v1723 = vrot.slane %v1719, 4
      %v1725 = vshrl.u32 %v1698, 16
      %v1727 = vrot.slane %v1725, 7
      %v1728 = vshll.u32 %v1698, 16
      %v1730 = vor.u32 %v1727, %v1728
      %v1731 = vsel %vm1715, %v1723, %v1730
      %v1732 = vrot.slane %v1727, 4
      %v1734 = vshrl.u32 %v1699, 16
      %v1736 = vrot.slane %v1734, 7
      %v1737 = vshll.u32 %v1699, 16
      %v1739 = vor.u32 %v1736, %v1737
      %v1740 = vrot.slane %v1736, 4
      %v1742 = vshrl.u32 %v1700, 16
      %v1744 = vrot.slane %v1742, 7
      %v1745 = vshll.u32 %v1700, 16
      %v1747 = vor.u32 %v1744, %v1745
      %v1748 = vsel %vm1715, %v1740, %v1747
      %v1749 = vrot.slane %v1744, 4
      %v1751 = vshrl.u32 %v1701, 16
      %v1753 = vrot.slane %v1751, 7
      %v1754 = vshll.u32 %v1701, 16
      %v1756 = vor.u32 %v1753, %v1754
      %v1757 = vrot.slane %v1753, 4
      %v1759 = vshrl.u32 %v1702, 16
      %v1761 = vrot.slane %v1759, 7
      %v1762 = vshll.u32 %v1702, 16
      %v1764 = vor.u32 %v1761, %v1762
      %v1765 = vsel %vm1715, %v1757, %v1764
      %v1766 = vrot.slane %v1761, 4
      %v1768 = vshrl.u32 %v1703, 16
      %v1770 = vrot.slane %v1768, 7
      %v1771 = vshll.u32 %v1703, 16
      %v1773 = vor.u32 %v1770, %v1771
      %v1774 = vrot.slane %v1770, 4
      %v1776 = vshrl.u32 %v1704, 16
      %v1778 = vrot.slane %v1776, 7
      %v1779 = vshll.u32 %v1704, 16
      %v1781 = vor.u32 %v1778, %v1779
      %v1782 = vsel %vm1715, %v1774, %v1781
      %v1783 = vrot.slane %v1778, 4
      %v1785 = vshrl.u32 %v1705, 16
      %v1787 = vrot.slane %v1785, 7
      %v1788 = vshll.u32 %v1705, 16
      %v1790 = vor.u32 %v1787, %v1788
      %v1791 = vrot.slane %v1787, 4
      %v1793 = vshrl.u32 %v1706, 16
      %v1795 = vrot.slane %v1793, 7
      %v1796 = vshll.u32 %v1706, 16
      %v1798 = vor.u32 %v1795, %v1796
      %v1799 = vsel %vm1715, %v1791, %v1798
      %v1800 = vrot.slane %v1795, 4
      %v1802 = vshrl.u32 %v1707, 16
      %v1804 = vrot.slane %v1802, 7
      %v1805 = vshll.u32 %v1707, 16
      %v1807 = vor.u32 %v1804, %v1805
      %v1808 = vrot.slane %v1804, 4
      %v1810 = vshrl.u32 %v1708, 16
      %v1812 = vrot.slane %v1810, 7
      %v1813 = vshll.u32 %v1708, 16
      %v1815 = vor.u32 %v1812, %v1813
      %v1816 = vsel %vm1715, %v1808, %v1815
      %v1817 = vrot.slane %v1812, 4
      %v1819 = vshrl.u32 %v1709, 16
      %v1821 = vrot.slane %v1819, 7
      %v1822 = vshll.u32 %v1709, 16
      %v1824 = vor.u32 %v1821, %v1822
      %v1825 = vrot.slane %v1821, 4
      %v1827 = vshrl.u32 %v1710, 16
      %v1829 = vrot.slane %v1827, 7
      %v1830 = vshll.u32 %v1710, 16
      %v1832 = vor.u32 %v1829, %v1830
      %v1833 = vsel %vm1715, %v1825, %v1832
      %v1834 = vrot.slane %v1829, 4
      %v1836 = vshrl.u32 %v1711, 16
      %v1838 = vrot.slane %v1836, 7
      %v1839 = vshll.u32 %v1711, 16
      %v1841 = vor.u32 %v1838, %v1839
      %v1842 = vrot.slane %v1838, 4
      %v1844 = vshrl.u32 %v1712, 16
      %v1846 = vrot.slane %v1844, 7
      %v1847 = vshll.u32 %v1712, 16
      %v1849 = vor.u32 %v1846, %v1847
      %v1850 = vsel %vm1715, %v1842, %v1849
      %v1851 = vrot.slane %v1846, 4
      %vm1876 = vcmask 60416
      %vm1877 = vsmask.f32 7938
      %vm1878 = vmand %vm1876, %vm1877
      %v1879 = vld [vmem:[%s483] sm:$0xf]
      %v1880 = vsel %vm1878, %v1722, %v1879
      %1881 = vst [vmem:[%s483] sm:$0xf] %v1880
      %vm1882 = vcmask 60416
      %1883 = vst.msk [vmem:[%s483 + $0x4] sm:$0xf] %vm1882, %v1731
      %vm1884 = vcmask 57344
      %vm1885 = vmand %vm1884, %vm1713
      %v1886 = vld [vmem:[%s483 + $0x8] sm:$0x1]
      %v1887 = vsel %vm1885, %v1732, %v1886
      %1888 = vst [vmem:[%s483 + $0x8] sm:$0x1] %v1887
      %v1889 = vld [vmem:[%s483 + $0xc] sm:$0xf]
      %v1890 = vsel %vm1878, %v1739, %v1889
      %1891 = vst [vmem:[%s483 + $0xc] sm:$0xf] %v1890
      %1892 = vst.msk [vmem:[%s483 + $0x10] sm:$0xf] %vm1882, %v1748
      %v1893 = vld [vmem:[%s483 + $0x14] sm:$0x1]
      %v1894 = vsel %vm1885, %v1749, %v1893
      %1895 = vst [vmem:[%s483 + $0x14] sm:$0x1] %v1894
      %v1896 = vld [vmem:[%s483 + $0x18] sm:$0xf]
      %v1897 = vsel %vm1878, %v1756, %v1896
      %1898 = vst [vmem:[%s483 + $0x18] sm:$0xf] %v1897
      %1899 = vst.msk [vmem:[%s483 + $0x1c] sm:$0xf] %vm1882, %v1765
      %v1900 = vld [vmem:[%s483 + $0x20] sm:$0x1]
      %v1901 = vsel %vm1885, %v1766, %v1900
      %1902 = vst [vmem:[%s483 + $0x20] sm:$0x1] %v1901
      %v1903 = vld [vmem:[%s483 + $0x24] sm:$0xf]
      %v1904 = vsel %vm1878, %v1773, %v1903
      %1905 = vst [vmem:[%s483 + $0x24] sm:$0xf] %v1904
      %1906 = vst.msk [vmem:[%s483 + $0x28] sm:$0xf] %vm1882, %v1782
      %v1907 = vld [vmem:[%s483 + $0x2c] sm:$0x1]
      %v1908 = vsel %vm1885, %v1783, %v1907
      %1909 = vst [vmem:[%s483 + $0x2c] sm:$0x1] %v1908
      %v1910 = vld [vmem:[%s483 + $0x30] sm:$0xf]
      %v1911 = vsel %vm1878, %v1790, %v1910
      %1912 = vst [vmem:[%s483 + $0x30] sm:$0xf] %v1911
      %1913 = vst.msk [vmem:[%s483 + $0x34] sm:$0xf] %vm1882, %v1799
      %v1914 = vld [vmem:[%s483 + $0x38] sm:$0x1]
      %v1915 = vsel %vm1885, %v1800, %v1914
      %1916 = vst [vmem:[%s483 + $0x38] sm:$0x1] %v1915
      %v1917 = vld [vmem:[%s483 + $0x3c] sm:$0xf]
      %v1918 = vsel %vm1878, %v1807, %v1917
      %1919 = vst [vmem:[%s483 + $0x3c] sm:$0xf] %v1918
      %1920 = vst.msk [vmem:[%s483 + $0x40] sm:$0xf] %vm1882, %v1816
      %v1921 = vld [vmem:[%s483 + $0x44] sm:$0x1]
      %v1922 = vsel %vm1885, %v1817, %v1921
      %1923 = vst [vmem:[%s483 + $0x44] sm:$0x1] %v1922
      %v1924 = vld [vmem:[%s483 + $0x48] sm:$0xf]
      %v1925 = vsel %vm1878, %v1824, %v1924
      %1926 = vst [vmem:[%s483 + $0x48] sm:$0xf] %v1925
      %1927 = vst.msk [vmem:[%s483 + $0x4c] sm:$0xf] %vm1882, %v1833
      %v1928 = vld [vmem:[%s483 + $0x50] sm:$0x1]
      %v1929 = vsel %vm1885, %v1834, %v1928
      %1930 = vst [vmem:[%s483 + $0x50] sm:$0x1] %v1929
      %v1931 = vld [vmem:[%s483 + $0x54] sm:$0xf]
      %v1932 = vsel %vm1878, %v1841, %v1931
      %1933 = vst [vmem:[%s483 + $0x54] sm:$0xf] %v1932
      %1934 = vst.msk [vmem:[%s483 + $0x58] sm:$0xf] %vm1882, %v1850
      %v1935 = vld [vmem:[%s483 + $0x5c] sm:$0x1]
      %v1936 = vsel %vm1885, %v1851, %v1935
      %1937 = vst [vmem:[%s483 + $0x5c] sm:$0x1] %v1936
      %v1938 = vld [vmem:[%s483] sm:$0x1]
      %v1939 = vsel %vm1885, 0, %v1938
      %1940 = vst [vmem:[%s483] sm:$0x1] %v1939
      %v1941 = vld [vmem:[%s483 + $0xc] sm:$0x1]
      %v1942 = vsel %vm1885, 0, %v1941
      %1943 = vst [vmem:[%s483 + $0xc] sm:$0x1] %v1942
      %v1944 = vld [vmem:[%s483 + $0x18] sm:$0x1]
      %v1945 = vsel %vm1885, 0, %v1944
      %1946 = vst [vmem:[%s483 + $0x18] sm:$0x1] %v1945
      %v1947 = vld [vmem:[%s483 + $0x24] sm:$0x1]
      %v1948 = vsel %vm1885, 0, %v1947
      %1949 = vst [vmem:[%s483 + $0x24] sm:$0x1] %v1948
      %v1950 = vld [vmem:[%s483 + $0x30] sm:$0x1]
      %v1951 = vsel %vm1885, 0, %v1950
      %1952 = vst [vmem:[%s483 + $0x30] sm:$0x1] %v1951
      %v1953 = vld [vmem:[%s483 + $0x3c] sm:$0x1]
      %v1954 = vsel %vm1885, 0, %v1953
      %1955 = vst [vmem:[%s483 + $0x3c] sm:$0x1] %v1954
      %v1956 = vld [vmem:[%s483 + $0x48] sm:$0x1]
      %v1957 = vsel %vm1885, 0, %v1956
      %1958 = vst [vmem:[%s483 + $0x48] sm:$0x1] %v1957
      %v1959 = vld [vmem:[%s483 + $0x54] sm:$0x1]
      %v1960 = vsel %vm1885, 0, %v1959
      %1961 = vst [vmem:[%s483 + $0x54] sm:$0x1] %v1960
      %vm1962 = vmand %vm1884, %vm1877
      %v1963 = vld [vmem:[%s483 + $0x8] sm:$0x1]
      %v1964 = vsel %vm1962, 0, %v1963
      %1965 = vst [vmem:[%s483 + $0x8] sm:$0x1] %v1964
      %v1966 = vld [vmem:[%s483 + $0x14] sm:$0x1]
      %v1967 = vsel %vm1962, 0, %v1966
      %1968 = vst [vmem:[%s483 + $0x14] sm:$0x1] %v1967
      %v1969 = vld [vmem:[%s483 + $0x20] sm:$0x1]
      %v1970 = vsel %vm1962, 0, %v1969
      %1971 = vst [vmem:[%s483 + $0x20] sm:$0x1] %v1970
      %v1972 = vld [vmem:[%s483 + $0x2c] sm:$0x1]
      %v1973 = vsel %vm1962, 0, %v1972
      %1974 = vst [vmem:[%s483 + $0x2c] sm:$0x1] %v1973
      %v1975 = vld [vmem:[%s483 + $0x38] sm:$0x1]
      %v1976 = vsel %vm1962, 0, %v1975
      %1977 = vst [vmem:[%s483 + $0x38] sm:$0x1] %v1976
      %v1978 = vld [vmem:[%s483 + $0x44] sm:$0x1]
      %v1979 = vsel %vm1962, 0, %v1978
      %1980 = vst [vmem:[%s483 + $0x44] sm:$0x1] %v1979
      %v1981 = vld [vmem:[%s483 + $0x50] sm:$0x1]
      %v1982 = vsel %vm1962, 0, %v1981
      %1983 = vst [vmem:[%s483 + $0x50] sm:$0x1] %v1982
      %v1984 = vld [vmem:[%s483 + $0x5c] sm:$0x1]
      %v1985 = vsel %vm1962, 0, %v1984
      %1986 = vst [vmem:[%s483 + $0x5c] sm:$0x1] %v1985
      %s1987 = smul.u32 8, %s25
      %p1988 = scmp.lt.s32.totalorder %s24, 1
      %s1989 = scalar_select %p1988, %s24, 1
      %p1990 = scmp.lt.s32.totalorder %s1987, 15
      %s1991 = scalar_select %p1990, %s1987, 15
      %s1992 = smul.addr %s1991, 3
      %s1993 = smul.addr %s1989, 48
      %s1994 = sadd.s32 %s1992, %s1993
      %s1995 = smul.addr %s1994, 4
      %s1996 = scalar_lea.vmem %s6, %s1995
      %p1997 = scmp.lt.s32.totalorder %s24, 1
      %s1998 = scalar_select %p1997, %s24, 1
      %s1999 = scalar_lea.vmem %s7, %s1998
      %p2000 = scmp.lt.s32.totalorder %s24, 1
      %s2001 = scalar_select %p2000, %s24, 1
      %s2002 = scalar_lea.vmem %s8, %s2001
      // Predicated region
      $region49: #{unet_expansive_block.6} parent=43 // pred_check
        %p2003 = pneg %p215
      $region50: #{unet_expansive_block.6} parent=43 // pred_check_branch
        %2005 = sbr.rel (%p2003) target = $region52
      $region51: #{unet_expansive_block.6} parent=43 // pred_region
        %s2006 = smul.u32 8, %s25
      $region52: #{unet_expansive_block.6} parent=43 // pred_fallthru
        _
      // Predicated region
      $region53: #{unet_expansive_block.6} parent=43 // pred_check
        %p2007 = pneg %p241
      $region54: #{unet_expansive_block.6} parent=43 // pred_check_branch
        %2009 = sbr.rel (%p2007) target = $region56
      $region55: #{unet_expansive_block.6} parent=43 // pred_region
        _
      $region56: #{unet_expansive_block.6} parent=43 // pred_fallthru
        _
      // Predicated region
      $region57: #{unet_expansive_block.6} parent=43 // pred_check
        %p2010 = pneg %p267
      $region58: #{unet_expansive_block.6} parent=43 // pred_check_branch
        %2012 = sbr.rel (%p2010) target = $region60
      $region59: #{unet_expansive_block.6} parent=43 // pred_region
        _
      $region60: #{unet_expansive_block.6} parent=43 // pred_fallthru
        _
    $region44: #{unet_expansive_block.6} parent=5 // pred_fallthru
      _
    %p2013 = scmp.le.s32.totalorder 2, %s15
    // Predicated region
    $region61: #{unet_expansive_block.6} parent=5 // pred_check
      %p2014 = pneg %p2013
    $region62: #{unet_expansive_block.6} parent=5 // pred_check_branch
      %2016 = sbr.rel (%p2014) target = $region64
    $region63: #{unet_expansive_block.6} parent=5 // pred_region
      %s2017 = ssub.s32 %s15, 2
      // Predicated region
      $region65: #{unet_expansive_block.6} parent=63 // pred_check
        %p2018 = pneg %p221
      $region66: #{unet_expansive_block.6} parent=63 // pred_check_branch
        %2020 = sbr.rel (%p2018) target = $region68
      $region67: #{unet_expansive_block.6} parent=63 // pred_region
        %s2021 = smul.u32 8, %s27
        %p2022 = scmp.lt.s32.totalorder %s26, 1
        %s2023 = scalar_select %p2022, %s26, 1
        %p2024 = scmp.lt.s32.totalorder %s2021, 15
        %s2025 = scalar_select %p2024, %s2021, 15
        %s2026 = smul.addr %s2025, 3
        %s2027 = smul.addr %s2023, 48
        %s2028 = sadd.s32 %s2026, %s2027
        %s2029 = smul.addr %s2028, 4
        %s2030 = scalar_lea.vmem %s6, %s2029
      $region68: #{unet_expansive_block.6} parent=63 // pred_fallthru
        _
      // Predicated region
      $region69: #{unet_expansive_block.6} parent=63 // pred_check
        %p2031 = pneg %p247
      $region70: #{unet_expansive_block.6} parent=63 // pred_check_branch
        %2033 = sbr.rel (%p2031) target = $region72
      $region71: #{unet_expansive_block.6} parent=63 // pred_region
        %p2034 = scmp.lt.s32.totalorder %s26, 1
        %s2035 = scalar_select %p2034, %s26, 1
        %s2036 = scalar_lea.vmem %s7, %s2035
      $region72: #{unet_expansive_block.6} parent=63 // pred_fallthru
        _
      // Predicated region
      $region73: #{unet_expansive_block.6} parent=63 // pred_check
        %p2037 = pneg %p273
      $region74: #{unet_expansive_block.6} parent=63 // pred_check_branch
        %2039 = sbr.rel (%p2037) target = $region76
      $region75: #{unet_expansive_block.6} parent=63 // pred_region
        %p2040 = scmp.lt.s32.totalorder %s26, 1
        %s2041 = scalar_select %p2040, %s26, 1
        %s2042 = scalar_lea.vmem %s8, %s2041
      $region76: #{unet_expansive_block.6} parent=63 // pred_fallthru
        _
    $region64: #{unet_expansive_block.6} parent=5 // pred_fallthru
      _
  $region6: #{unet_expansive_block.6} parent=0 // loop_footer
    %s19 = sadd.s32 1, %s15
  $region7: #{unet_expansive_block.6} parent=0 // loop_footer_branch
    %14 = sbr.rel target = $region3
  $region8: #{unet_expansive_block.6} parent=0 // loop_exit
    _

</llo_original>
